<compile_context>
chip_gen: v7x
topology: tpu7x:2x2x1
jax: 0.10.0
libtpu: 0.0.40
codegen_flags: <defaults>
</compile_context>

<pallas_src>
import functools

import jax
import jax.numpy as jnp
from jax.experimental import pallas as pl
from jax.experimental.pallas import tpu as pltpu

LANE = 128


def _ceil_to(n, m):
    return ((n + m - 1) // m) * m


def _pad_to(a, shape):
    return jnp.pad(a, [(0, t - s) for s, t in zip(a.shape, shape)])


def _mlp_kernel(x_ref, w1_ref, b1_ref, w2_ref, b2_ref, w3_ref, b3_ref, o_ref):
    # Layer 1 + ReLU   (dropout1 = identity in eval mode)
    # x arrives already in bf16; MXU accumulates in f32, bias/ReLU on VPU in f32.
    h1 = jnp.dot(x_ref[...], w1_ref[...], preferred_element_type=jnp.float32)
    h1 = jnp.maximum(h1 + b1_ref[...], 0.0)
    # Layer 2 + ReLU   (dropout2 = identity in eval mode)
    h2 = jnp.dot(h1.astype(jnp.bfloat16), w2_ref[...],
                 preferred_element_type=jnp.float32)
    h2 = jnp.maximum(h2 + b2_ref[...], 0.0)
    # Layer 3 (logits)
    out = jnp.dot(h2.astype(jnp.bfloat16), w3_ref[...],
                  preferred_element_type=jnp.float32)
    o_ref[...] = (out + b3_ref[...]).astype(o_ref.dtype)


def prepare_params(params):
    """Zero-pad feature dims (incl. K=1433 -> 1536) to lane width, cast to bf16.

    Padding is mathematically inert: padded x columns / w rows are zero (no
    contribution to the contraction); padded w columns + zero bias give
    ReLU(0) = 0 hidden activations; padded output columns are exactly 0 and
    get sliced off.
    """
    w1, b1 = params["w1"], params["b1"]
    w2, b2 = params["w2"], params["b2"]
    w3, b3 = params["w3"], params["b3"]
    in_p = _ceil_to(w1.shape[0], LANE)      # 1433 -> 1536
    h1p = _ceil_to(w1.shape[1], LANE)       # 64   -> 128
    h2p = _ceil_to(w2.shape[1], LANE)       # 32   -> 128
    outp = _ceil_to(w3.shape[1], LANE)      # 7    -> 128

    prepped = {
        "w1": _pad_to(w1, (in_p, h1p)).astype(jnp.bfloat16),
        "b1": _pad_to(b1, (1, h1p)).astype(jnp.float32),
        "w2": _pad_to(w2, (h1p, h2p)).astype(jnp.bfloat16),
        "b2": _pad_to(b2, (1, h2p)).astype(jnp.float32),
        "w3": _pad_to(w3, (h2p, outp)).astype(jnp.bfloat16),
        "b3": _pad_to(b3, (1, outp)).astype(jnp.float32),
    }
    return prepped, w3.shape[1]  # padded params, true output_dim


@functools.partial(jax.jit, static_argnames=("out_dim", "tile_b"))
def two_layer_nn_forward(x, prepped, out_dim, tile_b=256):
    """Fused forward pass. x: (B, input_dim) f32. prepped: padded/bf16 params."""
    w1, b1 = prepped["w1"], prepped["b1"]
    w2, b2 = prepped["w2"], prepped["b2"]
    w3, b3 = prepped["w3"], prepped["b3"]
    B, in_dim = x.shape
    in_p, h1p = w1.shape
    h2p = w2.shape[1]
    outp = w3.shape[1]

    # Pad rows to a tile multiple and features to the padded K, cast to bf16.
    # This fuses with the producer under this jit (single dispatch), and makes
    # the dominant HBM read half-width and lane-dense.
    b_pad = _ceil_to(max(B, 1), tile_b)
    xp = jnp.zeros((b_pad, in_p), jnp.bfloat16)
    xp = xp.at[:B, :in_dim].set(x.astype(jnp.bfloat16))
    n_tiles = b_pad // tile_b

    grid_spec = pltpu.PrefetchScalarGridSpec(
        num_scalar_prefetch=0,
        grid=(n_tiles,),
        in_specs=[
            pl.BlockSpec((tile_b, in_p), lambda i: (i, 0)),   # x row tile
            pl.BlockSpec((in_p, h1p), lambda i: (0, 0)),      # w1 (VMEM-resident)
            pl.BlockSpec((1, h1p), lambda i: (0, 0)),         # b1
            pl.BlockSpec((h1p, h2p), lambda i: (0, 0)),       # w2
            pl.BlockSpec((1, h2p), lambda i: (0, 0)),         # b2
            pl.BlockSpec((h2p, outp), lambda i: (0, 0)),      # w3
            pl.BlockSpec((1, outp), lambda i: (0, 0)),        # b3
        ],
        out_specs=pl.BlockSpec((tile_b, outp), lambda i: (i, 0)),
    )

    weights = (w1, b1, w2, b2, w3, b3)
    flops = 2 * b_pad * (in_p * h1p + h1p * h2p + h2p * outp)
    bytes_accessed = (int(xp.size) * 2
                      + sum(int(a.size) * a.dtype.itemsize for a in weights)
                      + b_pad * outp * 4)
    cost = pl.CostEstimate(flops=flops, transcendentals=0,
                           bytes_accessed=bytes_accessed)

    out_padded = pl.pallas_call(
        _mlp_kernel,
        out_shape=jax.ShapeDtypeStruct((b_pad, outp), jnp.float32),
        grid_spec=grid_spec,
        compiler_params=pltpu.CompilerParams(
            dimension_semantics=("parallel",)),  # 2 TCs on v7x; no-op on v5e/v6e
        cost_estimate=cost,
    )(xp, *weights)

    # Slice the true logits back out under the same jit (no extra dispatch).
    return out_padded[:B, :out_dim]


def init_params(key, input_dim=1433, hidden_dim1=64, hidden_dim2=32, output_dim=7):
    """Deterministic init mimicking nn.Linear: U(-1/sqrt(fan_in), 1/sqrt(fan_in))."""
    ks = jax.random.split(key, 6)

    def linear(kw, kb, fan_in, fan_out):
        bound = 1.0 / jnp.sqrt(fan_in)
        w = jax.random.uniform(kw, (fan_in, fan_out), jnp.float32, -bound, bound)
        b = jax.random.uniform(kb, (1, fan_out), jnp.float32, -bound, bound)
        return w, b

    w1, b1 = linear(ks[0], ks[1], input_dim, hidden_dim1)
    w2, b2 = linear(ks[2], ks[3], hidden_dim1, hidden_dim2)
    w3, b3 = linear(ks[4], ks[5], hidden_dim2, output_dim)
    return {"w1": w1, "b1": b1, "w2": w2, "b2": b2, "w3": w3, "b3": b3}


def reference_forward(x, p):
    h1 = jnp.maximum(x @ p["w1"] + p["b1"], 0.0)
    h2 = jnp.maximum(h1 @ p["w2"] + p["b2"], 0.0)
    return h2 @ p["w3"] + p["b3"]


if __name__ == "__main__":
    key = jax.random.PRNGKey(0)
    k_params, k_x = jax.random.split(key)

    INPUT_DIM, H1, H2, OUT_DIM = 1433, 64, 32, 7
    BATCH = 384      # non-multiple of tile_b=256 -> exercises row padding + 2-step grid
    TILE_B = 256

    params = init_params(k_params, INPUT_DIM, H1, H2, OUT_DIM)
    x = jax.random.normal(k_x, (BATCH, INPUT_DIM), jnp.float32)

    prepped, out_dim = prepare_params(params)
    out = two_layer_nn_forward(x, prepped, out_dim, tile_b=TILE_B)
    out = jax.block_until_ready(out)

    ref = reference_forward(x, params)  # full-f32 reference
    assert out.shape == (BATCH, OUT_DIM), out.shape
    # Tolerance loosened for bf16 MXU inputs (f32 accumulation) over K=1433.
    assert jnp.allclose(out, ref, atol=5e-2, rtol=5e-2), "mismatch vs reference"

    print("KERNEL_OK")
</pallas_src>

<mosaic_0001>
module attributes {stable_mosaic.version = 11 : i64} {
  func.func @_mlp_kernel(%arg0: i32, %arg1: memref<256x1536xbf16, #tpu.memory_space<vmem>>, %arg2: memref<1536x128xbf16, #tpu.memory_space<vmem>>, %arg3: memref<1x128xf32, #tpu.memory_space<vmem>>, %arg4: memref<128x128xbf16, #tpu.memory_space<vmem>>, %arg5: memref<1x128xf32, #tpu.memory_space<vmem>>, %arg6: memref<128x128xbf16, #tpu.memory_space<vmem>>, %arg7: memref<1x128xf32, #tpu.memory_space<vmem>>, %arg8: memref<256x128xf32, #tpu.memory_space<vmem>>) attributes {dimension_semantics = [#tpu.dimension_semantics<parallel>], iteration_bounds = array<i64: 2>, scalar_prefetch = 0 : i64, scratch_operands = 0 : i64, tpu.core_type = #tpu.core_type<tc>, window_params = [{transform_indices = @transform_0, window_bounds = array<i64: 256, 1536>}, {pipeline_mode = #tpu.pipeline_mode<synchronous>, transform_indices = @transform_1, window_bounds = array<i64: 1536, 128>}, {pipeline_mode = #tpu.pipeline_mode<synchronous>, transform_indices = @transform_2, window_bounds = array<i64: 1, 128>}, {pipeline_mode = #tpu.pipeline_mode<synchronous>, transform_indices = @transform_3, window_bounds = array<i64: 128, 128>}, {pipeline_mode = #tpu.pipeline_mode<synchronous>, transform_indices = @transform_4, window_bounds = array<i64: 1, 128>}, {pipeline_mode = #tpu.pipeline_mode<synchronous>, transform_indices = @transform_5, window_bounds = array<i64: 128, 128>}, {pipeline_mode = #tpu.pipeline_mode<synchronous>, transform_indices = @transform_6, window_bounds = array<i64: 1, 128>}, {transform_indices = @transform_7, window_bounds = array<i64: 256, 128>}]} {
    %c0 = arith.constant 0 : index
    %c0_0 = arith.constant 0 : index
    %0 = vector.load %arg1[%c0, %c0_0] : memref<256x1536xbf16, #tpu.memory_space<vmem>>, vector<256x1536xbf16>
    %c0_1 = arith.constant 0 : index
    %c0_2 = arith.constant 0 : index
    %1 = vector.load %arg2[%c0_1, %c0_2] : memref<1536x128xbf16, #tpu.memory_space<vmem>>, vector<1536x128xbf16>
    %cst = arith.constant dense<0.000000e+00> : vector<256x128xf32>
    %2 = tpu.matmul %0, %1, %cst {dimension_numbers = #tpu.dot_dimension_numbers<[1], [0], [0], [1], [0, 0, 1, 1], [], []>} : vector<256x1536xbf16>, vector<1536x128xbf16>, vector<256x128xf32> -> vector<256x128xf32>
    %c0_3 = arith.constant 0 : index
    %c0_4 = arith.constant 0 : index
    %3 = vector.load %arg3[%c0_3, %c0_4] : memref<1x128xf32, #tpu.memory_space<vmem>>, vector<1x128xf32>
    %4 = vector.broadcast %3 : vector<1x128xf32> to vector<256x128xf32>
    %5 = arith.addf %2, %4 : vector<256x128xf32>
    %cst_5 = arith.constant 0.000000e+00 : f32
    %6 = vector.broadcast %cst_5 : f32 to vector<256x128xf32>
    %7 = arith.maximumf %5, %6 : vector<256x128xf32>
    %8 = arith.truncf %7 : vector<256x128xf32> to vector<256x128xbf16>
    %c0_6 = arith.constant 0 : index
    %c0_7 = arith.constant 0 : index
    %9 = vector.load %arg4[%c0_6, %c0_7] : memref<128x128xbf16, #tpu.memory_space<vmem>>, vector<128x128xbf16>
    %cst_8 = arith.constant dense<0.000000e+00> : vector<256x128xf32>
    %10 = tpu.matmul %8, %9, %cst_8 {dimension_numbers = #tpu.dot_dimension_numbers<[1], [0], [0], [1], [0, 0, 1, 1], [], []>} : vector<256x128xbf16>, vector<128x128xbf16>, vector<256x128xf32> -> vector<256x128xf32>
    %c0_9 = arith.constant 0 : index
    %c0_10 = arith.constant 0 : index
    %11 = vector.load %arg5[%c0_9, %c0_10] : memref<1x128xf32, #tpu.memory_space<vmem>>, vector<1x128xf32>
    %12 = vector.broadcast %11 : vector<1x128xf32> to vector<256x128xf32>
    %13 = arith.addf %10, %12 : vector<256x128xf32>
    %cst_11 = arith.constant 0.000000e+00 : f32
    %14 = vector.broadcast %cst_11 : f32 to vector<256x128xf32>
    %15 = arith.maximumf %13, %14 : vector<256x128xf32>
    %16 = arith.truncf %15 : vector<256x128xf32> to vector<256x128xbf16>
    %c0_12 = arith.constant 0 : index
    %c0_13 = arith.constant 0 : index
    %17 = vector.load %arg6[%c0_12, %c0_13] : memref<128x128xbf16, #tpu.memory_space<vmem>>, vector<128x128xbf16>
    %cst_14 = arith.constant dense<0.000000e+00> : vector<256x128xf32>
    %18 = tpu.matmul %16, %17, %cst_14 {dimension_numbers = #tpu.dot_dimension_numbers<[1], [0], [0], [1], [0, 0, 1, 1], [], []>} : vector<256x128xbf16>, vector<128x128xbf16>, vector<256x128xf32> -> vector<256x128xf32>
    %c0_15 = arith.constant 0 : index
    %c0_16 = arith.constant 0 : index
    %19 = vector.load %arg7[%c0_15, %c0_16] : memref<1x128xf32, #tpu.memory_space<vmem>>, vector<1x128xf32>
    %20 = vector.broadcast %19 : vector<1x128xf32> to vector<256x128xf32>
    %21 = arith.addf %18, %20 : vector<256x128xf32>
    %c0_17 = arith.constant 0 : index
    %c0_18 = arith.constant 0 : index
    %22 = vector.load %arg8[%c0_17, %c0_18] : memref<256x128xf32, #tpu.memory_space<vmem>>, vector<256x128xf32>
    tpu.vector_store %arg8[%c0_17, %c0_18], %21 {strides = array<i32>} : memref<256x128xf32, #tpu.memory_space<vmem>>, vector<256x128xf32>,
    return
  }
  func.func @transform_0(%arg0: i32) -> (i32, i32) {
    %c0_i32 = arith.constant 0 : i32
    %c0_i32_0 = arith.constant 0 : i32
    return %arg0, %c0_i32 : i32, i32
  }
  func.func @transform_1(%arg0: i32) -> (i32, i32) {
    %c0_i32 = arith.constant 0 : i32
    %c0_i32_0 = arith.constant 0 : i32
    %c0_i32_1 = arith.constant 0 : i32
    return %c0_i32, %c0_i32_0 : i32, i32
  }
  func.func @transform_2(%arg0: i32) -> (i32, i32) {
    %c0_i32 = arith.constant 0 : i32
    %c0_i32_0 = arith.constant 0 : i32
    %c0_i32_1 = arith.constant 0 : i32
    return %c0_i32, %c0_i32_0 : i32, i32
  }
  func.func @transform_3(%arg0: i32) -> (i32, i32) {
    %c0_i32 = arith.constant 0 : i32
    %c0_i32_0 = arith.constant 0 : i32
    %c0_i32_1 = arith.constant 0 : i32
    return %c0_i32, %c0_i32_0 : i32, i32
  }
  func.func @transform_4(%arg0: i32) -> (i32, i32) {
    %c0_i32 = arith.constant 0 : i32
    %c0_i32_0 = arith.constant 0 : i32
    %c0_i32_1 = arith.constant 0 : i32
    return %c0_i32, %c0_i32_0 : i32, i32
  }
  func.func @transform_5(%arg0: i32) -> (i32, i32) {
    %c0_i32 = arith.constant 0 : i32
    %c0_i32_0 = arith.constant 0 : i32
    %c0_i32_1 = arith.constant 0 : i32
    return %c0_i32, %c0_i32_0 : i32, i32
  }
  func.func @transform_6(%arg0: i32) -> (i32, i32) {
    %c0_i32 = arith.constant 0 : i32
    %c0_i32_0 = arith.constant 0 : i32
    %c0_i32_1 = arith.constant 0 : i32
    return %c0_i32, %c0_i32_0 : i32, i32
  }
  func.func @transform_7(%arg0: i32) -> (i32, i32) {
    %c0_i32 = arith.constant 0 : i32
    %c0_i32_0 = arith.constant 0 : i32
    return %arg0, %c0_i32 : i32, i32
  }
}

</mosaic_0001>

<llo_original>
// kernel: two_layer_nn_forward.1
$region0: #{two_layer_nn_forward.1}
  #allocation0 [shape = 'u32[]', space=smem, size = 0x4, offset = 0x4, fixed_abs, tag = 'smem constant byte address 0x4 - core index']
  #allocation1 [shape = 'u32[144,128]{1,0:T(1,128)}', space=vmem, size = 0x12000, scoped, tag = 'internal scratch']
  %s0 = inlined_call_operand.vmem [shape: bf16[512,1536], index: 0, kind: input, shape index: {}]
  %s1 = inlined_call_operand.vmem [shape: bf16[1536,128], index: 1, kind: input, shape index: {}]
  %s2 = inlined_call_operand.vmem [shape: f32[1,128], index: 2, kind: input, shape index: {}]
  %s3 = inlined_call_operand.vmem [shape: bf16[128,128], index: 3, kind: input, shape index: {}]
  %s4 = inlined_call_operand.vmem [shape: f32[1,128], index: 4, kind: input, shape index: {}]
  %s5 = inlined_call_operand.vmem [shape: bf16[128,128], index: 5, kind: input, shape index: {}]
  %s6 = inlined_call_operand.vmem [shape: f32[1,128], index: 6, kind: input, shape index: {}]
  %s7 = inlined_call_operand.vmem [shape: f32[512,128], index: 7, kind: output, shape index: {}]
  %s8 = sld [smem:[#allocation0]]
  $region61: #{two_layer_nn_forward.1} parent=0
    _
  %s10 = ssub.s32 1, %s8
  %s11 = scalar_select 0, %s10, %s8
  loop: start=0, step=1, limit=4
  $region2: #{two_layer_nn_forward.1} parent=0 // loop_pre_header
    _
  $region3: #{two_layer_nn_forward.1} parent=0 // loop_header
    %s13 = sphi 0, %s17
    %p14 = scmp.ge.s32.totalorder %s13, 4
    %s23 = sphi 0, %s25
    %s26 = sphi 0, %s23
    %s27 = sphi 0, %s26
    %s43 = sphi 0, %s27
    %s47 = sphi 0, %s47
    %s49 = sphi 0, %s47
    %s50 = sphi 0, %s49
    %s64 = sphi 0, %s50
    %s68 = sphi 0, %s68
    %s70 = sphi 0, %s68
    %s71 = sphi 0, %s70
    %s85 = sphi 0, %s71
    %s89 = sphi 0, %s89
    %s91 = sphi 0, %s89
    %s92 = sphi 0, %s91
    %s106 = sphi 0, %s92
    %s110 = sphi 0, %s110
    %s112 = sphi 0, %s110
    %s113 = sphi 0, %s112
    %s127 = sphi 0, %s113
    %s131 = sphi 0, %s131
    %s133 = sphi 0, %s131
    %s134 = sphi 0, %s133
    %s148 = sphi 0, %s134
    %s152 = sphi 0, %s152
    %s154 = sphi 0, %s152
    %s155 = sphi 0, %s154
    %s169 = sphi 0, %s155
    %s175 = sphi 0, %s177
    %s178 = sphi 0, %s175
    %s179 = sphi 0, %s178
    %s195 = sphi 0, %s179
  $region4: #{two_layer_nn_forward.1} parent=0 // loop_header_branch
    %16 = sbr.rel (%p14) target = $region8
  $region5: #{two_layer_nn_forward.1} parent=0 // loop_body
    %s18 = ssub.s32 %s13, 1
    %s19 = ssub.s32 %s13, 2
    %s20 = sadd.s32 %s13, 1
    %s21 = ssub.s32 %s13, %s20
    %p22 = scmp.eq.s32.totalorder %s21, 0
    %s24 = sadd.s32 %s23, 1
    %s25 = scalar_select %p22, %s23, %s24
    %p28 = pneg %p22
    %p29 = scmp.eq.s32.totalorder %s13, 1
    %p30 = por %p28, %p29
    %p31 = scmp.ne.s32.totalorder %s23, %s26
    %p32 = scmp.eq.s32.totalorder %s13, 0
    %p33 = por %p31, %p32
    %p34 = scmp.ne.s32.totalorder %s23, %s26
    %p35 = scmp.eq.s32.totalorder %s18, 1
    %p36 = por %p34, %p35
    %p37 = scmp.ne.s32.totalorder %s26, %s27
    %p38 = scmp.eq.s32.totalorder %s18, 0
    %p39 = por %p37, %p38
    %p40 = scmp.ne.s32.totalorder %s26, %s27
    %p41 = scmp.eq.s32.totalorder %s19, 1
    %p42 = por %p40, %p41
    %p44 = scmp.ne.s32.totalorder %s27, %s43
    %p45 = scmp.eq.s32.totalorder %s19, 0
    %p46 = por %p44, %p45
    %s48 = sadd.s32 %s47, 1
    %p51 = scmp.eq.s32.totalorder %s13, 1
    %p52 = scmp.ne.s32.totalorder %s47, %s49
    %p53 = scmp.eq.s32.totalorder %s13, 0
    %p54 = por %p52, %p53
    %p55 = scmp.ne.s32.totalorder %s47, %s49
    %p56 = scmp.eq.s32.totalorder %s18, 1
    %p57 = por %p55, %p56
    %p58 = scmp.ne.s32.totalorder %s49, %s50
    %p59 = scmp.eq.s32.totalorder %s18, 0
    %p60 = por %p58, %p59
    %p61 = scmp.ne.s32.totalorder %s49, %s50
    %p62 = scmp.eq.s32.totalorder %s19, 1
    %p63 = por %p61, %p62
    %p65 = scmp.ne.s32.totalorder %s50, %s64
    %p66 = scmp.eq.s32.totalorder %s19, 0
    %p67 = por %p65, %p66
    %s69 = sadd.s32 %s68, 1
    %p72 = scmp.eq.s32.totalorder %s13, 1
    %p73 = scmp.ne.s32.totalorder %s68, %s70
    %p74 = scmp.eq.s32.totalorder %s13, 0
    %p75 = por %p73, %p74
    %p76 = scmp.ne.s32.totalorder %s68, %s70
    %p77 = scmp.eq.s32.totalorder %s18, 1
    %p78 = por %p76, %p77
    %p79 = scmp.ne.s32.totalorder %s70, %s71
    %p80 = scmp.eq.s32.totalorder %s18, 0
    %p81 = por %p79, %p80
    %p82 = scmp.ne.s32.totalorder %s70, %s71
    %p83 = scmp.eq.s32.totalorder %s19, 1
    %p84 = por %p82, %p83
    %p86 = scmp.ne.s32.totalorder %s71, %s85
    %p87 = scmp.eq.s32.totalorder %s19, 0
    %p88 = por %p86, %p87
    %s90 = sadd.s32 %s89, 1
    %p93 = scmp.eq.s32.totalorder %s13, 1
    %p94 = scmp.ne.s32.totalorder %s89, %s91
    %p95 = scmp.eq.s32.totalorder %s13, 0
    %p96 = por %p94, %p95
    %p97 = scmp.ne.s32.totalorder %s89, %s91
    %p98 = scmp.eq.s32.totalorder %s18, 1
    %p99 = por %p97, %p98
    %p100 = scmp.ne.s32.totalorder %s91, %s92
    %p101 = scmp.eq.s32.totalorder %s18, 0
    %p102 = por %p100, %p101
    %p103 = scmp.ne.s32.totalorder %s91, %s92
    %p104 = scmp.eq.s32.totalorder %s19, 1
    %p105 = por %p103, %p104
    %p107 = scmp.ne.s32.totalorder %s92, %s106
    %p108 = scmp.eq.s32.totalorder %s19, 0
    %p109 = por %p107, %p108
    %s111 = sadd.s32 %s110, 1
    %p114 = scmp.eq.s32.totalorder %s13, 1
    %p115 = scmp.ne.s32.totalorder %s110, %s112
    %p116 = scmp.eq.s32.totalorder %s13, 0
    %p117 = por %p115, %p116
    %p118 = scmp.ne.s32.totalorder %s110, %s112
    %p119 = scmp.eq.s32.totalorder %s18, 1
    %p120 = por %p118, %p119
    %p121 = scmp.ne.s32.totalorder %s112, %s113
    %p122 = scmp.eq.s32.totalorder %s18, 0
    %p123 = por %p121, %p122
    %p124 = scmp.ne.s32.totalorder %s112, %s113
    %p125 = scmp.eq.s32.totalorder %s19, 1
    %p126 = por %p124, %p125
    %p128 = scmp.ne.s32.totalorder %s113, %s127
    %p129 = scmp.eq.s32.totalorder %s19, 0
    %p130 = por %p128, %p129
    %s132 = sadd.s32 %s131, 1
    %p135 = scmp.eq.s32.totalorder %s13, 1
    %p136 = scmp.ne.s32.totalorder %s131, %s133
    %p137 = scmp.eq.s32.totalorder %s13, 0
    %p138 = por %p136, %p137
    %p139 = scmp.ne.s32.totalorder %s131, %s133
    %p140 = scmp.eq.s32.totalorder %s18, 1
    %p141 = por %p139, %p140
    %p142 = scmp.ne.s32.totalorder %s133, %s134
    %p143 = scmp.eq.s32.totalorder %s18, 0
    %p144 = por %p142, %p143
    %p145 = scmp.ne.s32.totalorder %s133, %s134
    %p146 = scmp.eq.s32.totalorder %s19, 1
    %p147 = por %p145, %p146
    %p149 = scmp.ne.s32.totalorder %s134, %s148
    %p150 = scmp.eq.s32.totalorder %s19, 0
    %p151 = por %p149, %p150
    %s153 = sadd.s32 %s152, 1
    %p156 = scmp.eq.s32.totalorder %s13, 1
    %p157 = scmp.ne.s32.totalorder %s152, %s154
    %p158 = scmp.eq.s32.totalorder %s13, 0
    %p159 = por %p157, %p158
    %p160 = scmp.ne.s32.totalorder %s152, %s154
    %p161 = scmp.eq.s32.totalorder %s18, 1
    %p162 = por %p160, %p161
    %p163 = scmp.ne.s32.totalorder %s154, %s155
    %p164 = scmp.eq.s32.totalorder %s18, 0
    %p165 = por %p163, %p164
    %p166 = scmp.ne.s32.totalorder %s154, %s155
    %p167 = scmp.eq.s32.totalorder %s19, 1
    %p168 = por %p166, %p167
    %p170 = scmp.ne.s32.totalorder %s155, %s169
    %p171 = scmp.eq.s32.totalorder %s19, 0
    %p172 = por %p170, %p171
    %s173 = ssub.s32 %s13, %s20
    %p174 = scmp.eq.s32.totalorder %s173, 0
    %s176 = sadd.s32 %s175, 1
    %s177 = scalar_select %p174, %s175, %s176
    %p180 = pneg %p174
    %p181 = scmp.eq.s32.totalorder %s13, 1
    %p182 = por %p180, %p181
    %p183 = scmp.ne.s32.totalorder %s175, %s178
    %p184 = scmp.eq.s32.totalorder %s13, 0
    %p185 = por %p183, %p184
    %p186 = scmp.ne.s32.totalorder %s175, %s178
    %p187 = scmp.eq.s32.totalorder %s18, 1
    %p188 = por %p186, %p187
    %p189 = scmp.ne.s32.totalorder %s178, %s179
    %p190 = scmp.eq.s32.totalorder %s18, 0
    %p191 = por %p189, %p190
    %p192 = scmp.ne.s32.totalorder %s178, %s179
    %p193 = scmp.eq.s32.totalorder %s19, 1
    %p194 = por %p192, %p193
    %p196 = scmp.ne.s32.totalorder %s179, %s195
    %p197 = scmp.eq.s32.totalorder %s19, 0
    %p198 = por %p196, %p197
    %p199 = scmp.le.s32.totalorder 1, %s13
    %p200 = scmp.lt.s32.totalorder %s13, 3
    %p201 = pnand %p199, %p200
    %p202 = pneg %p201
    // Predicated region
    $region9: #{two_layer_nn_forward.1} parent=5 // pred_check
      _
    $region10: #{two_layer_nn_forward.1} parent=5 // pred_check_branch
      %204 = sbr.rel (%p201) target = $region12
    $region11: #{two_layer_nn_forward.1} parent=5 // pred_region
      %s205 = ssub.s32 %s13, 1
      // Predicated region
      $region13: #{two_layer_nn_forward.1} parent=11 // pred_check
        %p206 = pneg %p60
      $region14: #{two_layer_nn_forward.1} parent=11 // pred_check_branch
        %208 = sbr.rel (%p206) target = $region16
      $region15: #{two_layer_nn_forward.1} parent=11 // pred_region
        _
      $region16: #{two_layer_nn_forward.1} parent=11 // pred_fallthru
        _
      // Predicated region
      $region17: #{two_layer_nn_forward.1} parent=11 // pred_check
        %p209 = pneg %p81
      $region18: #{two_layer_nn_forward.1} parent=11 // pred_check_branch
        %211 = sbr.rel (%p209) target = $region20
      $region19: #{two_layer_nn_forward.1} parent=11 // pred_region
        _
      $region20: #{two_layer_nn_forward.1} parent=11 // pred_fallthru
        _
      // Predicated region
      $region21: #{two_layer_nn_forward.1} parent=11 // pred_check
        %p212 = pneg %p102
      $region22: #{two_layer_nn_forward.1} parent=11 // pred_check_branch
        %214 = sbr.rel (%p212) target = $region24
      $region23: #{two_layer_nn_forward.1} parent=11 // pred_region
        _
      $region24: #{two_layer_nn_forward.1} parent=11 // pred_fallthru
        _
      // Predicated region
      $region25: #{two_layer_nn_forward.1} parent=11 // pred_check
        %p215 = pneg %p123
      $region26: #{two_layer_nn_forward.1} parent=11 // pred_check_branch
        %217 = sbr.rel (%p215) target = $region28
      $region27: #{two_layer_nn_forward.1} parent=11 // pred_region
        _
      $region28: #{two_layer_nn_forward.1} parent=11 // pred_fallthru
        _
      // Predicated region
      $region29: #{two_layer_nn_forward.1} parent=11 // pred_check
        %p218 = pneg %p144
      $region30: #{two_layer_nn_forward.1} parent=11 // pred_check_branch
        %220 = sbr.rel (%p218) target = $region32
      $region31: #{two_layer_nn_forward.1} parent=11 // pred_region
        _
      $region32: #{two_layer_nn_forward.1} parent=11 // pred_fallthru
        _
      // Predicated region
      $region33: #{two_layer_nn_forward.1} parent=11 // pred_check
        %p221 = pneg %p165
      $region34: #{two_layer_nn_forward.1} parent=11 // pred_check_branch
        %223 = sbr.rel (%p221) target = $region36
      $region35: #{two_layer_nn_forward.1} parent=11 // pred_region
        _
      $region36: #{two_layer_nn_forward.1} parent=11 // pred_fallthru
        _
    $region12: #{two_layer_nn_forward.1} parent=5 // pred_fallthru
      _
    %p224 = scmp.lt.s32.totalorder %s13, 2
    // Predicated region
    $region37: #{two_layer_nn_forward.1} parent=5 // pred_check
      %p225 = pneg %p224
    $region38: #{two_layer_nn_forward.1} parent=5 // pred_check_branch
      %227 = sbr.rel (%p225) target = $region40
    $region39: #{two_layer_nn_forward.1} parent=5 // pred_region
      // Predicated region
      $region41: #{two_layer_nn_forward.1} parent=39 // pred_check
        %p228 = pneg %p33
      $region42: #{two_layer_nn_forward.1} parent=39 // pred_check_branch
        %230 = sbr.rel (%p228) target = $region44
      $region43: #{two_layer_nn_forward.1} parent=39 // pred_region
        %s231 = smul.u32 32, %s13
        %p232 = scmp.lt.s32.totalorder %s231, 63
        %s233 = scalar_select %p232, %s231, 63
        %s234 = smul.addr %s233, 12
        %s235 = smul.addr %s234, 4
        %s236 = scalar_lea.vmem %s0, %s235
        %s237 = smul.u32 32, %s13
      $region44: #{two_layer_nn_forward.1} parent=39 // pred_fallthru
        _
    $region40: #{two_layer_nn_forward.1} parent=5 // pred_fallthru
      _
    %p238 = scmp.le.s32.totalorder 1, %s13
    %p239 = scmp.lt.s32.totalorder %s13, 3
    %p240 = pnand %p238, %p239
    %p241 = pneg %p240
    // Predicated region
    $region45: #{two_layer_nn_forward.1} parent=5 // pred_check
      _
    $region46: #{two_layer_nn_forward.1} parent=5 // pred_check_branch
      %243 = sbr.rel (%p240) target = $region48
    $region47: #{two_layer_nn_forward.1} parent=5 // pred_region
      %s244 = ssub.s32 %s13, 1
      %s245 = smul.u32 32, %s18
      %p246 = scmp.lt.s32.totalorder %s245, 63
      %s247 = scalar_select %p246, %s245, 63
      %s248 = smul.addr %s247, 12
      %s249 = smul.addr %s248, 4
      %s250 = scalar_lea.vmem %s0, %s249
      %p251 = pneg %p39
      %p252 = pneg %p36
      %p253 = pneg %p60
      %p254 = pneg %p57
      %p255 = pneg %p81
      %p256 = pneg %p78
      %p257 = pneg %p102
      %p258 = pneg %p99
      %p259 = pneg %p123
      %p260 = pneg %p120
      %p261 = pneg %p144
      %p262 = pneg %p141
      %p263 = pneg %p165
      %p264 = pneg %p162
      %p265 = pneg %p191
      %p266 = pneg %p188
      %s267 = smul.u32 32, %s18
      %p268 = scmp.lt.s32.totalorder %s267, 63
      %s269 = scalar_select %p268, %s267, 63
      %s270 = smul.addr %s269, 8
      %s271 = scalar_lea.vmem %s7, %s270
      %s272 = smul.u32 32, %s18
      %p273 = scmp.lt.s32.totalorder %s272, 63
      %s274 = scalar_select %p273, %s272, 63
      %s275 = smul.addr %s274, 12
      %s276 = smul.addr %s275, 4
      %s277 = scalar_lea.vmem %s0, %s276
      %s278 = smul.u32 32, %s18
      %s279 = smul.u32 32, %s18
      %p280 = scmp.lt.s32.totalorder %s279, 63
      %s281 = scalar_select %p280, %s279, 63
      %s282 = smul.addr %s281, 8
      %s283 = scalar_lea.vmem %s7, %s282
      %s284 = smul.u32 32, %s18
      %v286 = vld [vmem:[%s277] sm:$0xff]
      %v287 = vld [vmem:[%s277 + $0x8] sm:$0xff]
      %v288 = vld [vmem:[%s277 + $0x10] sm:$0xff]
      %v289 = vld [vmem:[%s277 + $0x18] sm:$0xff]
      %v290 = vld [vmem:[%s277 + $0x20] sm:$0xff]
      %v291 = vld [vmem:[%s277 + $0x28] sm:$0xff]
      %v292 = vld [vmem:[%s277 + $0x30] sm:$0xff]
      %v293 = vld [vmem:[%s277 + $0x38] sm:$0xff]
      %v294 = vld [vmem:[%s277 + $0x40] sm:$0xff]
      %v295 = vld [vmem:[%s277 + $0x48] sm:$0xff]
      %v296 = vld [vmem:[%s277 + $0x50] sm:$0xff]
      %v297 = vld [vmem:[%s277 + $0x58] sm:$0xff]
      %v298 = vld [vmem:[%s277 + $0x60] sm:$0xff]
      %v299 = vld [vmem:[%s277 + $0x68] sm:$0xff]
      %v300 = vld [vmem:[%s277 + $0x70] sm:$0xff]
      %v301 = vld [vmem:[%s277 + $0x78] sm:$0xff]
      %v302 = vld [vmem:[%s277 + $0x80] sm:$0xff]
      %v303 = vld [vmem:[%s277 + $0x88] sm:$0xff]
      %v304 = vld [vmem:[%s277 + $0x90] sm:$0xff]
      %v305 = vld [vmem:[%s277 + $0x98] sm:$0xff]
      %v306 = vld [vmem:[%s277 + $0xa0] sm:$0xff]
      %v307 = vld [vmem:[%s277 + $0xa8] sm:$0xff]
      %v308 = vld [vmem:[%s277 + $0xb0] sm:$0xff]
      %v309 = vld [vmem:[%s277 + $0xb8] sm:$0xff]
      %v310 = vld [vmem:[%s277 + $0xc0] sm:$0xff]
      %v311 = vld [vmem:[%s277 + $0xc8] sm:$0xff]
      %v312 = vld [vmem:[%s277 + $0xd0] sm:$0xff]
      %v313 = vld [vmem:[%s277 + $0xd8] sm:$0xff]
      %v314 = vld [vmem:[%s277 + $0xe0] sm:$0xff]
      %v315 = vld [vmem:[%s277 + $0xe8] sm:$0xff]
      %v316 = vld [vmem:[%s277 + $0xf0] sm:$0xff]
      %v317 = vld [vmem:[%s277 + $0xf8] sm:$0xff]
      %v318 = vld [vmem:[%s277 + $0x100] sm:$0xff]
      %v319 = vld [vmem:[%s277 + $0x108] sm:$0xff]
      %v320 = vld [vmem:[%s277 + $0x110] sm:$0xff]
      %v321 = vld [vmem:[%s277 + $0x118] sm:$0xff]
      %v322 = vld [vmem:[%s277 + $0x120] sm:$0xff]
      %v323 = vld [vmem:[%s277 + $0x128] sm:$0xff]
      %v324 = vld [vmem:[%s277 + $0x130] sm:$0xff]
      %v325 = vld [vmem:[%s277 + $0x138] sm:$0xff]
      %v326 = vld [vmem:[%s277 + $0x140] sm:$0xff]
      %v327 = vld [vmem:[%s277 + $0x148] sm:$0xff]
      %v328 = vld [vmem:[%s277 + $0x150] sm:$0xff]
      %v329 = vld [vmem:[%s277 + $0x158] sm:$0xff]
      %v330 = vld [vmem:[%s277 + $0x160] sm:$0xff]
      %v331 = vld [vmem:[%s277 + $0x168] sm:$0xff]
      %v332 = vld [vmem:[%s277 + $0x170] sm:$0xff]
      %v333 = vld [vmem:[%s277 + $0x178] sm:$0xff]
      %v334 = vld [vmem:[%s277 + $0x180] sm:$0xff]
      %v335 = vld [vmem:[%s277 + $0x188] sm:$0xff]
      %v336 = vld [vmem:[%s277 + $0x190] sm:$0xff]
      %v337 = vld [vmem:[%s277 + $0x198] sm:$0xff]
      %v338 = vld [vmem:[%s277 + $0x1a0] sm:$0xff]
      %v339 = vld [vmem:[%s277 + $0x1a8] sm:$0xff]
      %v340 = vld [vmem:[%s277 + $0x1b0] sm:$0xff]
      %v341 = vld [vmem:[%s277 + $0x1b8] sm:$0xff]
      %v342 = vld [vmem:[%s277 + $0x1c0] sm:$0xff]
      %v343 = vld [vmem:[%s277 + $0x1c8] sm:$0xff]
      %v344 = vld [vmem:[%s277 + $0x1d0] sm:$0xff]
      %v345 = vld [vmem:[%s277 + $0x1d8] sm:$0xff]
      %v346 = vld [vmem:[%s277 + $0x1e0] sm:$0xff]
      %v347 = vld [vmem:[%s277 + $0x1e8] sm:$0xff]
      %v348 = vld [vmem:[%s277 + $0x1f0] sm:$0xff]
      %v349 = vld [vmem:[%s277 + $0x1f8] sm:$0xff]
      %v350 = vld [vmem:[%s277 + $0x200] sm:$0xff]
      %v351 = vld [vmem:[%s277 + $0x208] sm:$0xff]
      %v352 = vld [vmem:[%s277 + $0x210] sm:$0xff]
      %v353 = vld [vmem:[%s277 + $0x218] sm:$0xff]
      %v354 = vld [vmem:[%s277 + $0x220] sm:$0xff]
      %v355 = vld [vmem:[%s277 + $0x228] sm:$0xff]
      %v356 = vld [vmem:[%s277 + $0x230] sm:$0xff]
      %v357 = vld [vmem:[%s277 + $0x238] sm:$0xff]
      %v358 = vld [vmem:[%s277 + $0x240] sm:$0xff]
      %v359 = vld [vmem:[%s277 + $0x248] sm:$0xff]
      %v360 = vld [vmem:[%s277 + $0x250] sm:$0xff]
      %v361 = vld [vmem:[%s277 + $0x258] sm:$0xff]
      %v362 = vld [vmem:[%s277 + $0x260] sm:$0xff]
      %v363 = vld [vmem:[%s277 + $0x268] sm:$0xff]
      %v364 = vld [vmem:[%s277 + $0x270] sm:$0xff]
      %v365 = vld [vmem:[%s277 + $0x278] sm:$0xff]
      %v366 = vld [vmem:[%s277 + $0x280] sm:$0xff]
      %v367 = vld [vmem:[%s277 + $0x288] sm:$0xff]
      %v368 = vld [vmem:[%s277 + $0x290] sm:$0xff]
      %v369 = vld [vmem:[%s277 + $0x298] sm:$0xff]
      %v370 = vld [vmem:[%s277 + $0x2a0] sm:$0xff]
      %v371 = vld [vmem:[%s277 + $0x2a8] sm:$0xff]
      %v372 = vld [vmem:[%s277 + $0x2b0] sm:$0xff]
      %v373 = vld [vmem:[%s277 + $0x2b8] sm:$0xff]
      %v374 = vld [vmem:[%s277 + $0x2c0] sm:$0xff]
      %v375 = vld [vmem:[%s277 + $0x2c8] sm:$0xff]
      %v376 = vld [vmem:[%s277 + $0x2d0] sm:$0xff]
      %v377 = vld [vmem:[%s277 + $0x2d8] sm:$0xff]
      %v378 = vld [vmem:[%s277 + $0x2e0] sm:$0xff]
      %v379 = vld [vmem:[%s277 + $0x2e8] sm:$0xff]
      %v380 = vld [vmem:[%s277 + $0x2f0] sm:$0xff]
      %v381 = vld [vmem:[%s277 + $0x2f8] sm:$0xff]
      %v382 = vld [vmem:[%s277 + $0x300] sm:$0xff]
      %v383 = vld [vmem:[%s277 + $0x308] sm:$0xff]
      %v384 = vld [vmem:[%s277 + $0x310] sm:$0xff]
      %v385 = vld [vmem:[%s277 + $0x318] sm:$0xff]
      %v386 = vld [vmem:[%s277 + $0x320] sm:$0xff]
      %v387 = vld [vmem:[%s277 + $0x328] sm:$0xff]
      %v388 = vld [vmem:[%s277 + $0x330] sm:$0xff]
      %v389 = vld [vmem:[%s277 + $0x338] sm:$0xff]
      %v390 = vld [vmem:[%s277 + $0x340] sm:$0xff]
      %v391 = vld [vmem:[%s277 + $0x348] sm:$0xff]
      %v392 = vld [vmem:[%s277 + $0x350] sm:$0xff]
      %v393 = vld [vmem:[%s277 + $0x358] sm:$0xff]
      %v394 = vld [vmem:[%s277 + $0x360] sm:$0xff]
      %v395 = vld [vmem:[%s277 + $0x368] sm:$0xff]
      %v396 = vld [vmem:[%s277 + $0x370] sm:$0xff]
      %v397 = vld [vmem:[%s277 + $0x378] sm:$0xff]
      %v398 = vld [vmem:[%s277 + $0x380] sm:$0xff]
      %v399 = vld [vmem:[%s277 + $0x388] sm:$0xff]
      %v400 = vld [vmem:[%s277 + $0x390] sm:$0xff]
      %v401 = vld [vmem:[%s277 + $0x398] sm:$0xff]
      %v402 = vld [vmem:[%s277 + $0x3a0] sm:$0xff]
      %v403 = vld [vmem:[%s277 + $0x3a8] sm:$0xff]
      %v404 = vld [vmem:[%s277 + $0x3b0] sm:$0xff]
      %v405 = vld [vmem:[%s277 + $0x3b8] sm:$0xff]
      %v406 = vld [vmem:[%s277 + $0x3c0] sm:$0xff]
      %v407 = vld [vmem:[%s277 + $0x3c8] sm:$0xff]
      %v408 = vld [vmem:[%s277 + $0x3d0] sm:$0xff]
      %v409 = vld [vmem:[%s277 + $0x3d8] sm:$0xff]
      %v410 = vld [vmem:[%s277 + $0x3e0] sm:$0xff]
      %v411 = vld [vmem:[%s277 + $0x3e8] sm:$0xff]
      %v412 = vld [vmem:[%s277 + $0x3f0] sm:$0xff]
      %v413 = vld [vmem:[%s277 + $0x3f8] sm:$0xff]
      %v414 = vld [vmem:[%s277 + $0x400] sm:$0xff]
      %v415 = vld [vmem:[%s277 + $0x408] sm:$0xff]
      %v416 = vld [vmem:[%s277 + $0x410] sm:$0xff]
      %v417 = vld [vmem:[%s277 + $0x418] sm:$0xff]
      %v418 = vld [vmem:[%s277 + $0x420] sm:$0xff]
      %v419 = vld [vmem:[%s277 + $0x428] sm:$0xff]
      %v420 = vld [vmem:[%s277 + $0x430] sm:$0xff]
      %v421 = vld [vmem:[%s277 + $0x438] sm:$0xff]
      %v422 = vld [vmem:[%s277 + $0x440] sm:$0xff]
      %v423 = vld [vmem:[%s277 + $0x448] sm:$0xff]
      %v424 = vld [vmem:[%s277 + $0x450] sm:$0xff]
      %v425 = vld [vmem:[%s277 + $0x458] sm:$0xff]
      %v426 = vld [vmem:[%s277 + $0x460] sm:$0xff]
      %v427 = vld [vmem:[%s277 + $0x468] sm:$0xff]
      %v428 = vld [vmem:[%s277 + $0x470] sm:$0xff]
      %v429 = vld [vmem:[%s277 + $0x478] sm:$0xff]
      %v430 = vld [vmem:[%s277 + $0x480] sm:$0xff]
      %v431 = vld [vmem:[%s277 + $0x488] sm:$0xff]
      %v432 = vld [vmem:[%s277 + $0x490] sm:$0xff]
      %v433 = vld [vmem:[%s277 + $0x498] sm:$0xff]
      %v434 = vld [vmem:[%s277 + $0x4a0] sm:$0xff]
      %v435 = vld [vmem:[%s277 + $0x4a8] sm:$0xff]
      %v436 = vld [vmem:[%s277 + $0x4b0] sm:$0xff]
      %v437 = vld [vmem:[%s277 + $0x4b8] sm:$0xff]
      %v438 = vld [vmem:[%s277 + $0x4c0] sm:$0xff]
      %v439 = vld [vmem:[%s277 + $0x4c8] sm:$0xff]
      %v440 = vld [vmem:[%s277 + $0x4d0] sm:$0xff]
      %v441 = vld [vmem:[%s277 + $0x4d8] sm:$0xff]
      %v442 = vld [vmem:[%s277 + $0x4e0] sm:$0xff]
      %v443 = vld [vmem:[%s277 + $0x4e8] sm:$0xff]
      %v444 = vld [vmem:[%s277 + $0x4f0] sm:$0xff]
      %v445 = vld [vmem:[%s277 + $0x4f8] sm:$0xff]
      %v446 = vld [vmem:[%s277 + $0x500] sm:$0xff]
      %v447 = vld [vmem:[%s277 + $0x508] sm:$0xff]
      %v448 = vld [vmem:[%s277 + $0x510] sm:$0xff]
      %v449 = vld [vmem:[%s277 + $0x518] sm:$0xff]
      %v450 = vld [vmem:[%s277 + $0x520] sm:$0xff]
      %v451 = vld [vmem:[%s277 + $0x528] sm:$0xff]
      %v452 = vld [vmem:[%s277 + $0x530] sm:$0xff]
      %v453 = vld [vmem:[%s277 + $0x538] sm:$0xff]
      %v454 = vld [vmem:[%s277 + $0x540] sm:$0xff]
      %v455 = vld [vmem:[%s277 + $0x548] sm:$0xff]
      %v456 = vld [vmem:[%s277 + $0x550] sm:$0xff]
      %v457 = vld [vmem:[%s277 + $0x558] sm:$0xff]
      %v458 = vld [vmem:[%s277 + $0x560] sm:$0xff]
      %v459 = vld [vmem:[%s277 + $0x568] sm:$0xff]
      %v460 = vld [vmem:[%s277 + $0x570] sm:$0xff]
      %v461 = vld [vmem:[%s277 + $0x578] sm:$0xff]
      %v462 = vld [vmem:[%s277 + $0x580] sm:$0xff]
      %v463 = vld [vmem:[%s277 + $0x588] sm:$0xff]
      %v464 = vld [vmem:[%s277 + $0x590] sm:$0xff]
      %v465 = vld [vmem:[%s277 + $0x598] sm:$0xff]
      %v466 = vld [vmem:[%s277 + $0x5a0] sm:$0xff]
      %v467 = vld [vmem:[%s277 + $0x5a8] sm:$0xff]
      %v468 = vld [vmem:[%s277 + $0x5b0] sm:$0xff]
      %v469 = vld [vmem:[%s277 + $0x5b8] sm:$0xff]
      %v470 = vld [vmem:[%s277 + $0x5c0] sm:$0xff]
      %v471 = vld [vmem:[%s277 + $0x5c8] sm:$0xff]
      %v472 = vld [vmem:[%s277 + $0x5d0] sm:$0xff]
      %v473 = vld [vmem:[%s277 + $0x5d8] sm:$0xff]
      %v474 = vld [vmem:[%s277 + $0x5e0] sm:$0xff]
      %v475 = vld [vmem:[%s277 + $0x5e8] sm:$0xff]
      %v476 = vld [vmem:[%s277 + $0x5f0] sm:$0xff]
      %v477 = vld [vmem:[%s277 + $0x5f8] sm:$0xff]
      %v478 = vld [vmem:[%s1] sm:$0xf]
      %v479 = vld [vmem:[%s1 + $0x4] sm:$0xf]
      %v480 = vld [vmem:[%s1 + $0x8] sm:$0xf]
      %v481 = vld [vmem:[%s1 + $0xc] sm:$0xf]
      %v482 = vld [vmem:[%s1 + $0x10] sm:$0xf]
      %v483 = vld [vmem:[%s1 + $0x14] sm:$0xf]
      %v484 = vld [vmem:[%s1 + $0x18] sm:$0xf]
      %v485 = vld [vmem:[%s1 + $0x1c] sm:$0xf]
      %v486 = vld [vmem:[%s1 + $0x20] sm:$0xf]
      %v487 = vld [vmem:[%s1 + $0x24] sm:$0xf]
      %v488 = vld [vmem:[%s1 + $0x28] sm:$0xf]
      %v489 = vld [vmem:[%s1 + $0x2c] sm:$0xf]
      %v490 = vld [vmem:[%s1 + $0x30] sm:$0xf]
      %v491 = vld [vmem:[%s1 + $0x34] sm:$0xf]
      %v492 = vld [vmem:[%s1 + $0x38] sm:$0xf]
      %v493 = vld [vmem:[%s1 + $0x3c] sm:$0xf]
      %v494 = vld [vmem:[%s1 + $0x40] sm:$0xf]
      %v495 = vld [vmem:[%s1 + $0x44] sm:$0xf]
      %v496 = vld [vmem:[%s1 + $0x48] sm:$0xf]
      %v497 = vld [vmem:[%s1 + $0x4c] sm:$0xf]
      %v498 = vld [vmem:[%s1 + $0x50] sm:$0xf]
      %v499 = vld [vmem:[%s1 + $0x54] sm:$0xf]
      %v500 = vld [vmem:[%s1 + $0x58] sm:$0xf]
      %v501 = vld [vmem:[%s1 + $0x5c] sm:$0xf]
      %v502 = vld [vmem:[%s1 + $0x60] sm:$0xf]
      %v503 = vld [vmem:[%s1 + $0x64] sm:$0xf]
      %v504 = vld [vmem:[%s1 + $0x68] sm:$0xf]
      %v505 = vld [vmem:[%s1 + $0x6c] sm:$0xf]
      %v506 = vld [vmem:[%s1 + $0x70] sm:$0xf]
      %v507 = vld [vmem:[%s1 + $0x74] sm:$0xf]
      %v508 = vld [vmem:[%s1 + $0x78] sm:$0xf]
      %v509 = vld [vmem:[%s1 + $0x7c] sm:$0xf]
      %v510 = vld [vmem:[%s1 + $0x80] sm:$0xf]
      %v511 = vld [vmem:[%s1 + $0x84] sm:$0xf]
      %v512 = vld [vmem:[%s1 + $0x88] sm:$0xf]
      %v513 = vld [vmem:[%s1 + $0x8c] sm:$0xf]
      %v514 = vld [vmem:[%s1 + $0x90] sm:$0xf]
      %v515 = vld [vmem:[%s1 + $0x94] sm:$0xf]
      %v516 = vld [vmem:[%s1 + $0x98] sm:$0xf]
      %v517 = vld [vmem:[%s1 + $0x9c] sm:$0xf]
      %v518 = vld [vmem:[%s1 + $0xa0] sm:$0xf]
      %v519 = vld [vmem:[%s1 + $0xa4] sm:$0xf]
      %v520 = vld [vmem:[%s1 + $0xa8] sm:$0xf]
      %v521 = vld [vmem:[%s1 + $0xac] sm:$0xf]
      %v522 = vld [vmem:[%s1 + $0xb0] sm:$0xf]
      %v523 = vld [vmem:[%s1 + $0xb4] sm:$0xf]
      %v524 = vld [vmem:[%s1 + $0xb8] sm:$0xf]
      %v525 = vld [vmem:[%s1 + $0xbc] sm:$0xf]
      %v526 = vld [vmem:[%s1 + $0xc0] sm:$0xf]
      %v527 = vld [vmem:[%s1 + $0xc4] sm:$0xf]
      %v528 = vld [vmem:[%s1 + $0xc8] sm:$0xf]
      %v529 = vld [vmem:[%s1 + $0xcc] sm:$0xf]
      %v530 = vld [vmem:[%s1 + $0xd0] sm:$0xf]
      %v531 = vld [vmem:[%s1 + $0xd4] sm:$0xf]
      %v532 = vld [vmem:[%s1 + $0xd8] sm:$0xf]
      %v533 = vld [vmem:[%s1 + $0xdc] sm:$0xf]
      %v534 = vld [vmem:[%s1 + $0xe0] sm:$0xf]
      %v535 = vld [vmem:[%s1 + $0xe4] sm:$0xf]
      %v536 = vld [vmem:[%s1 + $0xe8] sm:$0xf]
      %v537 = vld [vmem:[%s1 + $0xec] sm:$0xf]
      %v538 = vld [vmem:[%s1 + $0xf0] sm:$0xf]
      %v539 = vld [vmem:[%s1 + $0xf4] sm:$0xf]
      %v540 = vld [vmem:[%s1 + $0xf8] sm:$0xf]
      %v541 = vld [vmem:[%s1 + $0xfc] sm:$0xf]
      %v542 = vld [vmem:[%s1 + $0x100] sm:$0xf]
      %v543 = vld [vmem:[%s1 + $0x104] sm:$0xf]
      %v544 = vld [vmem:[%s1 + $0x108] sm:$0xf]
      %v545 = vld [vmem:[%s1 + $0x10c] sm:$0xf]
      %v546 = vld [vmem:[%s1 + $0x110] sm:$0xf]
      %v547 = vld [vmem:[%s1 + $0x114] sm:$0xf]
      %v548 = vld [vmem:[%s1 + $0x118] sm:$0xf]
      %v549 = vld [vmem:[%s1 + $0x11c] sm:$0xf]
      %v550 = vld [vmem:[%s1 + $0x120] sm:$0xf]
      %v551 = vld [vmem:[%s1 + $0x124] sm:$0xf]
      %v552 = vld [vmem:[%s1 + $0x128] sm:$0xf]
      %v553 = vld [vmem:[%s1 + $0x12c] sm:$0xf]
      %v554 = vld [vmem:[%s1 + $0x130] sm:$0xf]
      %v555 = vld [vmem:[%s1 + $0x134] sm:$0xf]
      %v556 = vld [vmem:[%s1 + $0x138] sm:$0xf]
      %v557 = vld [vmem:[%s1 + $0x13c] sm:$0xf]
      %v558 = vld [vmem:[%s1 + $0x140] sm:$0xf]
      %v559 = vld [vmem:[%s1 + $0x144] sm:$0xf]
      %v560 = vld [vmem:[%s1 + $0x148] sm:$0xf]
      %v561 = vld [vmem:[%s1 + $0x14c] sm:$0xf]
      %v562 = vld [vmem:[%s1 + $0x150] sm:$0xf]
      %v563 = vld [vmem:[%s1 + $0x154] sm:$0xf]
      %v564 = vld [vmem:[%s1 + $0x158] sm:$0xf]
      %v565 = vld [vmem:[%s1 + $0x15c] sm:$0xf]
      %v566 = vld [vmem:[%s1 + $0x160] sm:$0xf]
      %v567 = vld [vmem:[%s1 + $0x164] sm:$0xf]
      %v568 = vld [vmem:[%s1 + $0x168] sm:$0xf]
      %v569 = vld [vmem:[%s1 + $0x16c] sm:$0xf]
      %v570 = vld [vmem:[%s1 + $0x170] sm:$0xf]
      %v571 = vld [vmem:[%s1 + $0x174] sm:$0xf]
      %v572 = vld [vmem:[%s1 + $0x178] sm:$0xf]
      %v573 = vld [vmem:[%s1 + $0x17c] sm:$0xf]
      %v574 = vld [vmem:[%s1 + $0x180] sm:$0xf]
      %v575 = vld [vmem:[%s1 + $0x184] sm:$0xf]
      %v576 = vld [vmem:[%s1 + $0x188] sm:$0xf]
      %v577 = vld [vmem:[%s1 + $0x18c] sm:$0xf]
      %v578 = vld [vmem:[%s1 + $0x190] sm:$0xf]
      %v579 = vld [vmem:[%s1 + $0x194] sm:$0xf]
      %v580 = vld [vmem:[%s1 + $0x198] sm:$0xf]
      %v581 = vld [vmem:[%s1 + $0x19c] sm:$0xf]
      %v582 = vld [vmem:[%s1 + $0x1a0] sm:$0xf]
      %v583 = vld [vmem:[%s1 + $0x1a4] sm:$0xf]
      %v584 = vld [vmem:[%s1 + $0x1a8] sm:$0xf]
      %v585 = vld [vmem:[%s1 + $0x1ac] sm:$0xf]
      %v586 = vld [vmem:[%s1 + $0x1b0] sm:$0xf]
      %v587 = vld [vmem:[%s1 + $0x1b4] sm:$0xf]
      %v588 = vld [vmem:[%s1 + $0x1b8] sm:$0xf]
      %v589 = vld [vmem:[%s1 + $0x1bc] sm:$0xf]
      %v590 = vld [vmem:[%s1 + $0x1c0] sm:$0xf]
      %v591 = vld [vmem:[%s1 + $0x1c4] sm:$0xf]
      %v592 = vld [vmem:[%s1 + $0x1c8] sm:$0xf]
      %v593 = vld [vmem:[%s1 + $0x1cc] sm:$0xf]
      %v594 = vld [vmem:[%s1 + $0x1d0] sm:$0xf]
      %v595 = vld [vmem:[%s1 + $0x1d4] sm:$0xf]
      %v596 = vld [vmem:[%s1 + $0x1d8] sm:$0xf]
      %v597 = vld [vmem:[%s1 + $0x1dc] sm:$0xf]
      %v598 = vld [vmem:[%s1 + $0x1e0] sm:$0xf]
      %v599 = vld [vmem:[%s1 + $0x1e4] sm:$0xf]
      %v600 = vld [vmem:[%s1 + $0x1e8] sm:$0xf]
      %v601 = vld [vmem:[%s1 + $0x1ec] sm:$0xf]
      %v602 = vld [vmem:[%s1 + $0x1f0] sm:$0xf]
      %v603 = vld [vmem:[%s1 + $0x1f4] sm:$0xf]
      %v604 = vld [vmem:[%s1 + $0x1f8] sm:$0xf]
      %v605 = vld [vmem:[%s1 + $0x1fc] sm:$0xf]
      %v606 = vld [vmem:[%s1 + $0x200] sm:$0xf]
      %v607 = vld [vmem:[%s1 + $0x204] sm:$0xf]
      %v608 = vld [vmem:[%s1 + $0x208] sm:$0xf]
      %v609 = vld [vmem:[%s1 + $0x20c] sm:$0xf]
      %v610 = vld [vmem:[%s1 + $0x210] sm:$0xf]
      %v611 = vld [vmem:[%s1 + $0x214] sm:$0xf]
      %v612 = vld [vmem:[%s1 + $0x218] sm:$0xf]
      %v613 = vld [vmem:[%s1 + $0x21c] sm:$0xf]
      %v614 = vld [vmem:[%s1 + $0x220] sm:$0xf]
      %v615 = vld [vmem:[%s1 + $0x224] sm:$0xf]
      %v616 = vld [vmem:[%s1 + $0x228] sm:$0xf]
      %v617 = vld [vmem:[%s1 + $0x22c] sm:$0xf]
      %v618 = vld [vmem:[%s1 + $0x230] sm:$0xf]
      %v619 = vld [vmem:[%s1 + $0x234] sm:$0xf]
      %v620 = vld [vmem:[%s1 + $0x238] sm:$0xf]
      %v621 = vld [vmem:[%s1 + $0x23c] sm:$0xf]
      %v622 = vld [vmem:[%s1 + $0x240] sm:$0xf]
      %v623 = vld [vmem:[%s1 + $0x244] sm:$0xf]
      %v624 = vld [vmem:[%s1 + $0x248] sm:$0xf]
      %v625 = vld [vmem:[%s1 + $0x24c] sm:$0xf]
      %v626 = vld [vmem:[%s1 + $0x250] sm:$0xf]
      %v627 = vld [vmem:[%s1 + $0x254] sm:$0xf]
      %v628 = vld [vmem:[%s1 + $0x258] sm:$0xf]
      %v629 = vld [vmem:[%s1 + $0x25c] sm:$0xf]
      %v630 = vld [vmem:[%s1 + $0x260] sm:$0xf]
      %v631 = vld [vmem:[%s1 + $0x264] sm:$0xf]
      %v632 = vld [vmem:[%s1 + $0x268] sm:$0xf]
      %v633 = vld [vmem:[%s1 + $0x26c] sm:$0xf]
      %v634 = vld [vmem:[%s1 + $0x270] sm:$0xf]
      %v635 = vld [vmem:[%s1 + $0x274] sm:$0xf]
      %v636 = vld [vmem:[%s1 + $0x278] sm:$0xf]
      %v637 = vld [vmem:[%s1 + $0x27c] sm:$0xf]
      %v638 = vld [vmem:[%s1 + $0x280] sm:$0xf]
      %v639 = vld [vmem:[%s1 + $0x284] sm:$0xf]
      %v640 = vld [vmem:[%s1 + $0x288] sm:$0xf]
      %v641 = vld [vmem:[%s1 + $0x28c] sm:$0xf]
      %v642 = vld [vmem:[%s1 + $0x290] sm:$0xf]
      %v643 = vld [vmem:[%s1 + $0x294] sm:$0xf]
      %v644 = vld [vmem:[%s1 + $0x298] sm:$0xf]
      %v645 = vld [vmem:[%s1 + $0x29c] sm:$0xf]
      %v646 = vld [vmem:[%s1 + $0x2a0] sm:$0xf]
      %v647 = vld [vmem:[%s1 + $0x2a4] sm:$0xf]
      %v648 = vld [vmem:[%s1 + $0x2a8] sm:$0xf]
      %v649 = vld [vmem:[%s1 + $0x2ac] sm:$0xf]
      %v650 = vld [vmem:[%s1 + $0x2b0] sm:$0xf]
      %v651 = vld [vmem:[%s1 + $0x2b4] sm:$0xf]
      %v652 = vld [vmem:[%s1 + $0x2b8] sm:$0xf]
      %v653 = vld [vmem:[%s1 + $0x2bc] sm:$0xf]
      %v654 = vld [vmem:[%s1 + $0x2c0] sm:$0xf]
      %v655 = vld [vmem:[%s1 + $0x2c4] sm:$0xf]
      %v656 = vld [vmem:[%s1 + $0x2c8] sm:$0xf]
      %v657 = vld [vmem:[%s1 + $0x2cc] sm:$0xf]
      %v658 = vld [vmem:[%s1 + $0x2d0] sm:$0xf]
      %v659 = vld [vmem:[%s1 + $0x2d4] sm:$0xf]
      %v660 = vld [vmem:[%s1 + $0x2d8] sm:$0xf]
      %v661 = vld [vmem:[%s1 + $0x2dc] sm:$0xf]
      %v662 = vld [vmem:[%s1 + $0x2e0] sm:$0xf]
      %v663 = vld [vmem:[%s1 + $0x2e4] sm:$0xf]
      %v664 = vld [vmem:[%s1 + $0x2e8] sm:$0xf]
      %v665 = vld [vmem:[%s1 + $0x2ec] sm:$0xf]
      %v666 = vld [vmem:[%s1 + $0x2f0] sm:$0xf]
      %v667 = vld [vmem:[%s1 + $0x2f4] sm:$0xf]
      %v668 = vld [vmem:[%s1 + $0x2f8] sm:$0xf]
      %v669 = vld [vmem:[%s1 + $0x2fc] sm:$0xf]
      %v670 = vld [vmem:[%s2] sm:$0x1]
      %v672 = vlaneseq
      %v673 = vshrl.u32 %v672, 7
      %v674 = vsub.s32 0, %v673
      %v675 = vrot.slane %v670, %v674
      %v869 = vunpack.c.l.b16 %v286
      %v870 = vunpack.c.h.b16 %v286
      %v871 = vunpack.c.l.b16 %v287
      %v872 = vunpack.c.h.b16 %v287
      %v873 = vunpack.c.l.b16 %v288
      %v874 = vunpack.c.h.b16 %v288
      %v875 = vunpack.c.l.b16 %v289
      %v876 = vunpack.c.h.b16 %v289
      %v877 = vunpack.c.l.b16 %v290
      %v878 = vunpack.c.h.b16 %v290
      %v879 = vunpack.c.l.b16 %v291
      %v880 = vunpack.c.h.b16 %v291
      %v881 = vunpack.c.l.b16 %v292
      %v882 = vunpack.c.h.b16 %v292
      %v883 = vunpack.c.l.b16 %v293
      %v884 = vunpack.c.h.b16 %v293
      %v885 = vunpack.c.l.b16 %v294
      %v886 = vunpack.c.h.b16 %v294
      %v887 = vunpack.c.l.b16 %v295
      %v888 = vunpack.c.h.b16 %v295
      %v889 = vunpack.c.l.b16 %v296
      %v890 = vunpack.c.h.b16 %v296
      %v891 = vunpack.c.l.b16 %v297
      %v892 = vunpack.c.h.b16 %v297
      %v893 = vunpack.c.l.b16 %v298
      %v894 = vunpack.c.h.b16 %v298
      %v895 = vunpack.c.l.b16 %v299
      %v896 = vunpack.c.h.b16 %v299
      %v897 = vunpack.c.l.b16 %v300
      %v898 = vunpack.c.h.b16 %v300
      %v899 = vunpack.c.l.b16 %v301
      %v900 = vunpack.c.h.b16 %v301
      %v901 = vunpack.c.l.b16 %v302
      %v902 = vunpack.c.h.b16 %v302
      %v903 = vunpack.c.l.b16 %v303
      %v904 = vunpack.c.h.b16 %v303
      %v905 = vunpack.c.l.b16 %v304
      %v906 = vunpack.c.h.b16 %v304
      %v907 = vunpack.c.l.b16 %v305
      %v908 = vunpack.c.h.b16 %v305
      %v909 = vunpack.c.l.b16 %v306
      %v910 = vunpack.c.h.b16 %v306
      %v911 = vunpack.c.l.b16 %v307
      %v912 = vunpack.c.h.b16 %v307
      %v913 = vunpack.c.l.b16 %v308
      %v914 = vunpack.c.h.b16 %v308
      %v915 = vunpack.c.l.b16 %v309
      %v916 = vunpack.c.h.b16 %v309
      %v917 = vunpack.c.l.b16 %v310
      %v918 = vunpack.c.h.b16 %v310
      %v919 = vunpack.c.l.b16 %v311
      %v920 = vunpack.c.h.b16 %v311
      %v921 = vunpack.c.l.b16 %v312
      %v922 = vunpack.c.h.b16 %v312
      %v923 = vunpack.c.l.b16 %v313
      %v924 = vunpack.c.h.b16 %v313
      %v925 = vunpack.c.l.b16 %v314
      %v926 = vunpack.c.h.b16 %v314
      %v927 = vunpack.c.l.b16 %v315
      %v928 = vunpack.c.h.b16 %v315
      %v929 = vunpack.c.l.b16 %v316
      %v930 = vunpack.c.h.b16 %v316
      %v931 = vunpack.c.l.b16 %v317
      %v932 = vunpack.c.h.b16 %v317
      %v933 = vunpack.c.l.b16 %v318
      %v934 = vunpack.c.h.b16 %v318
      %v935 = vunpack.c.l.b16 %v319
      %v936 = vunpack.c.h.b16 %v319
      %v937 = vunpack.c.l.b16 %v320
      %v938 = vunpack.c.h.b16 %v320
      %v939 = vunpack.c.l.b16 %v321
      %v940 = vunpack.c.h.b16 %v321
      %v941 = vunpack.c.l.b16 %v322
      %v942 = vunpack.c.h.b16 %v322
      %v943 = vunpack.c.l.b16 %v323
      %v944 = vunpack.c.h.b16 %v323
      %v945 = vunpack.c.l.b16 %v324
      %v946 = vunpack.c.h.b16 %v324
      %v947 = vunpack.c.l.b16 %v325
      %v948 = vunpack.c.h.b16 %v325
      %v949 = vunpack.c.l.b16 %v326
      %v950 = vunpack.c.h.b16 %v326
      %v951 = vunpack.c.l.b16 %v327
      %v952 = vunpack.c.h.b16 %v327
      %v953 = vunpack.c.l.b16 %v328
      %v954 = vunpack.c.h.b16 %v328
      %v955 = vunpack.c.l.b16 %v329
      %v956 = vunpack.c.h.b16 %v329
      %v957 = vunpack.c.l.b16 %v330
      %v958 = vunpack.c.h.b16 %v330
      %v959 = vunpack.c.l.b16 %v331
      %v960 = vunpack.c.h.b16 %v331
      %v961 = vunpack.c.l.b16 %v332
      %v962 = vunpack.c.h.b16 %v332
      %v963 = vunpack.c.l.b16 %v333
      %v964 = vunpack.c.h.b16 %v333
      %v965 = vunpack.c.l.b16 %v334
      %v966 = vunpack.c.h.b16 %v334
      %v967 = vunpack.c.l.b16 %v335
      %v968 = vunpack.c.h.b16 %v335
      %v969 = vunpack.c.l.b16 %v336
      %v970 = vunpack.c.h.b16 %v336
      %v971 = vunpack.c.l.b16 %v337
      %v972 = vunpack.c.h.b16 %v337
      %v973 = vunpack.c.l.b16 %v338
      %v974 = vunpack.c.h.b16 %v338
      %v975 = vunpack.c.l.b16 %v339
      %v976 = vunpack.c.h.b16 %v339
      %v977 = vunpack.c.l.b16 %v340
      %v978 = vunpack.c.h.b16 %v340
      %v979 = vunpack.c.l.b16 %v341
      %v980 = vunpack.c.h.b16 %v341
      %v981 = vunpack.c.l.b16 %v342
      %v982 = vunpack.c.h.b16 %v342
      %v983 = vunpack.c.l.b16 %v343
      %v984 = vunpack.c.h.b16 %v343
      %v985 = vunpack.c.l.b16 %v344
      %v986 = vunpack.c.h.b16 %v344
      %v987 = vunpack.c.l.b16 %v345
      %v988 = vunpack.c.h.b16 %v345
      %v989 = vunpack.c.l.b16 %v346
      %v990 = vunpack.c.h.b16 %v346
      %v991 = vunpack.c.l.b16 %v347
      %v992 = vunpack.c.h.b16 %v347
      %v993 = vunpack.c.l.b16 %v348
      %v994 = vunpack.c.h.b16 %v348
      %v995 = vunpack.c.l.b16 %v349
      %v996 = vunpack.c.h.b16 %v349
      %v997 = vunpack.c.l.b16 %v350
      %v998 = vunpack.c.h.b16 %v350
      %v999 = vunpack.c.l.b16 %v351
      %v1000 = vunpack.c.h.b16 %v351
      %v1001 = vunpack.c.l.b16 %v352
      %v1002 = vunpack.c.h.b16 %v352
      %v1003 = vunpack.c.l.b16 %v353
      %v1004 = vunpack.c.h.b16 %v353
      %v1005 = vunpack.c.l.b16 %v354
      %v1006 = vunpack.c.h.b16 %v354
      %v1007 = vunpack.c.l.b16 %v355
      %v1008 = vunpack.c.h.b16 %v355
      %v1009 = vunpack.c.l.b16 %v356
      %v1010 = vunpack.c.h.b16 %v356
      %v1011 = vunpack.c.l.b16 %v357
      %v1012 = vunpack.c.h.b16 %v357
      %v1013 = vunpack.c.l.b16 %v358
      %v1014 = vunpack.c.h.b16 %v358
      %v1015 = vunpack.c.l.b16 %v359
      %v1016 = vunpack.c.h.b16 %v359
      %v1017 = vunpack.c.l.b16 %v360
      %v1018 = vunpack.c.h.b16 %v360
      %v1019 = vunpack.c.l.b16 %v361
      %v1020 = vunpack.c.h.b16 %v361
      %v1021 = vunpack.c.l.b16 %v362
      %v1022 = vunpack.c.h.b16 %v362
      %v1023 = vunpack.c.l.b16 %v363
      %v1024 = vunpack.c.h.b16 %v363
      %v1025 = vunpack.c.l.b16 %v364
      %v1026 = vunpack.c.h.b16 %v364
      %v1027 = vunpack.c.l.b16 %v365
      %v1028 = vunpack.c.h.b16 %v365
      %v1029 = vunpack.c.l.b16 %v366
      %v1030 = vunpack.c.h.b16 %v366
      %v1031 = vunpack.c.l.b16 %v367
      %v1032 = vunpack.c.h.b16 %v367
      %v1033 = vunpack.c.l.b16 %v368
      %v1034 = vunpack.c.h.b16 %v368
      %v1035 = vunpack.c.l.b16 %v369
      %v1036 = vunpack.c.h.b16 %v369
      %v1037 = vunpack.c.l.b16 %v370
      %v1038 = vunpack.c.h.b16 %v370
      %v1039 = vunpack.c.l.b16 %v371
      %v1040 = vunpack.c.h.b16 %v371
      %v1041 = vunpack.c.l.b16 %v372
      %v1042 = vunpack.c.h.b16 %v372
      %v1043 = vunpack.c.l.b16 %v373
      %v1044 = vunpack.c.h.b16 %v373
      %v1045 = vunpack.c.l.b16 %v374
      %v1046 = vunpack.c.h.b16 %v374
      %v1047 = vunpack.c.l.b16 %v375
      %v1048 = vunpack.c.h.b16 %v375
      %v1049 = vunpack.c.l.b16 %v376
      %v1050 = vunpack.c.h.b16 %v376
      %v1051 = vunpack.c.l.b16 %v377
      %v1052 = vunpack.c.h.b16 %v377
      %v1053 = vunpack.c.l.b16 %v378
      %v1054 = vunpack.c.h.b16 %v378
      %v1055 = vunpack.c.l.b16 %v379
      %v1056 = vunpack.c.h.b16 %v379
      %v1057 = vunpack.c.l.b16 %v380
      %v1058 = vunpack.c.h.b16 %v380
      %v1059 = vunpack.c.l.b16 %v381
      %v1060 = vunpack.c.h.b16 %v381
      %v1061 = vunpack.c.l.b16 %v382
      %v1062 = vunpack.c.h.b16 %v382
      %v1063 = vunpack.c.l.b16 %v383
      %v1064 = vunpack.c.h.b16 %v383
      %v1065 = vunpack.c.l.b16 %v384
      %v1066 = vunpack.c.h.b16 %v384
      %v1067 = vunpack.c.l.b16 %v385
      %v1068 = vunpack.c.h.b16 %v385
      %v1069 = vunpack.c.l.b16 %v386
      %v1070 = vunpack.c.h.b16 %v386
      %v1071 = vunpack.c.l.b16 %v387
      %v1072 = vunpack.c.h.b16 %v387
      %v1073 = vunpack.c.l.b16 %v388
      %v1074 = vunpack.c.h.b16 %v388
      %v1075 = vunpack.c.l.b16 %v389
      %v1076 = vunpack.c.h.b16 %v389
      %v1077 = vunpack.c.l.b16 %v390
      %v1078 = vunpack.c.h.b16 %v390
      %v1079 = vunpack.c.l.b16 %v391
      %v1080 = vunpack.c.h.b16 %v391
      %v1081 = vunpack.c.l.b16 %v392
      %v1082 = vunpack.c.h.b16 %v392
      %v1083 = vunpack.c.l.b16 %v393
      %v1084 = vunpack.c.h.b16 %v393
      %v1085 = vunpack.c.l.b16 %v394
      %v1086 = vunpack.c.h.b16 %v394
      %v1087 = vunpack.c.l.b16 %v395
      %v1088 = vunpack.c.h.b16 %v395
      %v1089 = vunpack.c.l.b16 %v396
      %v1090 = vunpack.c.h.b16 %v396
      %v1091 = vunpack.c.l.b16 %v397
      %v1092 = vunpack.c.h.b16 %v397
      %v1093 = vunpack.c.l.b16 %v398
      %v1094 = vunpack.c.h.b16 %v398
      %v1095 = vunpack.c.l.b16 %v399
      %v1096 = vunpack.c.h.b16 %v399
      %v1097 = vunpack.c.l.b16 %v400
      %v1098 = vunpack.c.h.b16 %v400
      %v1099 = vunpack.c.l.b16 %v401
      %v1100 = vunpack.c.h.b16 %v401
      %v1101 = vunpack.c.l.b16 %v402
      %v1102 = vunpack.c.h.b16 %v402
      %v1103 = vunpack.c.l.b16 %v403
      %v1104 = vunpack.c.h.b16 %v403
      %v1105 = vunpack.c.l.b16 %v404
      %v1106 = vunpack.c.h.b16 %v404
      %v1107 = vunpack.c.l.b16 %v405
      %v1108 = vunpack.c.h.b16 %v405
      %v1109 = vunpack.c.l.b16 %v406
      %v1110 = vunpack.c.h.b16 %v406
      %v1111 = vunpack.c.l.b16 %v407
      %v1112 = vunpack.c.h.b16 %v407
      %v1113 = vunpack.c.l.b16 %v408
      %v1114 = vunpack.c.h.b16 %v408
      %v1115 = vunpack.c.l.b16 %v409
      %v1116 = vunpack.c.h.b16 %v409
      %v1117 = vunpack.c.l.b16 %v410
      %v1118 = vunpack.c.h.b16 %v410
      %v1119 = vunpack.c.l.b16 %v411
      %v1120 = vunpack.c.h.b16 %v411
      %v1121 = vunpack.c.l.b16 %v412
      %v1122 = vunpack.c.h.b16 %v412
      %v1123 = vunpack.c.l.b16 %v413
      %v1124 = vunpack.c.h.b16 %v413
      %v1125 = vunpack.c.l.b16 %v414
      %v1126 = vunpack.c.h.b16 %v414
      %v1127 = vunpack.c.l.b16 %v415
      %v1128 = vunpack.c.h.b16 %v415
      %v1129 = vunpack.c.l.b16 %v416
      %v1130 = vunpack.c.h.b16 %v416
      %v1131 = vunpack.c.l.b16 %v417
      %v1132 = vunpack.c.h.b16 %v417
      %v1133 = vunpack.c.l.b16 %v418
      %v1134 = vunpack.c.h.b16 %v418
      %v1135 = vunpack.c.l.b16 %v419
      %v1136 = vunpack.c.h.b16 %v419
      %v1137 = vunpack.c.l.b16 %v420
      %v1138 = vunpack.c.h.b16 %v420
      %v1139 = vunpack.c.l.b16 %v421
      %v1140 = vunpack.c.h.b16 %v421
      %v1141 = vunpack.c.l.b16 %v422
      %v1142 = vunpack.c.h.b16 %v422
      %v1143 = vunpack.c.l.b16 %v423
      %v1144 = vunpack.c.h.b16 %v423
      %v1145 = vunpack.c.l.b16 %v424
      %v1146 = vunpack.c.h.b16 %v424
      %v1147 = vunpack.c.l.b16 %v425
      %v1148 = vunpack.c.h.b16 %v425
      %v1149 = vunpack.c.l.b16 %v426
      %v1150 = vunpack.c.h.b16 %v426
      %v1151 = vunpack.c.l.b16 %v427
      %v1152 = vunpack.c.h.b16 %v427
      %v1153 = vunpack.c.l.b16 %v428
      %v1154 = vunpack.c.h.b16 %v428
      %v1155 = vunpack.c.l.b16 %v429
      %v1156 = vunpack.c.h.b16 %v429
      %v1157 = vunpack.c.l.b16 %v430
      %v1158 = vunpack.c.h.b16 %v430
      %v1159 = vunpack.c.l.b16 %v431
      %v1160 = vunpack.c.h.b16 %v431
      %v1161 = vunpack.c.l.b16 %v432
      %v1162 = vunpack.c.h.b16 %v432
      %v1163 = vunpack.c.l.b16 %v433
      %v1164 = vunpack.c.h.b16 %v433
      %v1165 = vunpack.c.l.b16 %v434
      %v1166 = vunpack.c.h.b16 %v434
      %v1167 = vunpack.c.l.b16 %v435
      %v1168 = vunpack.c.h.b16 %v435
      %v1169 = vunpack.c.l.b16 %v436
      %v1170 = vunpack.c.h.b16 %v436
      %v1171 = vunpack.c.l.b16 %v437
      %v1172 = vunpack.c.h.b16 %v437
      %v1173 = vunpack.c.l.b16 %v438
      %v1174 = vunpack.c.h.b16 %v438
      %v1175 = vunpack.c.l.b16 %v439
      %v1176 = vunpack.c.h.b16 %v439
      %v1177 = vunpack.c.l.b16 %v440
      %v1178 = vunpack.c.h.b16 %v440
      %v1179 = vunpack.c.l.b16 %v441
      %v1180 = vunpack.c.h.b16 %v441
      %v1181 = vunpack.c.l.b16 %v442
      %v1182 = vunpack.c.h.b16 %v442
      %v1183 = vunpack.c.l.b16 %v443
      %v1184 = vunpack.c.h.b16 %v443
      %v1185 = vunpack.c.l.b16 %v444
      %v1186 = vunpack.c.h.b16 %v444
      %v1187 = vunpack.c.l.b16 %v445
      %v1188 = vunpack.c.h.b16 %v445
      %v1189 = vunpack.c.l.b16 %v446
      %v1190 = vunpack.c.h.b16 %v446
      %v1191 = vunpack.c.l.b16 %v447
      %v1192 = vunpack.c.h.b16 %v447
      %v1193 = vunpack.c.l.b16 %v448
      %v1194 = vunpack.c.h.b16 %v448
      %v1195 = vunpack.c.l.b16 %v449
      %v1196 = vunpack.c.h.b16 %v449
      %v1197 = vunpack.c.l.b16 %v450
      %v1198 = vunpack.c.h.b16 %v450
      %v1199 = vunpack.c.l.b16 %v451
      %v1200 = vunpack.c.h.b16 %v451
      %v1201 = vunpack.c.l.b16 %v452
      %v1202 = vunpack.c.h.b16 %v452
      %v1203 = vunpack.c.l.b16 %v453
      %v1204 = vunpack.c.h.b16 %v453
      %v1205 = vunpack.c.l.b16 %v454
      %v1206 = vunpack.c.h.b16 %v454
      %v1207 = vunpack.c.l.b16 %v455
      %v1208 = vunpack.c.h.b16 %v455
      %v1209 = vunpack.c.l.b16 %v456
      %v1210 = vunpack.c.h.b16 %v456
      %v1211 = vunpack.c.l.b16 %v457
      %v1212 = vunpack.c.h.b16 %v457
      %v1213 = vunpack.c.l.b16 %v458
      %v1214 = vunpack.c.h.b16 %v458
      %v1215 = vunpack.c.l.b16 %v459
      %v1216 = vunpack.c.h.b16 %v459
      %v1217 = vunpack.c.l.b16 %v460
      %v1218 = vunpack.c.h.b16 %v460
      %v1219 = vunpack.c.l.b16 %v461
      %v1220 = vunpack.c.h.b16 %v461
      %v1221 = vunpack.c.l.b16 %v462
      %v1222 = vunpack.c.h.b16 %v462
      %v1223 = vunpack.c.l.b16 %v463
      %v1224 = vunpack.c.h.b16 %v463
      %v1225 = vunpack.c.l.b16 %v464
      %v1226 = vunpack.c.h.b16 %v464
      %v1227 = vunpack.c.l.b16 %v465
      %v1228 = vunpack.c.h.b16 %v465
      %v1229 = vunpack.c.l.b16 %v466
      %v1230 = vunpack.c.h.b16 %v466
      %v1231 = vunpack.c.l.b16 %v467
      %v1232 = vunpack.c.h.b16 %v467
      %v1233 = vunpack.c.l.b16 %v468
      %v1234 = vunpack.c.h.b16 %v468
      %v1235 = vunpack.c.l.b16 %v469
      %v1236 = vunpack.c.h.b16 %v469
      %v1237 = vunpack.c.l.b16 %v470
      %v1238 = vunpack.c.h.b16 %v470
      %v1239 = vunpack.c.l.b16 %v471
      %v1240 = vunpack.c.h.b16 %v471
      %v1241 = vunpack.c.l.b16 %v472
      %v1242 = vunpack.c.h.b16 %v472
      %v1243 = vunpack.c.l.b16 %v473
      %v1244 = vunpack.c.h.b16 %v473
      %v1245 = vunpack.c.l.b16 %v474
      %v1246 = vunpack.c.h.b16 %v474
      %v1247 = vunpack.c.l.b16 %v475
      %v1248 = vunpack.c.h.b16 %v475
      %v1249 = vunpack.c.l.b16 %v476
      %v1250 = vunpack.c.h.b16 %v476
      %v1251 = vunpack.c.l.b16 %v477
      %v1252 = vunpack.c.h.b16 %v477
      %v1253 = vpack.c.b16 %v881, %v869
      %v1254 = vpack.c.b16 %v882, %v870
      %v1255 = vpack.c.b16 %v883, %v871
      %v1256 = vpack.c.b16 %v884, %v872
      %v1257 = vpack.c.b16 %v885, %v873
      %v1258 = vpack.c.b16 %v886, %v874
      %v1259 = vpack.c.b16 %v887, %v875
      %v1260 = vpack.c.b16 %v888, %v876
      %v1261 = vpack.c.b16 %v889, %v877
      %v1262 = vpack.c.b16 %v890, %v878
      %v1263 = vpack.c.b16 %v891, %v879
      %v1264 = vpack.c.b16 %v892, %v880
      %v1265 = vpack.c.b16 %v905, %v893
      %v1266 = vpack.c.b16 %v906, %v894
      %v1267 = vpack.c.b16 %v907, %v895
      %v1268 = vpack.c.b16 %v908, %v896
      %v1269 = vpack.c.b16 %v909, %v897
      %v1270 = vpack.c.b16 %v910, %v898
      %v1271 = vpack.c.b16 %v911, %v899
      %v1272 = vpack.c.b16 %v912, %v900
      %v1273 = vpack.c.b16 %v913, %v901
      %v1274 = vpack.c.b16 %v914, %v902
      %v1275 = vpack.c.b16 %v915, %v903
      %v1276 = vpack.c.b16 %v916, %v904
      %v1277 = vpack.c.b16 %v929, %v917
      %v1278 = vpack.c.b16 %v930, %v918
      %v1279 = vpack.c.b16 %v931, %v919
      %v1280 = vpack.c.b16 %v932, %v920
      %v1281 = vpack.c.b16 %v933, %v921
      %v1282 = vpack.c.b16 %v934, %v922
      %v1283 = vpack.c.b16 %v935, %v923
      %v1284 = vpack.c.b16 %v936, %v924
      %v1285 = vpack.c.b16 %v937, %v925
      %v1286 = vpack.c.b16 %v938, %v926
      %v1287 = vpack.c.b16 %v939, %v927
      %v1288 = vpack.c.b16 %v940, %v928
      %v1289 = vpack.c.b16 %v953, %v941
      %v1290 = vpack.c.b16 %v954, %v942
      %v1291 = vpack.c.b16 %v955, %v943
      %v1292 = vpack.c.b16 %v956, %v944
      %v1293 = vpack.c.b16 %v957, %v945
      %v1294 = vpack.c.b16 %v958, %v946
      %v1295 = vpack.c.b16 %v959, %v947
      %v1296 = vpack.c.b16 %v960, %v948
      %v1297 = vpack.c.b16 %v961, %v949
      %v1298 = vpack.c.b16 %v962, %v950
      %v1299 = vpack.c.b16 %v963, %v951
      %v1300 = vpack.c.b16 %v964, %v952
      %v1301 = vpack.c.b16 %v977, %v965
      %v1302 = vpack.c.b16 %v978, %v966
      %v1303 = vpack.c.b16 %v979, %v967
      %v1304 = vpack.c.b16 %v980, %v968
      %v1305 = vpack.c.b16 %v981, %v969
      %v1306 = vpack.c.b16 %v982, %v970
      %v1307 = vpack.c.b16 %v983, %v971
      %v1308 = vpack.c.b16 %v984, %v972
      %v1309 = vpack.c.b16 %v985, %v973
      %v1310 = vpack.c.b16 %v986, %v974
      %v1311 = vpack.c.b16 %v987, %v975
      %v1312 = vpack.c.b16 %v988, %v976
      %v1313 = vpack.c.b16 %v1001, %v989
      %v1314 = vpack.c.b16 %v1002, %v990
      %v1315 = vpack.c.b16 %v1003, %v991
      %v1316 = vpack.c.b16 %v1004, %v992
      %v1317 = vpack.c.b16 %v1005, %v993
      %v1318 = vpack.c.b16 %v1006, %v994
      %v1319 = vpack.c.b16 %v1007, %v995
      %v1320 = vpack.c.b16 %v1008, %v996
      %v1321 = vpack.c.b16 %v1009, %v997
      %v1322 = vpack.c.b16 %v1010, %v998
      %v1323 = vpack.c.b16 %v1011, %v999
      %v1324 = vpack.c.b16 %v1012, %v1000
      %v1325 = vpack.c.b16 %v1025, %v1013
      %v1326 = vpack.c.b16 %v1026, %v1014
      %v1327 = vpack.c.b16 %v1027, %v1015
      %v1328 = vpack.c.b16 %v1028, %v1016
      %v1329 = vpack.c.b16 %v1029, %v1017
      %v1330 = vpack.c.b16 %v1030, %v1018
      %v1331 = vpack.c.b16 %v1031, %v1019
      %v1332 = vpack.c.b16 %v1032, %v1020
      %v1333 = vpack.c.b16 %v1033, %v1021
      %v1334 = vpack.c.b16 %v1034, %v1022
      %v1335 = vpack.c.b16 %v1035, %v1023
      %v1336 = vpack.c.b16 %v1036, %v1024
      %v1337 = vpack.c.b16 %v1049, %v1037
      %v1338 = vpack.c.b16 %v1050, %v1038
      %v1339 = vpack.c.b16 %v1051, %v1039
      %v1340 = vpack.c.b16 %v1052, %v1040
      %v1341 = vpack.c.b16 %v1053, %v1041
      %v1342 = vpack.c.b16 %v1054, %v1042
      %v1343 = vpack.c.b16 %v1055, %v1043
      %v1344 = vpack.c.b16 %v1056, %v1044
      %v1345 = vpack.c.b16 %v1057, %v1045
      %v1346 = vpack.c.b16 %v1058, %v1046
      %v1347 = vpack.c.b16 %v1059, %v1047
      %v1348 = vpack.c.b16 %v1060, %v1048
      %v1349 = vpack.c.b16 %v1073, %v1061
      %v1350 = vpack.c.b16 %v1074, %v1062
      %v1351 = vpack.c.b16 %v1075, %v1063
      %v1352 = vpack.c.b16 %v1076, %v1064
      %v1353 = vpack.c.b16 %v1077, %v1065
      %v1354 = vpack.c.b16 %v1078, %v1066
      %v1355 = vpack.c.b16 %v1079, %v1067
      %v1356 = vpack.c.b16 %v1080, %v1068
      %v1357 = vpack.c.b16 %v1081, %v1069
      %v1358 = vpack.c.b16 %v1082, %v1070
      %v1359 = vpack.c.b16 %v1083, %v1071
      %v1360 = vpack.c.b16 %v1084, %v1072
      %v1361 = vpack.c.b16 %v1097, %v1085
      %v1362 = vpack.c.b16 %v1098, %v1086
      %v1363 = vpack.c.b16 %v1099, %v1087
      %v1364 = vpack.c.b16 %v1100, %v1088
      %v1365 = vpack.c.b16 %v1101, %v1089
      %v1366 = vpack.c.b16 %v1102, %v1090
      %v1367 = vpack.c.b16 %v1103, %v1091
      %v1368 = vpack.c.b16 %v1104, %v1092
      %v1369 = vpack.c.b16 %v1105, %v1093
      %v1370 = vpack.c.b16 %v1106, %v1094
      %v1371 = vpack.c.b16 %v1107, %v1095
      %v1372 = vpack.c.b16 %v1108, %v1096
      %v1373 = vpack.c.b16 %v1121, %v1109
      %v1374 = vpack.c.b16 %v1122, %v1110
      %v1375 = vpack.c.b16 %v1123, %v1111
      %v1376 = vpack.c.b16 %v1124, %v1112
      %v1377 = vpack.c.b16 %v1125, %v1113
      %v1378 = vpack.c.b16 %v1126, %v1114
      %v1379 = vpack.c.b16 %v1127, %v1115
      %v1380 = vpack.c.b16 %v1128, %v1116
      %v1381 = vpack.c.b16 %v1129, %v1117
      %v1382 = vpack.c.b16 %v1130, %v1118
      %v1383 = vpack.c.b16 %v1131, %v1119
      %v1384 = vpack.c.b16 %v1132, %v1120
      %v1385 = vpack.c.b16 %v1145, %v1133
      %v1386 = vpack.c.b16 %v1146, %v1134
      %v1387 = vpack.c.b16 %v1147, %v1135
      %v1388 = vpack.c.b16 %v1148, %v1136
      %v1389 = vpack.c.b16 %v1149, %v1137
      %v1390 = vpack.c.b16 %v1150, %v1138
      %v1391 = vpack.c.b16 %v1151, %v1139
      %v1392 = vpack.c.b16 %v1152, %v1140
      %v1393 = vpack.c.b16 %v1153, %v1141
      %v1394 = vpack.c.b16 %v1154, %v1142
      %v1395 = vpack.c.b16 %v1155, %v1143
      %v1396 = vpack.c.b16 %v1156, %v1144
      %v1397 = vpack.c.b16 %v1169, %v1157
      %v1398 = vpack.c.b16 %v1170, %v1158
      %v1399 = vpack.c.b16 %v1171, %v1159
      %v1400 = vpack.c.b16 %v1172, %v1160
      %v1401 = vpack.c.b16 %v1173, %v1161
      %v1402 = vpack.c.b16 %v1174, %v1162
      %v1403 = vpack.c.b16 %v1175, %v1163
      %v1404 = vpack.c.b16 %v1176, %v1164
      %v1405 = vpack.c.b16 %v1177, %v1165
      %v1406 = vpack.c.b16 %v1178, %v1166
      %v1407 = vpack.c.b16 %v1179, %v1167
      %v1408 = vpack.c.b16 %v1180, %v1168
      %v1409 = vpack.c.b16 %v1193, %v1181
      %v1410 = vpack.c.b16 %v1194, %v1182
      %v1411 = vpack.c.b16 %v1195, %v1183
      %v1412 = vpack.c.b16 %v1196, %v1184
      %v1413 = vpack.c.b16 %v1197, %v1185
      %v1414 = vpack.c.b16 %v1198, %v1186
      %v1415 = vpack.c.b16 %v1199, %v1187
      %v1416 = vpack.c.b16 %v1200, %v1188
      %v1417 = vpack.c.b16 %v1201, %v1189
      %v1418 = vpack.c.b16 %v1202, %v1190
      %v1419 = vpack.c.b16 %v1203, %v1191
      %v1420 = vpack.c.b16 %v1204, %v1192
      %v1421 = vpack.c.b16 %v1217, %v1205
      %v1422 = vpack.c.b16 %v1218, %v1206
      %v1423 = vpack.c.b16 %v1219, %v1207
      %v1424 = vpack.c.b16 %v1220, %v1208
      %v1425 = vpack.c.b16 %v1221, %v1209
      %v1426 = vpack.c.b16 %v1222, %v1210
      %v1427 = vpack.c.b16 %v1223, %v1211
      %v1428 = vpack.c.b16 %v1224, %v1212
      %v1429 = vpack.c.b16 %v1225, %v1213
      %v1430 = vpack.c.b16 %v1226, %v1214
      %v1431 = vpack.c.b16 %v1227, %v1215
      %v1432 = vpack.c.b16 %v1228, %v1216
      %v1433 = vpack.c.b16 %v1241, %v1229
      %v1434 = vpack.c.b16 %v1242, %v1230
      %v1435 = vpack.c.b16 %v1243, %v1231
      %v1436 = vpack.c.b16 %v1244, %v1232
      %v1437 = vpack.c.b16 %v1245, %v1233
      %v1438 = vpack.c.b16 %v1246, %v1234
      %v1439 = vpack.c.b16 %v1247, %v1235
      %v1440 = vpack.c.b16 %v1248, %v1236
      %v1441 = vpack.c.b16 %v1249, %v1237
      %v1442 = vpack.c.b16 %v1250, %v1238
      %v1443 = vpack.c.b16 %v1251, %v1239
      %v1444 = vpack.c.b16 %v1252, %v1240
      %v1829 = vunpack.c.l.b16 %v478
      %v1830 = vunpack.c.l.b16 %v479
      %v1831 = vunpack.c.l.b16 %v480
      %v1832 = vunpack.c.l.b16 %v481
      %v1833 = vunpack.c.l.b16 %v482
      %v1834 = vunpack.c.l.b16 %v483
      %v1835 = vunpack.c.l.b16 %v484
      %v1836 = vunpack.c.l.b16 %v485
      %v1837 = vunpack.c.l.b16 %v486
      %v1838 = vunpack.c.l.b16 %v487
      %v1839 = vunpack.c.l.b16 %v488
      %v1840 = vunpack.c.l.b16 %v489
      %v1841 = vunpack.c.l.b16 %v490
      %v1842 = vunpack.c.l.b16 %v491
      %v1843 = vunpack.c.l.b16 %v492
      %v1844 = vunpack.c.l.b16 %v493
      %v1845 = vunpack.c.l.b16 %v494
      %v1846 = vunpack.c.l.b16 %v495
      %v1847 = vunpack.c.l.b16 %v496
      %v1848 = vunpack.c.l.b16 %v497
      %v1849 = vunpack.c.l.b16 %v498
      %v1850 = vunpack.c.l.b16 %v499
      %v1851 = vunpack.c.l.b16 %v500
      %v1852 = vunpack.c.l.b16 %v501
      %v1853 = vunpack.c.l.b16 %v502
      %v1854 = vunpack.c.l.b16 %v503
      %v1855 = vunpack.c.l.b16 %v504
      %v1856 = vunpack.c.l.b16 %v505
      %v1857 = vunpack.c.l.b16 %v506
      %v1858 = vunpack.c.l.b16 %v507
      %v1859 = vunpack.c.l.b16 %v508
      %v1860 = vunpack.c.l.b16 %v509
      %v1861 = vunpack.c.l.b16 %v510
      %v1862 = vunpack.c.l.b16 %v511
      %v1863 = vunpack.c.l.b16 %v512
      %v1864 = vunpack.c.l.b16 %v513
      %v1865 = vunpack.c.l.b16 %v514
      %v1866 = vunpack.c.l.b16 %v515
      %v1867 = vunpack.c.l.b16 %v516
      %v1868 = vunpack.c.l.b16 %v517
      %v1869 = vunpack.c.l.b16 %v518
      %v1870 = vunpack.c.l.b16 %v519
      %v1871 = vunpack.c.l.b16 %v520
      %v1872 = vunpack.c.l.b16 %v521
      %v1873 = vunpack.c.l.b16 %v522
      %v1874 = vunpack.c.l.b16 %v523
      %v1875 = vunpack.c.l.b16 %v524
      %v1876 = vunpack.c.l.b16 %v525
      %v1877 = vunpack.c.l.b16 %v526
      %v1878 = vunpack.c.l.b16 %v527
      %v1879 = vunpack.c.l.b16 %v528
      %v1880 = vunpack.c.l.b16 %v529
      %v1881 = vunpack.c.l.b16 %v530
      %v1882 = vunpack.c.l.b16 %v531
      %v1883 = vunpack.c.l.b16 %v532
      %v1884 = vunpack.c.l.b16 %v533
      %v1885 = vunpack.c.l.b16 %v534
      %v1886 = vunpack.c.l.b16 %v535
      %v1887 = vunpack.c.l.b16 %v536
      %v1888 = vunpack.c.l.b16 %v537
      %v1889 = vunpack.c.l.b16 %v538
      %v1890 = vunpack.c.l.b16 %v539
      %v1891 = vunpack.c.l.b16 %v540
      %v1892 = vunpack.c.l.b16 %v541
      %v1893 = vunpack.c.l.b16 %v542
      %v1894 = vunpack.c.l.b16 %v543
      %v1895 = vunpack.c.l.b16 %v544
      %v1896 = vunpack.c.l.b16 %v545
      %v1897 = vunpack.c.l.b16 %v546
      %v1898 = vunpack.c.l.b16 %v547
      %v1899 = vunpack.c.l.b16 %v548
      %v1900 = vunpack.c.l.b16 %v549
      %v1901 = vunpack.c.l.b16 %v550
      %v1902 = vunpack.c.l.b16 %v551
      %v1903 = vunpack.c.l.b16 %v552
      %v1904 = vunpack.c.l.b16 %v553
      %v1905 = vunpack.c.l.b16 %v554
      %v1906 = vunpack.c.l.b16 %v555
      %v1907 = vunpack.c.l.b16 %v556
      %v1908 = vunpack.c.l.b16 %v557
      %v1909 = vunpack.c.l.b16 %v558
      %v1910 = vunpack.c.l.b16 %v559
      %v1911 = vunpack.c.l.b16 %v560
      %v1912 = vunpack.c.l.b16 %v561
      %v1913 = vunpack.c.l.b16 %v562
      %v1914 = vunpack.c.l.b16 %v563
      %v1915 = vunpack.c.l.b16 %v564
      %v1916 = vunpack.c.l.b16 %v565
      %v1917 = vunpack.c.l.b16 %v566
      %v1918 = vunpack.c.l.b16 %v567
      %v1919 = vunpack.c.l.b16 %v568
      %v1920 = vunpack.c.l.b16 %v569
      %v1921 = vunpack.c.l.b16 %v570
      %v1922 = vunpack.c.l.b16 %v571
      %v1923 = vunpack.c.l.b16 %v572
      %v1924 = vunpack.c.l.b16 %v573
      %v1925 = vunpack.c.l.b16 %v574
      %v1926 = vunpack.c.l.b16 %v575
      %v1927 = vunpack.c.l.b16 %v576
      %v1928 = vunpack.c.l.b16 %v577
      %v1929 = vunpack.c.l.b16 %v578
      %v1930 = vunpack.c.l.b16 %v579
      %v1931 = vunpack.c.l.b16 %v580
      %v1932 = vunpack.c.l.b16 %v581
      %v1933 = vunpack.c.l.b16 %v582
      %v1934 = vunpack.c.l.b16 %v583
      %v1935 = vunpack.c.l.b16 %v584
      %v1936 = vunpack.c.l.b16 %v585
      %v1937 = vunpack.c.l.b16 %v586
      %v1938 = vunpack.c.l.b16 %v587
      %v1939 = vunpack.c.l.b16 %v588
      %v1940 = vunpack.c.l.b16 %v589
      %v1941 = vunpack.c.l.b16 %v590
      %v1942 = vunpack.c.l.b16 %v591
      %v1943 = vunpack.c.l.b16 %v592
      %v1944 = vunpack.c.l.b16 %v593
      %v1945 = vunpack.c.l.b16 %v594
      %v1946 = vunpack.c.l.b16 %v595
      %v1947 = vunpack.c.l.b16 %v596
      %v1948 = vunpack.c.l.b16 %v597
      %v1949 = vunpack.c.l.b16 %v598
      %v1950 = vunpack.c.l.b16 %v599
      %v1951 = vunpack.c.l.b16 %v600
      %v1952 = vunpack.c.l.b16 %v601
      %v1953 = vunpack.c.l.b16 %v602
      %v1954 = vunpack.c.l.b16 %v603
      %v1955 = vunpack.c.l.b16 %v604
      %v1956 = vunpack.c.l.b16 %v605
      %v1957 = vunpack.c.l.b16 %v606
      %v1958 = vunpack.c.l.b16 %v607
      %v1959 = vunpack.c.l.b16 %v608
      %v1960 = vunpack.c.l.b16 %v609
      %v1961 = vunpack.c.l.b16 %v610
      %v1962 = vunpack.c.l.b16 %v611
      %v1963 = vunpack.c.l.b16 %v612
      %v1964 = vunpack.c.l.b16 %v613
      %v1965 = vunpack.c.l.b16 %v614
      %v1966 = vunpack.c.l.b16 %v615
      %v1967 = vunpack.c.l.b16 %v616
      %v1968 = vunpack.c.l.b16 %v617
      %v1969 = vunpack.c.l.b16 %v618
      %v1970 = vunpack.c.l.b16 %v619
      %v1971 = vunpack.c.l.b16 %v620
      %v1972 = vunpack.c.l.b16 %v621
      %v1973 = vunpack.c.l.b16 %v622
      %v1974 = vunpack.c.l.b16 %v623
      %v1975 = vunpack.c.l.b16 %v624
      %v1976 = vunpack.c.l.b16 %v625
      %v1977 = vunpack.c.l.b16 %v626
      %v1978 = vunpack.c.l.b16 %v627
      %v1979 = vunpack.c.l.b16 %v628
      %v1980 = vunpack.c.l.b16 %v629
      %v1981 = vunpack.c.l.b16 %v630
      %v1982 = vunpack.c.l.b16 %v631
      %v1983 = vunpack.c.l.b16 %v632
      %v1984 = vunpack.c.l.b16 %v633
      %v1985 = vunpack.c.l.b16 %v634
      %v1986 = vunpack.c.l.b16 %v635
      %v1987 = vunpack.c.l.b16 %v636
      %v1988 = vunpack.c.l.b16 %v637
      %v1989 = vunpack.c.l.b16 %v638
      %v1990 = vunpack.c.l.b16 %v639
      %v1991 = vunpack.c.l.b16 %v640
      %v1992 = vunpack.c.l.b16 %v641
      %v1993 = vunpack.c.l.b16 %v642
      %v1994 = vunpack.c.l.b16 %v643
      %v1995 = vunpack.c.l.b16 %v644
      %v1996 = vunpack.c.l.b16 %v645
      %v1997 = vunpack.c.l.b16 %v646
      %v1998 = vunpack.c.l.b16 %v647
      %v1999 = vunpack.c.l.b16 %v648
      %v2000 = vunpack.c.l.b16 %v649
      %v2001 = vunpack.c.l.b16 %v650
      %v2002 = vunpack.c.l.b16 %v651
      %v2003 = vunpack.c.l.b16 %v652
      %v2004 = vunpack.c.l.b16 %v653
      %v2005 = vunpack.c.l.b16 %v654
      %v2006 = vunpack.c.l.b16 %v655
      %v2007 = vunpack.c.l.b16 %v656
      %v2008 = vunpack.c.l.b16 %v657
      %v2009 = vunpack.c.l.b16 %v658
      %v2010 = vunpack.c.l.b16 %v659
      %v2011 = vunpack.c.l.b16 %v660
      %v2012 = vunpack.c.l.b16 %v661
      %v2013 = vunpack.c.l.b16 %v662
      %v2014 = vunpack.c.l.b16 %v663
      %v2015 = vunpack.c.l.b16 %v664
      %v2016 = vunpack.c.l.b16 %v665
      %v2017 = vunpack.c.l.b16 %v666
      %v2018 = vunpack.c.l.b16 %v667
      %v2019 = vunpack.c.l.b16 %v668
      %v2020 = vunpack.c.l.b16 %v669
      %v2021 = vpack.c.b16 %v1830, %v1829
      %v2022 = vpack.c.b16 %v1832, %v1831
      %v2023 = vpack.c.b16 %v1834, %v1833
      %v2024 = vpack.c.b16 %v1836, %v1835
      %v2025 = vpack.c.b16 %v1838, %v1837
      %v2026 = vpack.c.b16 %v1840, %v1839
      %v2027 = vpack.c.b16 %v1842, %v1841
      %v2028 = vpack.c.b16 %v1844, %v1843
      %v2029 = vpack.c.b16 %v1846, %v1845
      %v2030 = vpack.c.b16 %v1848, %v1847
      %v2031 = vpack.c.b16 %v1850, %v1849
      %v2032 = vpack.c.b16 %v1852, %v1851
      %v2033 = vpack.c.b16 %v1854, %v1853
      %v2034 = vpack.c.b16 %v1856, %v1855
      %v2035 = vpack.c.b16 %v1858, %v1857
      %v2036 = vpack.c.b16 %v1860, %v1859
      %v2037 = vpack.c.b16 %v1862, %v1861
      %v2038 = vpack.c.b16 %v1864, %v1863
      %v2039 = vpack.c.b16 %v1866, %v1865
      %v2040 = vpack.c.b16 %v1868, %v1867
      %v2041 = vpack.c.b16 %v1870, %v1869
      %v2042 = vpack.c.b16 %v1872, %v1871
      %v2043 = vpack.c.b16 %v1874, %v1873
      %v2044 = vpack.c.b16 %v1876, %v1875
      %v2045 = vpack.c.b16 %v1878, %v1877
      %v2046 = vpack.c.b16 %v1880, %v1879
      %v2047 = vpack.c.b16 %v1882, %v1881
      %v2048 = vpack.c.b16 %v1884, %v1883
      %v2049 = vpack.c.b16 %v1886, %v1885
      %v2050 = vpack.c.b16 %v1888, %v1887
      %v2051 = vpack.c.b16 %v1890, %v1889
      %v2052 = vpack.c.b16 %v1892, %v1891
      %v2053 = vpack.c.b16 %v1894, %v1893
      %v2054 = vpack.c.b16 %v1896, %v1895
      %v2055 = vpack.c.b16 %v1898, %v1897
      %v2056 = vpack.c.b16 %v1900, %v1899
      %v2057 = vpack.c.b16 %v1902, %v1901
      %v2058 = vpack.c.b16 %v1904, %v1903
      %v2059 = vpack.c.b16 %v1906, %v1905
      %v2060 = vpack.c.b16 %v1908, %v1907
      %v2061 = vpack.c.b16 %v1910, %v1909
      %v2062 = vpack.c.b16 %v1912, %v1911
      %v2063 = vpack.c.b16 %v1914, %v1913
      %v2064 = vpack.c.b16 %v1916, %v1915
      %v2065 = vpack.c.b16 %v1918, %v1917
      %v2066 = vpack.c.b16 %v1920, %v1919
      %v2067 = vpack.c.b16 %v1922, %v1921
      %v2068 = vpack.c.b16 %v1924, %v1923
      %v2069 = vpack.c.b16 %v1926, %v1925
      %v2070 = vpack.c.b16 %v1928, %v1927
      %v2071 = vpack.c.b16 %v1930, %v1929
      %v2072 = vpack.c.b16 %v1932, %v1931
      %v2073 = vpack.c.b16 %v1934, %v1933
      %v2074 = vpack.c.b16 %v1936, %v1935
      %v2075 = vpack.c.b16 %v1938, %v1937
      %v2076 = vpack.c.b16 %v1940, %v1939
      %v2077 = vpack.c.b16 %v1942, %v1941
      %v2078 = vpack.c.b16 %v1944, %v1943
      %v2079 = vpack.c.b16 %v1946, %v1945
      %v2080 = vpack.c.b16 %v1948, %v1947
      %v2081 = vpack.c.b16 %v1950, %v1949
      %v2082 = vpack.c.b16 %v1952, %v1951
      %v2083 = vpack.c.b16 %v1954, %v1953
      %v2084 = vpack.c.b16 %v1956, %v1955
      %v2085 = vpack.c.b16 %v1958, %v1957
      %v2086 = vpack.c.b16 %v1960, %v1959
      %v2087 = vpack.c.b16 %v1962, %v1961
      %v2088 = vpack.c.b16 %v1964, %v1963
      %v2089 = vpack.c.b16 %v1966, %v1965
      %v2090 = vpack.c.b16 %v1968, %v1967
      %v2091 = vpack.c.b16 %v1970, %v1969
      %v2092 = vpack.c.b16 %v1972, %v1971
      %v2093 = vpack.c.b16 %v1974, %v1973
      %v2094 = vpack.c.b16 %v1976, %v1975
      %v2095 = vpack.c.b16 %v1978, %v1977
      %v2096 = vpack.c.b16 %v1980, %v1979
      %v2097 = vpack.c.b16 %v1982, %v1981
      %v2098 = vpack.c.b16 %v1984, %v1983
      %v2099 = vpack.c.b16 %v1986, %v1985
      %v2100 = vpack.c.b16 %v1988, %v1987
      %v2101 = vpack.c.b16 %v1990, %v1989
      %v2102 = vpack.c.b16 %v1992, %v1991
      %v2103 = vpack.c.b16 %v1994, %v1993
      %v2104 = vpack.c.b16 %v1996, %v1995
      %v2105 = vpack.c.b16 %v1998, %v1997
      %v2106 = vpack.c.b16 %v2000, %v1999
      %v2107 = vpack.c.b16 %v2002, %v2001
      %v2108 = vpack.c.b16 %v2004, %v2003
      %v2109 = vpack.c.b16 %v2006, %v2005
      %v2110 = vpack.c.b16 %v2008, %v2007
      %v2111 = vpack.c.b16 %v2010, %v2009
      %v2112 = vpack.c.b16 %v2012, %v2011
      %v2113 = vpack.c.b16 %v2014, %v2013
      %v2114 = vpack.c.b16 %v2016, %v2015
      %v2115 = vpack.c.b16 %v2018, %v2017
      %v2116 = vpack.c.b16 %v2020, %v2019
      %2213 = vmatprep.subr.bf16.mxu0 0
      %2214 = vmatpush1.bf16.msra.mxu0 %v2021
      %2215 = vmatprep.subr.bf16.mxu0 0
      %2216 = vmatpush1.bf16.msra.mxu0 %v2022
      %2217 = vmatprep.subr.bf16.mxu0 0
      %2218 = vmatpush1.bf16.msra.mxu0 %v2023
      %2219 = vmatprep.subr.bf16.mxu0 0
      %2220 = vmatpush1.bf16.msra.mxu0 %v2024
      %2221 = vmatprep.subr.bf16.mxu0 0
      %2222 = vmatpush1.bf16.msra.mxu0 %v2025
      %2223 = vmatprep.subr.bf16.mxu0 0
      %2224 = vmatpush1.bf16.msra.mxu0 %v2026
      %2225 = vmatprep.subr.bf16.mxu0 0
      %2226 = vmatpush1.bf16.msra.mxu0 %v2027
      %2227 = vmatprep.subr.bf16.mxu0 0
      %2228 = vmatpush1.bf16.msra.mxu0 %v2028
      %2229 = vmatprep.subr.bf16.mxu0 0
      %2230 = vmatpush1.bf16.msra.mxu0 %v2029
      %2231 = vmatprep.subr.bf16.mxu0 0
      %2232 = vmatpush1.bf16.msra.mxu0 %v2030
      %2233 = vmatprep.subr.bf16.mxu0 0
      %2234 = vmatpush1.bf16.msra.mxu0 %v2031
      %2235 = vmatprep.subr.bf16.mxu0 0
      %2236 = vmatpush1.bf16.msra.mxu0 %v2032
      %2237 = vmatprep.subr.bf16.mxu0 0
      %2238 = vmatpush1.bf16.msra.mxu0 %v2033
      %2239 = vmatprep.subr.bf16.mxu0 0
      %2240 = vmatpush1.bf16.msra.mxu0 %v2034
      %2241 = vmatprep.subr.bf16.mxu0 0
      %2242 = vmatpush1.bf16.msra.mxu0 %v2035
      %2243 = vmatprep.subr.bf16.mxu0 0
      %2244 = vmatpush1.bf16.msra.mxu0 %v2036
      %2245 = vmatprep.mubr.bf16.mxu0 %v1254
      %2246 = vmatmul.mubr.bf16.gmra.mrb[0].mxu0 %v1253
      %v2247 = vpop.f32.mrb[0].mxu0
      %v2248 = vadd.f32 %v675, %v2247
      %v2249 = vpop.f32.mrb[0].mxu0
      %v2250 = vpop.f32.mrb[0].mxu0
      %v2251 = vadd.f32 %v675, %v2250
      %v2252 = vpop.f32.mrb[0].mxu0
      %2253 = vmatprep.mubr.bf16.mxu0 %v1266
      %2254 = vmatmul.mubr.bf16.gmra.mrb[0].mxu0 %v1265
      %v2255 = vpop.f32.mrb[0].mxu0
      %v2256 = vadd.f32 %v675, %v2255
      %v2257 = vpop.f32.mrb[0].mxu0
      %v2258 = vpop.f32.mrb[0].mxu0
      %v2259 = vadd.f32 %v675, %v2258
      %v2260 = vpop.f32.mrb[0].mxu0
      %2261 = vmatprep.mubr.bf16.mxu0 %v1278
      %2262 = vmatmul.mubr.bf16.gmra.mrb[0].mxu0 %v1277
      %v2263 = vpop.f32.mrb[0].mxu0
      %v2264 = vadd.f32 %v675, %v2263
      %v2265 = vpop.f32.mrb[0].mxu0
      %v2266 = vpop.f32.mrb[0].mxu0
      %v2267 = vadd.f32 %v675, %v2266
      %v2268 = vpop.f32.mrb[0].mxu0
      %2269 = vmatprep.mubr.bf16.mxu0 %v1290
      %2270 = vmatmul.mubr.bf16.gmra.mrb[0].mxu0 %v1289
      %v2271 = vpop.f32.mrb[0].mxu0
      %v2272 = vadd.f32 %v675, %v2271
      %v2273 = vpop.f32.mrb[0].mxu0
      %v2274 = vpop.f32.mrb[0].mxu0
      %v2275 = vadd.f32 %v675, %v2274
      %v2276 = vpop.f32.mrb[0].mxu0
      %2277 = vmatprep.mubr.bf16.mxu0 %v1302
      %2278 = vmatmul.mubr.bf16.gmra.mrb[0].mxu0 %v1301
      %v2279 = vpop.f32.mrb[0].mxu0
      %v2280 = vadd.f32 %v675, %v2279
      %v2281 = vpop.f32.mrb[0].mxu0
      %v2282 = vpop.f32.mrb[0].mxu0
      %v2283 = vadd.f32 %v675, %v2282
      %v2284 = vpop.f32.mrb[0].mxu0
      %2285 = vmatprep.mubr.bf16.mxu0 %v1314
      %2286 = vmatmul.mubr.bf16.gmra.mrb[0].mxu0 %v1313
      %v2287 = vpop.f32.mrb[0].mxu0
      %v2288 = vadd.f32 %v675, %v2287
      %v2289 = vpop.f32.mrb[0].mxu0
      %v2290 = vpop.f32.mrb[0].mxu0
      %v2291 = vadd.f32 %v675, %v2290
      %v2292 = vpop.f32.mrb[0].mxu0
      %2293 = vmatprep.mubr.bf16.mxu0 %v1326
      %2294 = vmatmul.mubr.bf16.gmra.mrb[0].mxu0 %v1325
      %v2295 = vpop.f32.mrb[0].mxu0
      %v2296 = vadd.f32 %v675, %v2295
      %v2297 = vpop.f32.mrb[0].mxu0
      %v2298 = vpop.f32.mrb[0].mxu0
      %v2299 = vadd.f32 %v675, %v2298
      %v2300 = vpop.f32.mrb[0].mxu0
      %2301 = vmatprep.mubr.bf16.mxu0 %v1338
      %2302 = vmatmul.mubr.bf16.gmra.mrb[0].mxu0 %v1337
      %v2303 = vpop.f32.mrb[0].mxu0
      %v2304 = vadd.f32 %v675, %v2303
      %v2305 = vpop.f32.mrb[0].mxu0
      %v2306 = vpop.f32.mrb[0].mxu0
      %v2307 = vadd.f32 %v675, %v2306
      %v2308 = vpop.f32.mrb[0].mxu0
      %2309 = vmatprep.mubr.bf16.mxu0 %v1350
      %2310 = vmatmul.mubr.bf16.gmra.mrb[0].mxu0 %v1349
      %v2311 = vpop.f32.mrb[0].mxu0
      %v2312 = vadd.f32 %v675, %v2311
      %v2313 = vpop.f32.mrb[0].mxu0
      %v2314 = vpop.f32.mrb[0].mxu0
      %v2315 = vadd.f32 %v675, %v2314
      %v2316 = vpop.f32.mrb[0].mxu0
      %2317 = vmatprep.mubr.bf16.mxu0 %v1362
      %2318 = vmatmul.mubr.bf16.gmra.mrb[0].mxu0 %v1361
      %v2319 = vpop.f32.mrb[0].mxu0
      %v2320 = vadd.f32 %v675, %v2319
      %v2321 = vpop.f32.mrb[0].mxu0
      %v2322 = vpop.f32.mrb[0].mxu0
      %v2323 = vadd.f32 %v675, %v2322
      %v2324 = vpop.f32.mrb[0].mxu0
      %2325 = vmatprep.mubr.bf16.mxu0 %v1374
      %2326 = vmatmul.mubr.bf16.gmra.mrb[0].mxu0 %v1373
      %v2327 = vpop.f32.mrb[0].mxu0
      %v2328 = vadd.f32 %v675, %v2327
      %v2329 = vpop.f32.mrb[0].mxu0
      %v2330 = vpop.f32.mrb[0].mxu0
      %v2331 = vadd.f32 %v675, %v2330
      %v2332 = vpop.f32.mrb[0].mxu0
      %2333 = vmatprep.mubr.bf16.mxu0 %v1386
      %2334 = vmatmul.mubr.bf16.gmra.mrb[0].mxu0 %v1385
      %v2335 = vpop.f32.mrb[0].mxu0
      %v2336 = vadd.f32 %v675, %v2335
      %v2337 = vpop.f32.mrb[0].mxu0
      %v2338 = vpop.f32.mrb[0].mxu0
      %v2339 = vadd.f32 %v675, %v2338
      %v2340 = vpop.f32.mrb[0].mxu0
      %2341 = vmatprep.mubr.bf16.mxu0 %v1398
      %2342 = vmatmul.mubr.bf16.gmra.mrb[0].mxu0 %v1397
      %v2343 = vpop.f32.mrb[0].mxu0
      %v2344 = vadd.f32 %v675, %v2343
      %v2345 = vpop.f32.mrb[0].mxu0
      %v2346 = vpop.f32.mrb[0].mxu0
      %v2347 = vadd.f32 %v675, %v2346
      %v2348 = vpop.f32.mrb[0].mxu0
      %2349 = vmatprep.mubr.bf16.mxu0 %v1410
      %2350 = vmatmul.mubr.bf16.gmra.mrb[0].mxu0 %v1409
      %v2351 = vpop.f32.mrb[0].mxu0
      %v2352 = vadd.f32 %v675, %v2351
      %v2353 = vpop.f32.mrb[0].mxu0
      %v2354 = vpop.f32.mrb[0].mxu0
      %v2355 = vadd.f32 %v675, %v2354
      %v2356 = vpop.f32.mrb[0].mxu0
      %2357 = vmatprep.mubr.bf16.mxu0 %v1422
      %2358 = vmatmul.mubr.bf16.gmra.mrb[0].mxu0 %v1421
      %v2359 = vpop.f32.mrb[0].mxu0
      %v2360 = vadd.f32 %v675, %v2359
      %v2361 = vpop.f32.mrb[0].mxu0
      %v2362 = vpop.f32.mrb[0].mxu0
      %v2363 = vadd.f32 %v675, %v2362
      %v2364 = vpop.f32.mrb[0].mxu0
      %2365 = vmatprep.mubr.bf16.mxu0 %v1434
      %2366 = vmatmul.mubr.bf16.gmra.mrb[0].mxu0 %v1433
      %v2367 = vpop.f32.mrb[0].mxu0
      %v2368 = vadd.f32 %v675, %v2367
      %v2369 = vpop.f32.mrb[0].mxu0
      %v2370 = vpop.f32.mrb[0].mxu0
      %v2371 = vadd.f32 %v675, %v2370
      %v2372 = vpop.f32.mrb[0].mxu0
      %2373 = vdwg.mxu0
      %2374 = vmatprep.subr.bf16.mxu0 0
      %2375 = vmatpush1.bf16.msra.mxu0 %v2037
      %2376 = vmatprep.subr.bf16.mxu0 0
      %2377 = vmatpush1.bf16.msra.mxu0 %v2038
      %2378 = vmatprep.subr.bf16.mxu0 0
      %2379 = vmatpush1.bf16.msra.mxu0 %v2039
      %2380 = vmatprep.subr.bf16.mxu0 0
      %2381 = vmatpush1.bf16.msra.mxu0 %v2040
      %2382 = vmatprep.subr.bf16.mxu0 0
      %2383 = vmatpush1.bf16.msra.mxu0 %v2041
      %2384 = vmatprep.subr.bf16.mxu0 0
      %2385 = vmatpush1.bf16.msra.mxu0 %v2042
      %2386 = vmatprep.subr.bf16.mxu0 0
      %2387 = vmatpush1.bf16.msra.mxu0 %v2043
      %2388 = vmatprep.subr.bf16.mxu0 0
      %2389 = vmatpush1.bf16.msra.mxu0 %v2044
      %2390 = vmatprep.subr.bf16.mxu0 0
      %2391 = vmatpush1.bf16.msra.mxu0 %v2045
      %2392 = vmatprep.subr.bf16.mxu0 0
      %2393 = vmatpush1.bf16.msra.mxu0 %v2046
      %2394 = vmatprep.subr.bf16.mxu0 0
      %2395 = vmatpush1.bf16.msra.mxu0 %v2047
      %2396 = vmatprep.subr.bf16.mxu0 0
      %2397 = vmatpush1.bf16.msra.mxu0 %v2048
      %2398 = vmatprep.subr.bf16.mxu0 0
      %2399 = vmatpush1.bf16.msra.mxu0 %v2049
      %2400 = vmatprep.subr.bf16.mxu0 0
      %2401 = vmatpush1.bf16.msra.mxu0 %v2050
      %2402 = vmatprep.subr.bf16.mxu0 0
      %2403 = vmatpush1.bf16.msra.mxu0 %v2051
      %2404 = vmatprep.subr.bf16.mxu0 0
      %2405 = vmatpush1.bf16.msra.mxu0 %v2052
      %2406 = vmatprep.mubr.bf16.mxu0 %v1256
      %2407 = vmatmul.mubr.bf16.gmra.mrb[0].mxu0 %v1255
      %v2408 = vpop.f32.mrb[0].mxu0
      %v2409 = vadd.f32 %v2248, %v2408
      %v2410 = vpop.f32.mrb[0].mxu0
      %v2411 = vpop.f32.mrb[0].mxu0
      %v2412 = vadd.f32 %v2251, %v2411
      %v2413 = vpop.f32.mrb[0].mxu0
      %2414 = vmatprep.mubr.bf16.mxu0 %v1268
      %2415 = vmatmul.mubr.bf16.gmra.mrb[0].mxu0 %v1267
      %v2416 = vpop.f32.mrb[0].mxu0
      %v2417 = vadd.f32 %v2256, %v2416
      %v2418 = vpop.f32.mrb[0].mxu0
      %v2419 = vpop.f32.mrb[0].mxu0
      %v2420 = vadd.f32 %v2259, %v2419
      %v2421 = vpop.f32.mrb[0].mxu0
      %2422 = vmatprep.mubr.bf16.mxu0 %v1280
      %2423 = vmatmul.mubr.bf16.gmra.mrb[0].mxu0 %v1279
      %v2424 = vpop.f32.mrb[0].mxu0
      %v2425 = vadd.f32 %v2264, %v2424
      %v2426 = vpop.f32.mrb[0].mxu0
      %v2427 = vpop.f32.mrb[0].mxu0
      %v2428 = vadd.f32 %v2267, %v2427
      %v2429 = vpop.f32.mrb[0].mxu0
      %2430 = vmatprep.mubr.bf16.mxu0 %v1292
      %2431 = vmatmul.mubr.bf16.gmra.mrb[0].mxu0 %v1291
      %v2432 = vpop.f32.mrb[0].mxu0
      %v2433 = vadd.f32 %v2272, %v2432
      %v2434 = vpop.f32.mrb[0].mxu0
      %v2435 = vpop.f32.mrb[0].mxu0
      %v2436 = vadd.f32 %v2275, %v2435
      %v2437 = vpop.f32.mrb[0].mxu0
      %2438 = vmatprep.mubr.bf16.mxu0 %v1304
      %2439 = vmatmul.mubr.bf16.gmra.mrb[0].mxu0 %v1303
      %v2440 = vpop.f32.mrb[0].mxu0
      %v2441 = vadd.f32 %v2280, %v2440
      %v2442 = vpop.f32.mrb[0].mxu0
      %v2443 = vpop.f32.mrb[0].mxu0
      %v2444 = vadd.f32 %v2283, %v2443
      %v2445 = vpop.f32.mrb[0].mxu0
      %2446 = vmatprep.mubr.bf16.mxu0 %v1316
      %2447 = vmatmul.mubr.bf16.gmra.mrb[0].mxu0 %v1315
      %v2448 = vpop.f32.mrb[0].mxu0
      %v2449 = vadd.f32 %v2288, %v2448
      %v2450 = vpop.f32.mrb[0].mxu0
      %v2451 = vpop.f32.mrb[0].mxu0
      %v2452 = vadd.f32 %v2291, %v2451
      %v2453 = vpop.f32.mrb[0].mxu0
      %2454 = vmatprep.mubr.bf16.mxu0 %v1328
      %2455 = vmatmul.mubr.bf16.gmra.mrb[0].mxu0 %v1327
      %v2456 = vpop.f32.mrb[0].mxu0
      %v2457 = vadd.f32 %v2296, %v2456
      %v2458 = vpop.f32.mrb[0].mxu0
      %v2459 = vpop.f32.mrb[0].mxu0
      %v2460 = vadd.f32 %v2299, %v2459
      %v2461 = vpop.f32.mrb[0].mxu0
      %2462 = vmatprep.mubr.bf16.mxu0 %v1340
      %2463 = vmatmul.mubr.bf16.gmra.mrb[0].mxu0 %v1339
      %v2464 = vpop.f32.mrb[0].mxu0
      %v2465 = vadd.f32 %v2304, %v2464
      %v2466 = vpop.f32.mrb[0].mxu0
      %v2467 = vpop.f32.mrb[0].mxu0
      %v2468 = vadd.f32 %v2307, %v2467
      %v2469 = vpop.f32.mrb[0].mxu0
      %2470 = vmatprep.mubr.bf16.mxu0 %v1352
      %2471 = vmatmul.mubr.bf16.gmra.mrb[0].mxu0 %v1351
      %v2472 = vpop.f32.mrb[0].mxu0
      %v2473 = vadd.f32 %v2312, %v2472
      %v2474 = vpop.f32.mrb[0].mxu0
      %v2475 = vpop.f32.mrb[0].mxu0
      %v2476 = vadd.f32 %v2315, %v2475
      %v2477 = vpop.f32.mrb[0].mxu0
      %2478 = vmatprep.mubr.bf16.mxu0 %v1364
      %2479 = vmatmul.mubr.bf16.gmra.mrb[0].mxu0 %v1363
      %v2480 = vpop.f32.mrb[0].mxu0
      %v2481 = vadd.f32 %v2320, %v2480
      %v2482 = vpop.f32.mrb[0].mxu0
      %v2483 = vpop.f32.mrb[0].mxu0
      %v2484 = vadd.f32 %v2323, %v2483
      %v2485 = vpop.f32.mrb[0].mxu0
      %2486 = vmatprep.mubr.bf16.mxu0 %v1376
      %2487 = vmatmul.mubr.bf16.gmra.mrb[0].mxu0 %v1375
      %v2488 = vpop.f32.mrb[0].mxu0
      %v2489 = vadd.f32 %v2328, %v2488
      %v2490 = vpop.f32.mrb[0].mxu0
      %v2491 = vpop.f32.mrb[0].mxu0
      %v2492 = vadd.f32 %v2331, %v2491
      %v2493 = vpop.f32.mrb[0].mxu0
      %2494 = vmatprep.mubr.bf16.mxu0 %v1388
      %2495 = vmatmul.mubr.bf16.gmra.mrb[0].mxu0 %v1387
      %v2496 = vpop.f32.mrb[0].mxu0
      %v2497 = vadd.f32 %v2336, %v2496
      %v2498 = vpop.f32.mrb[0].mxu0
      %v2499 = vpop.f32.mrb[0].mxu0
      %v2500 = vadd.f32 %v2339, %v2499
      %v2501 = vpop.f32.mrb[0].mxu0
      %2502 = vmatprep.mubr.bf16.mxu0 %v1400
      %2503 = vmatmul.mubr.bf16.gmra.mrb[0].mxu0 %v1399
      %v2504 = vpop.f32.mrb[0].mxu0
      %v2505 = vadd.f32 %v2344, %v2504
      %v2506 = vpop.f32.mrb[0].mxu0
      %v2507 = vpop.f32.mrb[0].mxu0
      %v2508 = vadd.f32 %v2347, %v2507
      %v2509 = vpop.f32.mrb[0].mxu0
      %2510 = vmatprep.mubr.bf16.mxu0 %v1412
      %2511 = vmatmul.mubr.bf16.gmra.mrb[0].mxu0 %v1411
      %v2512 = vpop.f32.mrb[0].mxu0
      %v2513 = vadd.f32 %v2352, %v2512
      %v2514 = vpop.f32.mrb[0].mxu0
      %v2515 = vpop.f32.mrb[0].mxu0
      %v2516 = vadd.f32 %v2355, %v2515
      %v2517 = vpop.f32.mrb[0].mxu0
      %2518 = vmatprep.mubr.bf16.mxu0 %v1424
      %2519 = vmatmul.mubr.bf16.gmra.mrb[0].mxu0 %v1423
      %v2520 = vpop.f32.mrb[0].mxu0
      %v2521 = vadd.f32 %v2360, %v2520
      %v2522 = vpop.f32.mrb[0].mxu0
      %v2523 = vpop.f32.mrb[0].mxu0
      %v2524 = vadd.f32 %v2363, %v2523
      %v2525 = vpop.f32.mrb[0].mxu0
      %2526 = vmatprep.mubr.bf16.mxu0 %v1436
      %2527 = vmatmul.mubr.bf16.gmra.mrb[0].mxu0 %v1435
      %v2528 = vpop.f32.mrb[0].mxu0
      %v2529 = vadd.f32 %v2368, %v2528
      %v2530 = vpop.f32.mrb[0].mxu0
      %v2531 = vpop.f32.mrb[0].mxu0
      %v2532 = vadd.f32 %v2371, %v2531
      %v2533 = vpop.f32.mrb[0].mxu0
      %2534 = vdwg.mxu0
      %2535 = vmatprep.subr.bf16.mxu0 0
      %2536 = vmatpush1.bf16.msra.mxu0 %v2053
      %2537 = vmatprep.subr.bf16.mxu0 0
      %2538 = vmatpush1.bf16.msra.mxu0 %v2054
      %2539 = vmatprep.subr.bf16.mxu0 0
      %2540 = vmatpush1.bf16.msra.mxu0 %v2055
      %2541 = vmatprep.subr.bf16.mxu0 0
      %2542 = vmatpush1.bf16.msra.mxu0 %v2056
      %2543 = vmatprep.subr.bf16.mxu0 0
      %2544 = vmatpush1.bf16.msra.mxu0 %v2057
      %2545 = vmatprep.subr.bf16.mxu0 0
      %2546 = vmatpush1.bf16.msra.mxu0 %v2058
      %2547 = vmatprep.subr.bf16.mxu0 0
      %2548 = vmatpush1.bf16.msra.mxu0 %v2059
      %2549 = vmatprep.subr.bf16.mxu0 0
      %2550 = vmatpush1.bf16.msra.mxu0 %v2060
      %2551 = vmatprep.subr.bf16.mxu0 0
      %2552 = vmatpush1.bf16.msra.mxu0 %v2061
      %2553 = vmatprep.subr.bf16.mxu0 0
      %2554 = vmatpush1.bf16.msra.mxu0 %v2062
      %2555 = vmatprep.subr.bf16.mxu0 0
      %2556 = vmatpush1.bf16.msra.mxu0 %v2063
      %2557 = vmatprep.subr.bf16.mxu0 0
      %2558 = vmatpush1.bf16.msra.mxu0 %v2064
      %2559 = vmatprep.subr.bf16.mxu0 0
      %2560 = vmatpush1.bf16.msra.mxu0 %v2065
      %2561 = vmatprep.subr.bf16.mxu0 0
      %2562 = vmatpush1.bf16.msra.mxu0 %v2066
      %2563 = vmatprep.subr.bf16.mxu0 0
      %2564 = vmatpush1.bf16.msra.mxu0 %v2067
      %2565 = vmatprep.subr.bf16.mxu0 0
      %2566 = vmatpush1.bf16.msra.mxu0 %v2068
      %2567 = vmatprep.mubr.bf16.mxu0 %v1258
      %2568 = vmatmul.mubr.bf16.gmra.mrb[0].mxu0 %v1257
      %v2569 = vpop.f32.mrb[0].mxu0
      %v2570 = vadd.f32 %v2409, %v2569
      %v2571 = vpop.f32.mrb[0].mxu0
      %v2572 = vpop.f32.mrb[0].mxu0
      %v2573 = vadd.f32 %v2412, %v2572
      %v2574 = vpop.f32.mrb[0].mxu0
      %2575 = vmatprep.mubr.bf16.mxu0 %v1270
      %2576 = vmatmul.mubr.bf16.gmra.mrb[0].mxu0 %v1269
      %v2577 = vpop.f32.mrb[0].mxu0
      %v2578 = vadd.f32 %v2417, %v2577
      %v2579 = vpop.f32.mrb[0].mxu0
      %v2580 = vpop.f32.mrb[0].mxu0
      %v2581 = vadd.f32 %v2420, %v2580
      %v2582 = vpop.f32.mrb[0].mxu0
      %2583 = vmatprep.mubr.bf16.mxu0 %v1282
      %2584 = vmatmul.mubr.bf16.gmra.mrb[0].mxu0 %v1281
      %v2585 = vpop.f32.mrb[0].mxu0
      %v2586 = vadd.f32 %v2425, %v2585
      %v2587 = vpop.f32.mrb[0].mxu0
      %v2588 = vpop.f32.mrb[0].mxu0
      %v2589 = vadd.f32 %v2428, %v2588
      %v2590 = vpop.f32.mrb[0].mxu0
      %2591 = vmatprep.mubr.bf16.mxu0 %v1294
      %2592 = vmatmul.mubr.bf16.gmra.mrb[0].mxu0 %v1293
      %v2593 = vpop.f32.mrb[0].mxu0
      %v2594 = vadd.f32 %v2433, %v2593
      %v2595 = vpop.f32.mrb[0].mxu0
      %v2596 = vpop.f32.mrb[0].mxu0
      %v2597 = vadd.f32 %v2436, %v2596
      %v2598 = vpop.f32.mrb[0].mxu0
      %2599 = vmatprep.mubr.bf16.mxu0 %v1306
      %2600 = vmatmul.mubr.bf16.gmra.mrb[0].mxu0 %v1305
      %v2601 = vpop.f32.mrb[0].mxu0
      %v2602 = vadd.f32 %v2441, %v2601
      %v2603 = vpop.f32.mrb[0].mxu0
      %v2604 = vpop.f32.mrb[0].mxu0
      %v2605 = vadd.f32 %v2444, %v2604
      %v2606 = vpop.f32.mrb[0].mxu0
      %2607 = vmatprep.mubr.bf16.mxu0 %v1318
      %2608 = vmatmul.mubr.bf16.gmra.mrb[0].mxu0 %v1317
      %v2609 = vpop.f32.mrb[0].mxu0
      %v2610 = vadd.f32 %v2449, %v2609
      %v2611 = vpop.f32.mrb[0].mxu0
      %v2612 = vpop.f32.mrb[0].mxu0
      %v2613 = vadd.f32 %v2452, %v2612
      %v2614 = vpop.f32.mrb[0].mxu0
      %2615 = vmatprep.mubr.bf16.mxu0 %v1330
      %2616 = vmatmul.mubr.bf16.gmra.mrb[0].mxu0 %v1329
      %v2617 = vpop.f32.mrb[0].mxu0
      %v2618 = vadd.f32 %v2457, %v2617
      %v2619 = vpop.f32.mrb[0].mxu0
      %v2620 = vpop.f32.mrb[0].mxu0
      %v2621 = vadd.f32 %v2460, %v2620
      %v2622 = vpop.f32.mrb[0].mxu0
      %2623 = vmatprep.mubr.bf16.mxu0 %v1342
      %2624 = vmatmul.mubr.bf16.gmra.mrb[0].mxu0 %v1341
      %v2625 = vpop.f32.mrb[0].mxu0
      %v2626 = vadd.f32 %v2465, %v2625
      %v2627 = vpop.f32.mrb[0].mxu0
      %v2628 = vpop.f32.mrb[0].mxu0
      %v2629 = vadd.f32 %v2468, %v2628
      %v2630 = vpop.f32.mrb[0].mxu0
      %2631 = vmatprep.mubr.bf16.mxu0 %v1354
      %2632 = vmatmul.mubr.bf16.gmra.mrb[0].mxu0 %v1353
      %v2633 = vpop.f32.mrb[0].mxu0
      %v2634 = vadd.f32 %v2473, %v2633
      %v2635 = vpop.f32.mrb[0].mxu0
      %v2636 = vpop.f32.mrb[0].mxu0
      %v2637 = vadd.f32 %v2476, %v2636
      %v2638 = vpop.f32.mrb[0].mxu0
      %2639 = vmatprep.mubr.bf16.mxu0 %v1366
      %2640 = vmatmul.mubr.bf16.gmra.mrb[0].mxu0 %v1365
      %v2641 = vpop.f32.mrb[0].mxu0
      %v2642 = vadd.f32 %v2481, %v2641
      %v2643 = vpop.f32.mrb[0].mxu0
      %v2644 = vpop.f32.mrb[0].mxu0
      %v2645 = vadd.f32 %v2484, %v2644
      %v2646 = vpop.f32.mrb[0].mxu0
      %2647 = vmatprep.mubr.bf16.mxu0 %v1378
      %2648 = vmatmul.mubr.bf16.gmra.mrb[0].mxu0 %v1377
      %v2649 = vpop.f32.mrb[0].mxu0
      %v2650 = vadd.f32 %v2489, %v2649
      %v2651 = vpop.f32.mrb[0].mxu0
      %v2652 = vpop.f32.mrb[0].mxu0
      %v2653 = vadd.f32 %v2492, %v2652
      %v2654 = vpop.f32.mrb[0].mxu0
      %2655 = vmatprep.mubr.bf16.mxu0 %v1390
      %2656 = vmatmul.mubr.bf16.gmra.mrb[0].mxu0 %v1389
      %v2657 = vpop.f32.mrb[0].mxu0
      %v2658 = vadd.f32 %v2497, %v2657
      %v2659 = vpop.f32.mrb[0].mxu0
      %v2660 = vpop.f32.mrb[0].mxu0
      %v2661 = vadd.f32 %v2500, %v2660
      %v2662 = vpop.f32.mrb[0].mxu0
      %2663 = vmatprep.mubr.bf16.mxu0 %v1402
      %2664 = vmatmul.mubr.bf16.gmra.mrb[0].mxu0 %v1401
      %v2665 = vpop.f32.mrb[0].mxu0
      %v2666 = vadd.f32 %v2505, %v2665
      %v2667 = vpop.f32.mrb[0].mxu0
      %v2668 = vpop.f32.mrb[0].mxu0
      %v2669 = vadd.f32 %v2508, %v2668
      %v2670 = vpop.f32.mrb[0].mxu0
      %2671 = vmatprep.mubr.bf16.mxu0 %v1414
      %2672 = vmatmul.mubr.bf16.gmra.mrb[0].mxu0 %v1413
      %v2673 = vpop.f32.mrb[0].mxu0
      %v2674 = vadd.f32 %v2513, %v2673
      %v2675 = vpop.f32.mrb[0].mxu0
      %v2676 = vpop.f32.mrb[0].mxu0
      %v2677 = vadd.f32 %v2516, %v2676
      %v2678 = vpop.f32.mrb[0].mxu0
      %2679 = vmatprep.mubr.bf16.mxu0 %v1426
      %2680 = vmatmul.mubr.bf16.gmra.mrb[0].mxu0 %v1425
      %v2681 = vpop.f32.mrb[0].mxu0
      %v2682 = vadd.f32 %v2521, %v2681
      %v2683 = vpop.f32.mrb[0].mxu0
      %v2684 = vpop.f32.mrb[0].mxu0
      %v2685 = vadd.f32 %v2524, %v2684
      %v2686 = vpop.f32.mrb[0].mxu0
      %2687 = vmatprep.mubr.bf16.mxu0 %v1438
      %2688 = vmatmul.mubr.bf16.gmra.mrb[0].mxu0 %v1437
      %v2689 = vpop.f32.mrb[0].mxu0
      %v2690 = vadd.f32 %v2529, %v2689
      %v2691 = vpop.f32.mrb[0].mxu0
      %v2692 = vpop.f32.mrb[0].mxu0
      %v2693 = vadd.f32 %v2532, %v2692
      %v2694 = vpop.f32.mrb[0].mxu0
      %2695 = vdwg.mxu0
      %2696 = vmatprep.subr.bf16.mxu0 0
      %2697 = vmatpush1.bf16.msra.mxu0 %v2069
      %2698 = vmatprep.subr.bf16.mxu0 0
      %2699 = vmatpush1.bf16.msra.mxu0 %v2070
      %2700 = vmatprep.subr.bf16.mxu0 0
      %2701 = vmatpush1.bf16.msra.mxu0 %v2071
      %2702 = vmatprep.subr.bf16.mxu0 0
      %2703 = vmatpush1.bf16.msra.mxu0 %v2072
      %2704 = vmatprep.subr.bf16.mxu0 0
      %2705 = vmatpush1.bf16.msra.mxu0 %v2073
      %2706 = vmatprep.subr.bf16.mxu0 0
      %2707 = vmatpush1.bf16.msra.mxu0 %v2074
      %2708 = vmatprep.subr.bf16.mxu0 0
      %2709 = vmatpush1.bf16.msra.mxu0 %v2075
      %2710 = vmatprep.subr.bf16.mxu0 0
      %2711 = vmatpush1.bf16.msra.mxu0 %v2076
      %2712 = vmatprep.subr.bf16.mxu0 0
      %2713 = vmatpush1.bf16.msra.mxu0 %v2077
      %2714 = vmatprep.subr.bf16.mxu0 0
      %2715 = vmatpush1.bf16.msra.mxu0 %v2078
      %2716 = vmatprep.subr.bf16.mxu0 0
      %2717 = vmatpush1.bf16.msra.mxu0 %v2079
      %2718 = vmatprep.subr.bf16.mxu0 0
      %2719 = vmatpush1.bf16.msra.mxu0 %v2080
      %2720 = vmatprep.subr.bf16.mxu0 0
      %2721 = vmatpush1.bf16.msra.mxu0 %v2081
      %2722 = vmatprep.subr.bf16.mxu0 0
      %2723 = vmatpush1.bf16.msra.mxu0 %v2082
      %2724 = vmatprep.subr.bf16.mxu0 0
      %2725 = vmatpush1.bf16.msra.mxu0 %v2083
      %2726 = vmatprep.subr.bf16.mxu0 0
      %2727 = vmatpush1.bf16.msra.mxu0 %v2084
      %2728 = vmatprep.mubr.bf16.mxu0 %v1260
      %2729 = vmatmul.mubr.bf16.gmra.mrb[0].mxu0 %v1259
      %v2730 = vpop.f32.mrb[0].mxu0
      %v2731 = vadd.f32 %v2570, %v2730
      %v2732 = vpop.f32.mrb[0].mxu0
      %v2733 = vpop.f32.mrb[0].mxu0
      %v2734 = vadd.f32 %v2573, %v2733
      %v2735 = vpop.f32.mrb[0].mxu0
      %2736 = vmatprep.mubr.bf16.mxu0 %v1272
      %2737 = vmatmul.mubr.bf16.gmra.mrb[0].mxu0 %v1271
      %v2738 = vpop.f32.mrb[0].mxu0
      %v2739 = vadd.f32 %v2578, %v2738
      %v2740 = vpop.f32.mrb[0].mxu0
      %v2741 = vpop.f32.mrb[0].mxu0
      %v2742 = vadd.f32 %v2581, %v2741
      %v2743 = vpop.f32.mrb[0].mxu0
      %2744 = vmatprep.mubr.bf16.mxu0 %v1284
      %2745 = vmatmul.mubr.bf16.gmra.mrb[0].mxu0 %v1283
      %v2746 = vpop.f32.mrb[0].mxu0
      %v2747 = vadd.f32 %v2586, %v2746
      %v2748 = vpop.f32.mrb[0].mxu0
      %v2749 = vpop.f32.mrb[0].mxu0
      %v2750 = vadd.f32 %v2589, %v2749
      %v2751 = vpop.f32.mrb[0].mxu0
      %2752 = vmatprep.mubr.bf16.mxu0 %v1296
      %2753 = vmatmul.mubr.bf16.gmra.mrb[0].mxu0 %v1295
      %v2754 = vpop.f32.mrb[0].mxu0
      %v2755 = vadd.f32 %v2594, %v2754
      %v2756 = vpop.f32.mrb[0].mxu0
      %v2757 = vpop.f32.mrb[0].mxu0
      %v2758 = vadd.f32 %v2597, %v2757
      %v2759 = vpop.f32.mrb[0].mxu0
      %2760 = vmatprep.mubr.bf16.mxu0 %v1308
      %2761 = vmatmul.mubr.bf16.gmra.mrb[0].mxu0 %v1307
      %v2762 = vpop.f32.mrb[0].mxu0
      %v2763 = vadd.f32 %v2602, %v2762
      %v2764 = vpop.f32.mrb[0].mxu0
      %v2765 = vpop.f32.mrb[0].mxu0
      %v2766 = vadd.f32 %v2605, %v2765
      %v2767 = vpop.f32.mrb[0].mxu0
      %2768 = vmatprep.mubr.bf16.mxu0 %v1320
      %2769 = vmatmul.mubr.bf16.gmra.mrb[0].mxu0 %v1319
      %v2770 = vpop.f32.mrb[0].mxu0
      %v2771 = vadd.f32 %v2610, %v2770
      %v2772 = vpop.f32.mrb[0].mxu0
      %v2773 = vpop.f32.mrb[0].mxu0
      %v2774 = vadd.f32 %v2613, %v2773
      %v2775 = vpop.f32.mrb[0].mxu0
      %2776 = vmatprep.mubr.bf16.mxu0 %v1332
      %2777 = vmatmul.mubr.bf16.gmra.mrb[0].mxu0 %v1331
      %v2778 = vpop.f32.mrb[0].mxu0
      %v2779 = vadd.f32 %v2618, %v2778
      %v2780 = vpop.f32.mrb[0].mxu0
      %v2781 = vpop.f32.mrb[0].mxu0
      %v2782 = vadd.f32 %v2621, %v2781
      %v2783 = vpop.f32.mrb[0].mxu0
      %2784 = vmatprep.mubr.bf16.mxu0 %v1344
      %2785 = vmatmul.mubr.bf16.gmra.mrb[0].mxu0 %v1343
      %v2786 = vpop.f32.mrb[0].mxu0
      %v2787 = vadd.f32 %v2626, %v2786
      %v2788 = vpop.f32.mrb[0].mxu0
      %v2789 = vpop.f32.mrb[0].mxu0
      %v2790 = vadd.f32 %v2629, %v2789
      %v2791 = vpop.f32.mrb[0].mxu0
      %2792 = vmatprep.mubr.bf16.mxu0 %v1356
      %2793 = vmatmul.mubr.bf16.gmra.mrb[0].mxu0 %v1355
      %v2794 = vpop.f32.mrb[0].mxu0
      %v2795 = vadd.f32 %v2634, %v2794
      %v2796 = vpop.f32.mrb[0].mxu0
      %v2797 = vpop.f32.mrb[0].mxu0
      %v2798 = vadd.f32 %v2637, %v2797
      %v2799 = vpop.f32.mrb[0].mxu0
      %2800 = vmatprep.mubr.bf16.mxu0 %v1368
      %2801 = vmatmul.mubr.bf16.gmra.mrb[0].mxu0 %v1367
      %v2802 = vpop.f32.mrb[0].mxu0
      %v2803 = vadd.f32 %v2642, %v2802
      %v2804 = vpop.f32.mrb[0].mxu0
      %v2805 = vpop.f32.mrb[0].mxu0
      %v2806 = vadd.f32 %v2645, %v2805
      %v2807 = vpop.f32.mrb[0].mxu0
      %2808 = vmatprep.mubr.bf16.mxu0 %v1380
      %2809 = vmatmul.mubr.bf16.gmra.mrb[0].mxu0 %v1379
      %v2810 = vpop.f32.mrb[0].mxu0
      %v2811 = vadd.f32 %v2650, %v2810
      %v2812 = vpop.f32.mrb[0].mxu0
      %v2813 = vpop.f32.mrb[0].mxu0
      %v2814 = vadd.f32 %v2653, %v2813
      %v2815 = vpop.f32.mrb[0].mxu0
      %2816 = vmatprep.mubr.bf16.mxu0 %v1392
      %2817 = vmatmul.mubr.bf16.gmra.mrb[0].mxu0 %v1391
      %v2818 = vpop.f32.mrb[0].mxu0
      %v2819 = vadd.f32 %v2658, %v2818
      %v2820 = vpop.f32.mrb[0].mxu0
      %v2821 = vpop.f32.mrb[0].mxu0
      %v2822 = vadd.f32 %v2661, %v2821
      %v2823 = vpop.f32.mrb[0].mxu0
      %2824 = vmatprep.mubr.bf16.mxu0 %v1404
      %2825 = vmatmul.mubr.bf16.gmra.mrb[0].mxu0 %v1403
      %v2826 = vpop.f32.mrb[0].mxu0
      %v2827 = vadd.f32 %v2666, %v2826
      %v2828 = vpop.f32.mrb[0].mxu0
      %v2829 = vpop.f32.mrb[0].mxu0
      %v2830 = vadd.f32 %v2669, %v2829
      %v2831 = vpop.f32.mrb[0].mxu0
      %2832 = vmatprep.mubr.bf16.mxu0 %v1416
      %2833 = vmatmul.mubr.bf16.gmra.mrb[0].mxu0 %v1415
      %v2834 = vpop.f32.mrb[0].mxu0
      %v2835 = vadd.f32 %v2674, %v2834
      %v2836 = vpop.f32.mrb[0].mxu0
      %v2837 = vpop.f32.mrb[0].mxu0
      %v2838 = vadd.f32 %v2677, %v2837
      %v2839 = vpop.f32.mrb[0].mxu0
      %2840 = vmatprep.mubr.bf16.mxu0 %v1428
      %2841 = vmatmul.mubr.bf16.gmra.mrb[0].mxu0 %v1427
      %v2842 = vpop.f32.mrb[0].mxu0
      %v2843 = vadd.f32 %v2682, %v2842
      %v2844 = vpop.f32.mrb[0].mxu0
      %v2845 = vpop.f32.mrb[0].mxu0
      %v2846 = vadd.f32 %v2685, %v2845
      %v2847 = vpop.f32.mrb[0].mxu0
      %2848 = vmatprep.mubr.bf16.mxu0 %v1440
      %2849 = vmatmul.mubr.bf16.gmra.mrb[0].mxu0 %v1439
      %v2850 = vpop.f32.mrb[0].mxu0
      %v2851 = vadd.f32 %v2690, %v2850
      %v2852 = vpop.f32.mrb[0].mxu0
      %v2853 = vpop.f32.mrb[0].mxu0
      %v2854 = vadd.f32 %v2693, %v2853
      %v2855 = vpop.f32.mrb[0].mxu0
      %2856 = vdwg.mxu0
      %2857 = vmatprep.subr.bf16.mxu0 0
      %2858 = vmatpush1.bf16.msra.mxu0 %v2085
      %2859 = vmatprep.subr.bf16.mxu0 0
      %2860 = vmatpush1.bf16.msra.mxu0 %v2086
      %2861 = vmatprep.subr.bf16.mxu0 0
      %2862 = vmatpush1.bf16.msra.mxu0 %v2087
      %2863 = vmatprep.subr.bf16.mxu0 0
      %2864 = vmatpush1.bf16.msra.mxu0 %v2088
      %2865 = vmatprep.subr.bf16.mxu0 0
      %2866 = vmatpush1.bf16.msra.mxu0 %v2089
      %2867 = vmatprep.subr.bf16.mxu0 0
      %2868 = vmatpush1.bf16.msra.mxu0 %v2090
      %2869 = vmatprep.subr.bf16.mxu0 0
      %2870 = vmatpush1.bf16.msra.mxu0 %v2091
      %2871 = vmatprep.subr.bf16.mxu0 0
      %2872 = vmatpush1.bf16.msra.mxu0 %v2092
      %2873 = vmatprep.subr.bf16.mxu0 0
      %2874 = vmatpush1.bf16.msra.mxu0 %v2093
      %2875 = vmatprep.subr.bf16.mxu0 0
      %2876 = vmatpush1.bf16.msra.mxu0 %v2094
      %2877 = vmatprep.subr.bf16.mxu0 0
      %2878 = vmatpush1.bf16.msra.mxu0 %v2095
      %2879 = vmatprep.subr.bf16.mxu0 0
      %2880 = vmatpush1.bf16.msra.mxu0 %v2096
      %2881 = vmatprep.subr.bf16.mxu0 0
      %2882 = vmatpush1.bf16.msra.mxu0 %v2097
      %2883 = vmatprep.subr.bf16.mxu0 0
      %2884 = vmatpush1.bf16.msra.mxu0 %v2098
      %2885 = vmatprep.subr.bf16.mxu0 0
      %2886 = vmatpush1.bf16.msra.mxu0 %v2099
      %2887 = vmatprep.subr.bf16.mxu0 0
      %2888 = vmatpush1.bf16.msra.mxu0 %v2100
      %2889 = vmatprep.mubr.bf16.mxu0 %v1262
      %2890 = vmatmul.mubr.bf16.gmra.mrb[0].mxu0 %v1261
      %v2891 = vpop.f32.mrb[0].mxu0
      %v2892 = vadd.f32 %v2731, %v2891
      %v2893 = vpop.f32.mrb[0].mxu0
      %v2894 = vpop.f32.mrb[0].mxu0
      %v2895 = vadd.f32 %v2734, %v2894
      %v2896 = vpop.f32.mrb[0].mxu0
      %2897 = vmatprep.mubr.bf16.mxu0 %v1274
      %2898 = vmatmul.mubr.bf16.gmra.mrb[0].mxu0 %v1273
      %v2899 = vpop.f32.mrb[0].mxu0
      %v2900 = vadd.f32 %v2739, %v2899
      %v2901 = vpop.f32.mrb[0].mxu0
      %v2902 = vpop.f32.mrb[0].mxu0
      %v2903 = vadd.f32 %v2742, %v2902
      %v2904 = vpop.f32.mrb[0].mxu0
      %2905 = vmatprep.mubr.bf16.mxu0 %v1286
      %2906 = vmatmul.mubr.bf16.gmra.mrb[0].mxu0 %v1285
      %v2907 = vpop.f32.mrb[0].mxu0
      %v2908 = vadd.f32 %v2747, %v2907
      %v2909 = vpop.f32.mrb[0].mxu0
      %v2910 = vpop.f32.mrb[0].mxu0
      %v2911 = vadd.f32 %v2750, %v2910
      %v2912 = vpop.f32.mrb[0].mxu0
      %2913 = vmatprep.mubr.bf16.mxu0 %v1298
      %2914 = vmatmul.mubr.bf16.gmra.mrb[0].mxu0 %v1297
      %v2915 = vpop.f32.mrb[0].mxu0
      %v2916 = vadd.f32 %v2755, %v2915
      %v2917 = vpop.f32.mrb[0].mxu0
      %v2918 = vpop.f32.mrb[0].mxu0
      %v2919 = vadd.f32 %v2758, %v2918
      %v2920 = vpop.f32.mrb[0].mxu0
      %2921 = vmatprep.mubr.bf16.mxu0 %v1310
      %2922 = vmatmul.mubr.bf16.gmra.mrb[0].mxu0 %v1309
      %v2923 = vpop.f32.mrb[0].mxu0
      %v2924 = vadd.f32 %v2763, %v2923
      %v2925 = vpop.f32.mrb[0].mxu0
      %v2926 = vpop.f32.mrb[0].mxu0
      %v2927 = vadd.f32 %v2766, %v2926
      %v2928 = vpop.f32.mrb[0].mxu0
      %2929 = vmatprep.mubr.bf16.mxu0 %v1322
      %2930 = vmatmul.mubr.bf16.gmra.mrb[0].mxu0 %v1321
      %v2931 = vpop.f32.mrb[0].mxu0
      %v2932 = vadd.f32 %v2771, %v2931
      %v2933 = vpop.f32.mrb[0].mxu0
      %v2934 = vpop.f32.mrb[0].mxu0
      %v2935 = vadd.f32 %v2774, %v2934
      %v2936 = vpop.f32.mrb[0].mxu0
      %2937 = vmatprep.mubr.bf16.mxu0 %v1334
      %2938 = vmatmul.mubr.bf16.gmra.mrb[0].mxu0 %v1333
      %v2939 = vpop.f32.mrb[0].mxu0
      %v2940 = vadd.f32 %v2779, %v2939
      %v2941 = vpop.f32.mrb[0].mxu0
      %v2942 = vpop.f32.mrb[0].mxu0
      %v2943 = vadd.f32 %v2782, %v2942
      %v2944 = vpop.f32.mrb[0].mxu0
      %2945 = vmatprep.mubr.bf16.mxu0 %v1346
      %2946 = vmatmul.mubr.bf16.gmra.mrb[0].mxu0 %v1345
      %v2947 = vpop.f32.mrb[0].mxu0
      %v2948 = vadd.f32 %v2787, %v2947
      %v2949 = vpop.f32.mrb[0].mxu0
      %v2950 = vpop.f32.mrb[0].mxu0
      %v2951 = vadd.f32 %v2790, %v2950
      %v2952 = vpop.f32.mrb[0].mxu0
      %2953 = vmatprep.mubr.bf16.mxu0 %v1358
      %2954 = vmatmul.mubr.bf16.gmra.mrb[0].mxu0 %v1357
      %v2955 = vpop.f32.mrb[0].mxu0
      %v2956 = vadd.f32 %v2795, %v2955
      %v2957 = vpop.f32.mrb[0].mxu0
      %v2958 = vpop.f32.mrb[0].mxu0
      %v2959 = vadd.f32 %v2798, %v2958
      %v2960 = vpop.f32.mrb[0].mxu0
      %2961 = vmatprep.mubr.bf16.mxu0 %v1370
      %2962 = vmatmul.mubr.bf16.gmra.mrb[0].mxu0 %v1369
      %v2963 = vpop.f32.mrb[0].mxu0
      %v2964 = vadd.f32 %v2803, %v2963
      %v2965 = vpop.f32.mrb[0].mxu0
      %v2966 = vpop.f32.mrb[0].mxu0
      %v2967 = vadd.f32 %v2806, %v2966
      %v2968 = vpop.f32.mrb[0].mxu0
      %2969 = vmatprep.mubr.bf16.mxu0 %v1382
      %2970 = vmatmul.mubr.bf16.gmra.mrb[0].mxu0 %v1381
      %v2971 = vpop.f32.mrb[0].mxu0
      %v2972 = vadd.f32 %v2811, %v2971
      %v2973 = vpop.f32.mrb[0].mxu0
      %v2974 = vpop.f32.mrb[0].mxu0
      %v2975 = vadd.f32 %v2814, %v2974
      %v2976 = vpop.f32.mrb[0].mxu0
      %2977 = vmatprep.mubr.bf16.mxu0 %v1394
      %2978 = vmatmul.mubr.bf16.gmra.mrb[0].mxu0 %v1393
      %v2979 = vpop.f32.mrb[0].mxu0
      %v2980 = vadd.f32 %v2819, %v2979
      %v2981 = vpop.f32.mrb[0].mxu0
      %v2982 = vpop.f32.mrb[0].mxu0
      %v2983 = vadd.f32 %v2822, %v2982
      %v2984 = vpop.f32.mrb[0].mxu0
      %2985 = vmatprep.mubr.bf16.mxu0 %v1406
      %2986 = vmatmul.mubr.bf16.gmra.mrb[0].mxu0 %v1405
      %v2987 = vpop.f32.mrb[0].mxu0
      %v2988 = vadd.f32 %v2827, %v2987
      %v2989 = vpop.f32.mrb[0].mxu0
      %v2990 = vpop.f32.mrb[0].mxu0
      %v2991 = vadd.f32 %v2830, %v2990
      %v2992 = vpop.f32.mrb[0].mxu0
      %2993 = vmatprep.mubr.bf16.mxu0 %v1418
      %2994 = vmatmul.mubr.bf16.gmra.mrb[0].mxu0 %v1417
      %v2995 = vpop.f32.mrb[0].mxu0
      %v2996 = vadd.f32 %v2835, %v2995
      %v2997 = vpop.f32.mrb[0].mxu0
      %v2998 = vpop.f32.mrb[0].mxu0
      %v2999 = vadd.f32 %v2838, %v2998
      %v3000 = vpop.f32.mrb[0].mxu0
      %3001 = vmatprep.mubr.bf16.mxu0 %v1430
      %3002 = vmatmul.mubr.bf16.gmra.mrb[0].mxu0 %v1429
      %v3003 = vpop.f32.mrb[0].mxu0
      %v3004 = vadd.f32 %v2843, %v3003
      %v3005 = vpop.f32.mrb[0].mxu0
      %v3006 = vpop.f32.mrb[0].mxu0
      %v3007 = vadd.f32 %v2846, %v3006
      %v3008 = vpop.f32.mrb[0].mxu0
      %3009 = vmatprep.mubr.bf16.mxu0 %v1442
      %3010 = vmatmul.mubr.bf16.gmra.mrb[0].mxu0 %v1441
      %v3011 = vpop.f32.mrb[0].mxu0
      %v3012 = vadd.f32 %v2851, %v3011
      %v3013 = vpop.f32.mrb[0].mxu0
      %v3014 = vpop.f32.mrb[0].mxu0
      %v3015 = vadd.f32 %v2854, %v3014
      %v3016 = vpop.f32.mrb[0].mxu0
      %3017 = vdwg.mxu0
      %3018 = vmatprep.subr.bf16.mxu0 0
      %3019 = vmatpush1.bf16.msra.mxu0 %v2101
      %3020 = vmatprep.subr.bf16.mxu0 0
      %3021 = vmatpush1.bf16.msra.mxu0 %v2102
      %3022 = vmatprep.subr.bf16.mxu0 0
      %3023 = vmatpush1.bf16.msra.mxu0 %v2103
      %3024 = vmatprep.subr.bf16.mxu0 0
      %3025 = vmatpush1.bf16.msra.mxu0 %v2104
      %3026 = vmatprep.subr.bf16.mxu0 0
      %3027 = vmatpush1.bf16.msra.mxu0 %v2105
      %3028 = vmatprep.subr.bf16.mxu0 0
      %3029 = vmatpush1.bf16.msra.mxu0 %v2106
      %3030 = vmatprep.subr.bf16.mxu0 0
      %3031 = vmatpush1.bf16.msra.mxu0 %v2107
      %3032 = vmatprep.subr.bf16.mxu0 0
      %3033 = vmatpush1.bf16.msra.mxu0 %v2108
      %3034 = vmatprep.subr.bf16.mxu0 0
      %3035 = vmatpush1.bf16.msra.mxu0 %v2109
      %3036 = vmatprep.subr.bf16.mxu0 0
      %3037 = vmatpush1.bf16.msra.mxu0 %v2110
      %3038 = vmatprep.subr.bf16.mxu0 0
      %3039 = vmatpush1.bf16.msra.mxu0 %v2111
      %3040 = vmatprep.subr.bf16.mxu0 0
      %3041 = vmatpush1.bf16.msra.mxu0 %v2112
      %3042 = vmatprep.subr.bf16.mxu0 0
      %3043 = vmatpush1.bf16.msra.mxu0 %v2113
      %3044 = vmatprep.subr.bf16.mxu0 0
      %3045 = vmatpush1.bf16.msra.mxu0 %v2114
      %3046 = vmatprep.subr.bf16.mxu0 0
      %3047 = vmatpush1.bf16.msra.mxu0 %v2115
      %3048 = vmatprep.subr.bf16.mxu0 0
      %3049 = vmatpush1.bf16.msra.mxu0 %v2116
      %3050 = vmatprep.mubr.bf16.mxu0 %v1264
      %3051 = vmatmul.mubr.bf16.gmra.mrb[0].mxu0 %v1263
      %v3052 = vpop.f32.mrb[0].mxu0
      %v3053 = vadd.f32 %v2892, %v3052
      %v3054 = vpop.f32.mrb[0].mxu0
      %v3055 = vpop.f32.mrb[0].mxu0
      %v3056 = vadd.f32 %v2895, %v3055
      %v3057 = vpop.f32.mrb[0].mxu0
      %3058 = vmatprep.mubr.bf16.mxu0 %v1276
      %3059 = vmatmul.mubr.bf16.gmra.mrb[0].mxu0 %v1275
      %v3060 = vpop.f32.mrb[0].mxu0
      %v3061 = vadd.f32 %v2900, %v3060
      %v3062 = vpop.f32.mrb[0].mxu0
      %v3063 = vpop.f32.mrb[0].mxu0
      %v3064 = vadd.f32 %v2903, %v3063
      %v3065 = vpop.f32.mrb[0].mxu0
      %3066 = vmatprep.mubr.bf16.mxu0 %v1288
      %3067 = vmatmul.mubr.bf16.gmra.mrb[0].mxu0 %v1287
      %v3068 = vpop.f32.mrb[0].mxu0
      %v3069 = vadd.f32 %v2908, %v3068
      %v3070 = vpop.f32.mrb[0].mxu0
      %v3071 = vpop.f32.mrb[0].mxu0
      %v3072 = vadd.f32 %v2911, %v3071
      %v3073 = vpop.f32.mrb[0].mxu0
      %3074 = vmatprep.mubr.bf16.mxu0 %v1300
      %3075 = vmatmul.mubr.bf16.gmra.mrb[0].mxu0 %v1299
      %v3076 = vpop.f32.mrb[0].mxu0
      %v3077 = vadd.f32 %v2916, %v3076
      %v3078 = vpop.f32.mrb[0].mxu0
      %v3079 = vpop.f32.mrb[0].mxu0
      %v3080 = vadd.f32 %v2919, %v3079
      %v3081 = vpop.f32.mrb[0].mxu0
      %3082 = vmatprep.mubr.bf16.mxu0 %v1312
      %3083 = vmatmul.mubr.bf16.gmra.mrb[0].mxu0 %v1311
      %v3084 = vpop.f32.mrb[0].mxu0
      %v3085 = vadd.f32 %v2924, %v3084
      %v3086 = vpop.f32.mrb[0].mxu0
      %v3087 = vpop.f32.mrb[0].mxu0
      %v3088 = vadd.f32 %v2927, %v3087
      %v3089 = vpop.f32.mrb[0].mxu0
      %3090 = vmatprep.mubr.bf16.mxu0 %v1324
      %3091 = vmatmul.mubr.bf16.gmra.mrb[0].mxu0 %v1323
      %v3092 = vpop.f32.mrb[0].mxu0
      %v3093 = vadd.f32 %v2932, %v3092
      %v3094 = vpop.f32.mrb[0].mxu0
      %v3095 = vpop.f32.mrb[0].mxu0
      %v3096 = vadd.f32 %v2935, %v3095
      %v3097 = vpop.f32.mrb[0].mxu0
      %3098 = vmatprep.mubr.bf16.mxu0 %v1336
      %3099 = vmatmul.mubr.bf16.gmra.mrb[0].mxu0 %v1335
      %v3100 = vpop.f32.mrb[0].mxu0
      %v3101 = vadd.f32 %v2940, %v3100
      %v3102 = vpop.f32.mrb[0].mxu0
      %v3103 = vpop.f32.mrb[0].mxu0
      %v3104 = vadd.f32 %v2943, %v3103
      %v3105 = vpop.f32.mrb[0].mxu0
      %3106 = vmatprep.mubr.bf16.mxu0 %v1348
      %3107 = vmatmul.mubr.bf16.gmra.mrb[0].mxu0 %v1347
      %v3108 = vpop.f32.mrb[0].mxu0
      %v3109 = vadd.f32 %v2948, %v3108
      %v3110 = vpop.f32.mrb[0].mxu0
      %v3111 = vpop.f32.mrb[0].mxu0
      %v3112 = vadd.f32 %v2951, %v3111
      %v3113 = vpop.f32.mrb[0].mxu0
      %3114 = vmatprep.mubr.bf16.mxu0 %v1360
      %3115 = vmatmul.mubr.bf16.gmra.mrb[0].mxu0 %v1359
      %v3116 = vpop.f32.mrb[0].mxu0
      %v3117 = vadd.f32 %v2956, %v3116
      %v3118 = vpop.f32.mrb[0].mxu0
      %v3119 = vpop.f32.mrb[0].mxu0
      %v3120 = vadd.f32 %v2959, %v3119
      %v3121 = vpop.f32.mrb[0].mxu0
      %3122 = vmatprep.mubr.bf16.mxu0 %v1372
      %3123 = vmatmul.mubr.bf16.gmra.mrb[0].mxu0 %v1371
      %v3124 = vpop.f32.mrb[0].mxu0
      %v3125 = vadd.f32 %v2964, %v3124
      %v3126 = vpop.f32.mrb[0].mxu0
      %v3127 = vpop.f32.mrb[0].mxu0
      %v3128 = vadd.f32 %v2967, %v3127
      %v3129 = vpop.f32.mrb[0].mxu0
      %3130 = vmatprep.mubr.bf16.mxu0 %v1384
      %3131 = vmatmul.mubr.bf16.gmra.mrb[0].mxu0 %v1383
      %v3132 = vpop.f32.mrb[0].mxu0
      %v3133 = vadd.f32 %v2972, %v3132
      %v3134 = vpop.f32.mrb[0].mxu0
      %v3135 = vpop.f32.mrb[0].mxu0
      %v3136 = vadd.f32 %v2975, %v3135
      %v3137 = vpop.f32.mrb[0].mxu0
      %3138 = vmatprep.mubr.bf16.mxu0 %v1396
      %3139 = vmatmul.mubr.bf16.gmra.mrb[0].mxu0 %v1395
      %v3140 = vpop.f32.mrb[0].mxu0
      %v3141 = vadd.f32 %v2980, %v3140
      %v3142 = vpop.f32.mrb[0].mxu0
      %v3143 = vpop.f32.mrb[0].mxu0
      %v3144 = vadd.f32 %v2983, %v3143
      %v3145 = vpop.f32.mrb[0].mxu0
      %3146 = vmatprep.mubr.bf16.mxu0 %v1408
      %3147 = vmatmul.mubr.bf16.gmra.mrb[0].mxu0 %v1407
      %v3148 = vpop.f32.mrb[0].mxu0
      %v3149 = vadd.f32 %v2988, %v3148
      %v3150 = vpop.f32.mrb[0].mxu0
      %v3151 = vpop.f32.mrb[0].mxu0
      %v3152 = vadd.f32 %v2991, %v3151
      %v3153 = vpop.f32.mrb[0].mxu0
      %3154 = vmatprep.mubr.bf16.mxu0 %v1420
      %3155 = vmatmul.mubr.bf16.gmra.mrb[0].mxu0 %v1419
      %v3156 = vpop.f32.mrb[0].mxu0
      %v3157 = vadd.f32 %v2996, %v3156
      %v3158 = vpop.f32.mrb[0].mxu0
      %v3159 = vpop.f32.mrb[0].mxu0
      %v3160 = vadd.f32 %v2999, %v3159
      %v3161 = vpop.f32.mrb[0].mxu0
      %3162 = vmatprep.mubr.bf16.mxu0 %v1432
      %3163 = vmatmul.mubr.bf16.gmra.mrb[0].mxu0 %v1431
      %v3164 = vpop.f32.mrb[0].mxu0
      %v3165 = vadd.f32 %v3004, %v3164
      %v3166 = vpop.f32.mrb[0].mxu0
      %v3167 = vpop.f32.mrb[0].mxu0
      %v3168 = vadd.f32 %v3007, %v3167
      %v3169 = vpop.f32.mrb[0].mxu0
      %3170 = vmatprep.mubr.bf16.mxu0 %v1444
      %3171 = vmatmul.mubr.bf16.gmra.mrb[0].mxu0 %v1443
      %v3172 = vpop.f32.mrb[0].mxu0
      %v3173 = vadd.f32 %v3012, %v3172
      %v3174 = vpop.f32.mrb[0].mxu0
      %v3175 = vpop.f32.mrb[0].mxu0
      %v3176 = vadd.f32 %v3015, %v3175
      %v3177 = vpop.f32.mrb[0].mxu0
      %3178 = vdwg.mxu0
      %v3179 = vmax.f32 %v3053, 0.0
      %v3180 = vmax.f32 %v3056, 0.0
      %v3181 = vmax.f32 %v3061, 0.0
      %v3182 = vmax.f32 %v3064, 0.0
      %v3183 = vmax.f32 %v3069, 0.0
      %v3184 = vmax.f32 %v3072, 0.0
      %v3185 = vmax.f32 %v3077, 0.0
      %v3186 = vmax.f32 %v3080, 0.0
      %v3187 = vmax.f32 %v3085, 0.0
      %v3188 = vmax.f32 %v3088, 0.0
      %v3189 = vmax.f32 %v3093, 0.0
      %v3190 = vmax.f32 %v3096, 0.0
      %v3191 = vmax.f32 %v3101, 0.0
      %v3192 = vmax.f32 %v3104, 0.0
      %v3193 = vmax.f32 %v3109, 0.0
      %v3194 = vmax.f32 %v3112, 0.0
      %v3195 = vmax.f32 %v3117, 0.0
      %v3196 = vmax.f32 %v3120, 0.0
      %v3197 = vmax.f32 %v3125, 0.0
      %v3198 = vmax.f32 %v3128, 0.0
      %v3199 = vmax.f32 %v3133, 0.0
      %v3200 = vmax.f32 %v3136, 0.0
      %v3201 = vmax.f32 %v3141, 0.0
      %v3202 = vmax.f32 %v3144, 0.0
      %v3203 = vmax.f32 %v3149, 0.0
      %v3204 = vmax.f32 %v3152, 0.0
      %v3205 = vmax.f32 %v3157, 0.0
      %v3206 = vmax.f32 %v3160, 0.0
      %v3207 = vmax.f32 %v3165, 0.0
      %v3208 = vmax.f32 %v3168, 0.0
      %v3209 = vmax.f32 %v3173, 0.0
      %v3210 = vmax.f32 %v3176, 0.0
      %v3211 = vpack.c.bf16 %v3180, %v3179
      %v3212 = vpack.c.bf16 %v3182, %v3181
      %v3213 = vpack.c.bf16 %v3184, %v3183
      %v3214 = vpack.c.bf16 %v3186, %v3185
      %v3215 = vpack.c.bf16 %v3188, %v3187
      %v3216 = vpack.c.bf16 %v3190, %v3189
      %v3217 = vpack.c.bf16 %v3192, %v3191
      %v3218 = vpack.c.bf16 %v3194, %v3193
      %v3219 = vpack.c.bf16 %v3196, %v3195
      %v3220 = vpack.c.bf16 %v3198, %v3197
      %v3221 = vpack.c.bf16 %v3200, %v3199
      %v3222 = vpack.c.bf16 %v3202, %v3201
      %v3223 = vpack.c.bf16 %v3204, %v3203
      %v3224 = vpack.c.bf16 %v3206, %v3205
      %v3225 = vpack.c.bf16 %v3208, %v3207
      %v3226 = vpack.c.bf16 %v3210, %v3209
      %v3227 = vld [vmem:[%s3] sm:$0xf]
      %v3228 = vld [vmem:[%s3 + $0x4] sm:$0xf]
      %v3229 = vld [vmem:[%s3 + $0x8] sm:$0xf]
      %v3230 = vld [vmem:[%s3 + $0xc] sm:$0xf]
      %v3231 = vld [vmem:[%s3 + $0x10] sm:$0xf]
      %v3232 = vld [vmem:[%s3 + $0x14] sm:$0xf]
      %v3233 = vld [vmem:[%s3 + $0x18] sm:$0xf]
      %v3234 = vld [vmem:[%s3 + $0x1c] sm:$0xf]
      %v3235 = vld [vmem:[%s3 + $0x20] sm:$0xf]
      %v3236 = vld [vmem:[%s3 + $0x24] sm:$0xf]
      %v3237 = vld [vmem:[%s3 + $0x28] sm:$0xf]
      %v3238 = vld [vmem:[%s3 + $0x2c] sm:$0xf]
      %v3239 = vld [vmem:[%s3 + $0x30] sm:$0xf]
      %v3240 = vld [vmem:[%s3 + $0x34] sm:$0xf]
      %v3241 = vld [vmem:[%s3 + $0x38] sm:$0xf]
      %v3242 = vld [vmem:[%s3 + $0x3c] sm:$0xf]
      %v3243 = vld [vmem:[%s4] sm:$0x1]
      %v3245 = vlaneseq
      %v3246 = vshrl.u32 %v3245, 7
      %v3247 = vsub.s32 0, %v3246
      %v3248 = vrot.slane %v3243, %v3247
      %v3266 = vunpack.c.l.b16 %v3227
      %v3267 = vunpack.c.l.b16 %v3228
      %v3268 = vunpack.c.l.b16 %v3229
      %v3269 = vunpack.c.l.b16 %v3230
      %v3270 = vunpack.c.l.b16 %v3231
      %v3271 = vunpack.c.l.b16 %v3232
      %v3272 = vunpack.c.l.b16 %v3233
      %v3273 = vunpack.c.l.b16 %v3234
      %v3274 = vunpack.c.l.b16 %v3235
      %v3275 = vunpack.c.l.b16 %v3236
      %v3276 = vunpack.c.l.b16 %v3237
      %v3277 = vunpack.c.l.b16 %v3238
      %v3278 = vunpack.c.l.b16 %v3239
      %v3279 = vunpack.c.l.b16 %v3240
      %v3280 = vunpack.c.l.b16 %v3241
      %v3281 = vunpack.c.l.b16 %v3242
      %v3282 = vpack.c.b16 %v3267, %v3266
      %v3283 = vpack.c.b16 %v3269, %v3268
      %v3284 = vpack.c.b16 %v3271, %v3270
      %v3285 = vpack.c.b16 %v3273, %v3272
      %v3286 = vpack.c.b16 %v3275, %v3274
      %v3287 = vpack.c.b16 %v3277, %v3276
      %v3288 = vpack.c.b16 %v3279, %v3278
      %v3289 = vpack.c.b16 %v3281, %v3280
      %3298 = vmatprep.subr.bf16.mxu0 0
      %3299 = vmatpush1.bf16.msra.mxu0 %v3282
      %3300 = vmatprep.subr.bf16.mxu0 0
      %3301 = vmatpush1.bf16.msra.mxu0 %v3283
      %3302 = vmatprep.subr.bf16.mxu0 0
      %3303 = vmatpush1.bf16.msra.mxu0 %v3284
      %3304 = vmatprep.subr.bf16.mxu0 0
      %3305 = vmatpush1.bf16.msra.mxu0 %v3285
      %3306 = vmatprep.subr.bf16.mxu0 0
      %3307 = vmatpush1.bf16.msra.mxu0 %v3286
      %3308 = vmatprep.subr.bf16.mxu0 0
      %3309 = vmatpush1.bf16.msra.mxu0 %v3287
      %3310 = vmatprep.subr.bf16.mxu0 0
      %3311 = vmatpush1.bf16.msra.mxu0 %v3288
      %3312 = vmatprep.subr.bf16.mxu0 0
      %3313 = vmatpush1.bf16.msra.mxu0 %v3289
      %3314 = vmatprep.subr.bf16.mxu0 0
      %3315 = vmatpush1.bf16.msra.mxu0 0
      %3316 = vmatprep.subr.bf16.mxu0 0
      %3317 = vmatpush1.bf16.msra.mxu0 0
      %3318 = vmatprep.subr.bf16.mxu0 0
      %3319 = vmatpush1.bf16.msra.mxu0 0
      %3320 = vmatprep.subr.bf16.mxu0 0
      %3321 = vmatpush1.bf16.msra.mxu0 0
      %3322 = vmatprep.subr.bf16.mxu0 0
      %3323 = vmatpush1.bf16.msra.mxu0 0
      %3324 = vmatprep.subr.bf16.mxu0 0
      %3325 = vmatpush1.bf16.msra.mxu0 0
      %3326 = vmatprep.subr.bf16.mxu0 0
      %3327 = vmatpush1.bf16.msra.mxu0 0
      %3328 = vmatprep.subr.bf16.mxu0 0
      %3329 = vmatpush1.bf16.msra.mxu0 0
      %3330 = vmatprep.mubr.bf16.mxu0 0
      %3331 = vmatmul.mubr.bf16.gmra.mrb[0].mxu0 %v3211
      %v3332 = vpop.f32.mrb[0].mxu0
      %v3333 = vadd.f32 %v3248, %v3332
      %v3334 = vpop.f32.mrb[0].mxu0
      %v3335 = vpop.f32.mrb[0].mxu0
      %v3336 = vadd.f32 %v3248, %v3335
      %v3337 = vpop.f32.mrb[0].mxu0
      %3338 = vmatprep.mubr.bf16.mxu0 0
      %3339 = vmatmul.mubr.bf16.gmra.mrb[0].mxu0 %v3212
      %v3340 = vpop.f32.mrb[0].mxu0
      %v3341 = vadd.f32 %v3248, %v3340
      %v3342 = vpop.f32.mrb[0].mxu0
      %v3343 = vpop.f32.mrb[0].mxu0
      %v3344 = vadd.f32 %v3248, %v3343
      %v3345 = vpop.f32.mrb[0].mxu0
      %3346 = vmatprep.mubr.bf16.mxu0 0
      %3347 = vmatmul.mubr.bf16.gmra.mrb[0].mxu0 %v3213
      %v3348 = vpop.f32.mrb[0].mxu0
      %v3349 = vadd.f32 %v3248, %v3348
      %v3350 = vpop.f32.mrb[0].mxu0
      %v3351 = vpop.f32.mrb[0].mxu0
      %v3352 = vadd.f32 %v3248, %v3351
      %v3353 = vpop.f32.mrb[0].mxu0
      %3354 = vmatprep.mubr.bf16.mxu0 0
      %3355 = vmatmul.mubr.bf16.gmra.mrb[0].mxu0 %v3214
      %v3356 = vpop.f32.mrb[0].mxu0
      %v3357 = vadd.f32 %v3248, %v3356
      %v3358 = vpop.f32.mrb[0].mxu0
      %v3359 = vpop.f32.mrb[0].mxu0
      %v3360 = vadd.f32 %v3248, %v3359
      %v3361 = vpop.f32.mrb[0].mxu0
      %3362 = vmatprep.mubr.bf16.mxu0 0
      %3363 = vmatmul.mubr.bf16.gmra.mrb[0].mxu0 %v3215
      %v3364 = vpop.f32.mrb[0].mxu0
      %v3365 = vadd.f32 %v3248, %v3364
      %v3366 = vpop.f32.mrb[0].mxu0
      %v3367 = vpop.f32.mrb[0].mxu0
      %v3368 = vadd.f32 %v3248, %v3367
      %v3369 = vpop.f32.mrb[0].mxu0
      %3370 = vmatprep.mubr.bf16.mxu0 0
      %3371 = vmatmul.mubr.bf16.gmra.mrb[0].mxu0 %v3216
      %v3372 = vpop.f32.mrb[0].mxu0
      %v3373 = vadd.f32 %v3248, %v3372
      %v3374 = vpop.f32.mrb[0].mxu0
      %v3375 = vpop.f32.mrb[0].mxu0
      %v3376 = vadd.f32 %v3248, %v3375
      %v3377 = vpop.f32.mrb[0].mxu0
      %3378 = vmatprep.mubr.bf16.mxu0 0
      %3379 = vmatmul.mubr.bf16.gmra.mrb[0].mxu0 %v3217
      %v3380 = vpop.f32.mrb[0].mxu0
      %v3381 = vadd.f32 %v3248, %v3380
      %v3382 = vpop.f32.mrb[0].mxu0
      %v3383 = vpop.f32.mrb[0].mxu0
      %v3384 = vadd.f32 %v3248, %v3383
      %v3385 = vpop.f32.mrb[0].mxu0
      %3386 = vmatprep.mubr.bf16.mxu0 0
      %3387 = vmatmul.mubr.bf16.gmra.mrb[0].mxu0 %v3218
      %v3388 = vpop.f32.mrb[0].mxu0
      %v3389 = vadd.f32 %v3248, %v3388
      %v3390 = vpop.f32.mrb[0].mxu0
      %v3391 = vpop.f32.mrb[0].mxu0
      %v3392 = vadd.f32 %v3248, %v3391
      %v3393 = vpop.f32.mrb[0].mxu0
      %3394 = vmatprep.mubr.bf16.mxu0 0
      %3395 = vmatmul.mubr.bf16.gmra.mrb[0].mxu0 %v3219
      %v3396 = vpop.f32.mrb[0].mxu0
      %v3397 = vadd.f32 %v3248, %v3396
      %v3398 = vpop.f32.mrb[0].mxu0
      %v3399 = vpop.f32.mrb[0].mxu0
      %v3400 = vadd.f32 %v3248, %v3399
      %v3401 = vpop.f32.mrb[0].mxu0
      %3402 = vmatprep.mubr.bf16.mxu0 0
      %3403 = vmatmul.mubr.bf16.gmra.mrb[0].mxu0 %v3220
      %v3404 = vpop.f32.mrb[0].mxu0
      %v3405 = vadd.f32 %v3248, %v3404
      %v3406 = vpop.f32.mrb[0].mxu0
      %v3407 = vpop.f32.mrb[0].mxu0
      %v3408 = vadd.f32 %v3248, %v3407
      %v3409 = vpop.f32.mrb[0].mxu0
      %3410 = vmatprep.mubr.bf16.mxu0 0
      %3411 = vmatmul.mubr.bf16.gmra.mrb[0].mxu0 %v3221
      %v3412 = vpop.f32.mrb[0].mxu0
      %v3413 = vadd.f32 %v3248, %v3412
      %v3414 = vpop.f32.mrb[0].mxu0
      %v3415 = vpop.f32.mrb[0].mxu0
      %v3416 = vadd.f32 %v3248, %v3415
      %v3417 = vpop.f32.mrb[0].mxu0
      %3418 = vmatprep.mubr.bf16.mxu0 0
      %3419 = vmatmul.mubr.bf16.gmra.mrb[0].mxu0 %v3222
      %v3420 = vpop.f32.mrb[0].mxu0
      %v3421 = vadd.f32 %v3248, %v3420
      %v3422 = vpop.f32.mrb[0].mxu0
      %v3423 = vpop.f32.mrb[0].mxu0
      %v3424 = vadd.f32 %v3248, %v3423
      %v3425 = vpop.f32.mrb[0].mxu0
      %3426 = vmatprep.mubr.bf16.mxu0 0
      %3427 = vmatmul.mubr.bf16.gmra.mrb[0].mxu0 %v3223
      %v3428 = vpop.f32.mrb[0].mxu0
      %v3429 = vadd.f32 %v3248, %v3428
      %v3430 = vpop.f32.mrb[0].mxu0
      %v3431 = vpop.f32.mrb[0].mxu0
      %v3432 = vadd.f32 %v3248, %v3431
      %v3433 = vpop.f32.mrb[0].mxu0
      %3434 = vmatprep.mubr.bf16.mxu0 0
      %3435 = vmatmul.mubr.bf16.gmra.mrb[0].mxu0 %v3224
      %v3436 = vpop.f32.mrb[0].mxu0
      %v3437 = vadd.f32 %v3248, %v3436
      %v3438 = vpop.f32.mrb[0].mxu0
      %v3439 = vpop.f32.mrb[0].mxu0
      %v3440 = vadd.f32 %v3248, %v3439
      %v3441 = vpop.f32.mrb[0].mxu0
      %3442 = vmatprep.mubr.bf16.mxu0 0
      %3443 = vmatmul.mubr.bf16.gmra.mrb[0].mxu0 %v3225
      %v3444 = vpop.f32.mrb[0].mxu0
      %v3445 = vadd.f32 %v3248, %v3444
      %v3446 = vpop.f32.mrb[0].mxu0
      %v3447 = vpop.f32.mrb[0].mxu0
      %v3448 = vadd.f32 %v3248, %v3447
      %v3449 = vpop.f32.mrb[0].mxu0
      %3450 = vmatprep.mubr.bf16.mxu0 0
      %3451 = vmatmul.mubr.bf16.gmra.mrb[0].mxu0 %v3226
      %v3452 = vpop.f32.mrb[0].mxu0
      %v3453 = vadd.f32 %v3248, %v3452
      %v3454 = vpop.f32.mrb[0].mxu0
      %v3455 = vpop.f32.mrb[0].mxu0
      %v3456 = vadd.f32 %v3248, %v3455
      %v3457 = vpop.f32.mrb[0].mxu0
      %3458 = vdwg.mxu0
      %v3459 = vmax.f32 %v3333, 0.0
      %v3460 = vmax.f32 %v3336, 0.0
      %v3461 = vmax.f32 %v3341, 0.0
      %v3462 = vmax.f32 %v3344, 0.0
      %v3463 = vmax.f32 %v3349, 0.0
      %v3464 = vmax.f32 %v3352, 0.0
      %v3465 = vmax.f32 %v3357, 0.0
      %v3466 = vmax.f32 %v3360, 0.0
      %v3467 = vmax.f32 %v3365, 0.0
      %v3468 = vmax.f32 %v3368, 0.0
      %v3469 = vmax.f32 %v3373, 0.0
      %v3470 = vmax.f32 %v3376, 0.0
      %v3471 = vmax.f32 %v3381, 0.0
      %v3472 = vmax.f32 %v3384, 0.0
      %v3473 = vmax.f32 %v3389, 0.0
      %v3474 = vmax.f32 %v3392, 0.0
      %v3475 = vmax.f32 %v3397, 0.0
      %v3476 = vmax.f32 %v3400, 0.0
      %v3477 = vmax.f32 %v3405, 0.0
      %v3478 = vmax.f32 %v3408, 0.0
      %v3479 = vmax.f32 %v3413, 0.0
      %v3480 = vmax.f32 %v3416, 0.0
      %v3481 = vmax.f32 %v3421, 0.0
      %v3482 = vmax.f32 %v3424, 0.0
      %v3483 = vmax.f32 %v3429, 0.0
      %v3484 = vmax.f32 %v3432, 0.0
      %v3485 = vmax.f32 %v3437, 0.0
      %v3486 = vmax.f32 %v3440, 0.0
      %v3487 = vmax.f32 %v3445, 0.0
      %v3488 = vmax.f32 %v3448, 0.0
      %v3489 = vmax.f32 %v3453, 0.0
      %v3490 = vmax.f32 %v3456, 0.0
      %v3491 = vpack.c.bf16 %v3460, %v3459
      %v3492 = vpack.c.bf16 %v3462, %v3461
      %v3493 = vpack.c.bf16 %v3464, %v3463
      %v3494 = vpack.c.bf16 %v3466, %v3465
      %v3495 = vpack.c.bf16 %v3468, %v3467
      %v3496 = vpack.c.bf16 %v3470, %v3469
      %v3497 = vpack.c.bf16 %v3472, %v3471
      %v3498 = vpack.c.bf16 %v3474, %v3473
      %v3499 = vpack.c.bf16 %v3476, %v3475
      %v3500 = vpack.c.bf16 %v3478, %v3477
      %v3501 = vpack.c.bf16 %v3480, %v3479
      %v3502 = vpack.c.bf16 %v3482, %v3481
      %v3503 = vpack.c.bf16 %v3484, %v3483
      %v3504 = vpack.c.bf16 %v3486, %v3485
      %v3505 = vpack.c.bf16 %v3488, %v3487
      %v3506 = vpack.c.bf16 %v3490, %v3489
      %v3507 = vld [vmem:[%s5] sm:$0xf]
      %v3508 = vld [vmem:[%s5 + $0x4] sm:$0xf]
      %v3509 = vld [vmem:[%s5 + $0x8] sm:$0xf]
      %v3510 = vld [vmem:[%s5 + $0xc] sm:$0xf]
      %v3511 = vld [vmem:[%s5 + $0x10] sm:$0xf]
      %v3512 = vld [vmem:[%s5 + $0x14] sm:$0xf]
      %v3513 = vld [vmem:[%s5 + $0x18] sm:$0xf]
      %v3514 = vld [vmem:[%s5 + $0x1c] sm:$0xf]
      %v3515 = vld [vmem:[%s5 + $0x20] sm:$0xf]
      %v3516 = vld [vmem:[%s5 + $0x24] sm:$0xf]
      %v3517 = vld [vmem:[%s5 + $0x28] sm:$0xf]
      %v3518 = vld [vmem:[%s5 + $0x2c] sm:$0xf]
      %v3519 = vld [vmem:[%s5 + $0x30] sm:$0xf]
      %v3520 = vld [vmem:[%s5 + $0x34] sm:$0xf]
      %v3521 = vld [vmem:[%s5 + $0x38] sm:$0xf]
      %v3522 = vld [vmem:[%s5 + $0x3c] sm:$0xf]
      %v3523 = vld [vmem:[%s6] sm:$0x1]
      %v3525 = vlaneseq
      %v3526 = vshrl.u32 %v3525, 7
      %v3527 = vsub.s32 0, %v3526
      %v3528 = vrot.slane %v3523, %v3527
      %v3546 = vunpack.c.l.b16 %v3507
      %v3547 = vunpack.c.l.b16 %v3508
      %v3548 = vunpack.c.l.b16 %v3509
      %v3549 = vunpack.c.l.b16 %v3510
      %v3550 = vunpack.c.l.b16 %v3511
      %v3551 = vunpack.c.l.b16 %v3512
      %v3552 = vunpack.c.l.b16 %v3513
      %v3553 = vunpack.c.l.b16 %v3514
      %v3554 = vunpack.c.l.b16 %v3515
      %v3555 = vunpack.c.l.b16 %v3516
      %v3556 = vunpack.c.l.b16 %v3517
      %v3557 = vunpack.c.l.b16 %v3518
      %v3558 = vunpack.c.l.b16 %v3519
      %v3559 = vunpack.c.l.b16 %v3520
      %v3560 = vunpack.c.l.b16 %v3521
      %v3561 = vunpack.c.l.b16 %v3522
      %v3562 = vpack.c.b16 %v3547, %v3546
      %v3563 = vpack.c.b16 %v3549, %v3548
      %v3564 = vpack.c.b16 %v3551, %v3550
      %v3565 = vpack.c.b16 %v3553, %v3552
      %v3566 = vpack.c.b16 %v3555, %v3554
      %v3567 = vpack.c.b16 %v3557, %v3556
      %v3568 = vpack.c.b16 %v3559, %v3558
      %v3569 = vpack.c.b16 %v3561, %v3560
      %3578 = vmatprep.subr.bf16.mxu0 0
      %3579 = vmatpush1.bf16.msra.mxu0 %v3562
      %3580 = vmatprep.subr.bf16.mxu0 0
      %3581 = vmatpush1.bf16.msra.mxu0 %v3563
      %3582 = vmatprep.subr.bf16.mxu0 0
      %3583 = vmatpush1.bf16.msra.mxu0 %v3564
      %3584 = vmatprep.subr.bf16.mxu0 0
      %3585 = vmatpush1.bf16.msra.mxu0 %v3565
      %3586 = vmatprep.subr.bf16.mxu0 0
      %3587 = vmatpush1.bf16.msra.mxu0 %v3566
      %3588 = vmatprep.subr.bf16.mxu0 0
      %3589 = vmatpush1.bf16.msra.mxu0 %v3567
      %3590 = vmatprep.subr.bf16.mxu0 0
      %3591 = vmatpush1.bf16.msra.mxu0 %v3568
      %3592 = vmatprep.subr.bf16.mxu0 0
      %3593 = vmatpush1.bf16.msra.mxu0 %v3569
      %3594 = vmatprep.subr.bf16.mxu0 0
      %3595 = vmatpush1.bf16.msra.mxu0 0
      %3596 = vmatprep.subr.bf16.mxu0 0
      %3597 = vmatpush1.bf16.msra.mxu0 0
      %3598 = vmatprep.subr.bf16.mxu0 0
      %3599 = vmatpush1.bf16.msra.mxu0 0
      %3600 = vmatprep.subr.bf16.mxu0 0
      %3601 = vmatpush1.bf16.msra.mxu0 0
      %3602 = vmatprep.subr.bf16.mxu0 0
      %3603 = vmatpush1.bf16.msra.mxu0 0
      %3604 = vmatprep.subr.bf16.mxu0 0
      %3605 = vmatpush1.bf16.msra.mxu0 0
      %3606 = vmatprep.subr.bf16.mxu0 0
      %3607 = vmatpush1.bf16.msra.mxu0 0
      %3608 = vmatprep.subr.bf16.mxu0 0
      %3609 = vmatpush1.bf16.msra.mxu0 0
      %3610 = vmatprep.mubr.bf16.mxu0 0
      %3611 = vmatmul.mubr.bf16.gmra.mrb[0].mxu0 %v3491
      %v3612 = vpop.f32.mrb[0].mxu0
      %v3613 = vadd.f32 %v3528, %v3612
      %v3614 = vpop.f32.mrb[0].mxu0
      %v3615 = vpop.f32.mrb[0].mxu0
      %v3616 = vadd.f32 %v3528, %v3615
      %v3617 = vpop.f32.mrb[0].mxu0
      %3618 = vmatprep.mubr.bf16.mxu0 0
      %3619 = vmatmul.mubr.bf16.gmra.mrb[0].mxu0 %v3492
      %v3620 = vpop.f32.mrb[0].mxu0
      %v3621 = vadd.f32 %v3528, %v3620
      %v3622 = vpop.f32.mrb[0].mxu0
      %v3623 = vpop.f32.mrb[0].mxu0
      %v3624 = vadd.f32 %v3528, %v3623
      %v3625 = vpop.f32.mrb[0].mxu0
      %3626 = vmatprep.mubr.bf16.mxu0 0
      %3627 = vmatmul.mubr.bf16.gmra.mrb[0].mxu0 %v3493
      %v3628 = vpop.f32.mrb[0].mxu0
      %v3629 = vadd.f32 %v3528, %v3628
      %v3630 = vpop.f32.mrb[0].mxu0
      %v3631 = vpop.f32.mrb[0].mxu0
      %v3632 = vadd.f32 %v3528, %v3631
      %v3633 = vpop.f32.mrb[0].mxu0
      %3634 = vmatprep.mubr.bf16.mxu0 0
      %3635 = vmatmul.mubr.bf16.gmra.mrb[0].mxu0 %v3494
      %v3636 = vpop.f32.mrb[0].mxu0
      %v3637 = vadd.f32 %v3528, %v3636
      %v3638 = vpop.f32.mrb[0].mxu0
      %v3639 = vpop.f32.mrb[0].mxu0
      %v3640 = vadd.f32 %v3528, %v3639
      %v3641 = vpop.f32.mrb[0].mxu0
      %3642 = vmatprep.mubr.bf16.mxu0 0
      %3643 = vmatmul.mubr.bf16.gmra.mrb[0].mxu0 %v3495
      %v3644 = vpop.f32.mrb[0].mxu0
      %v3645 = vadd.f32 %v3528, %v3644
      %v3646 = vpop.f32.mrb[0].mxu0
      %v3647 = vpop.f32.mrb[0].mxu0
      %v3648 = vadd.f32 %v3528, %v3647
      %v3649 = vpop.f32.mrb[0].mxu0
      %3650 = vmatprep.mubr.bf16.mxu0 0
      %3651 = vmatmul.mubr.bf16.gmra.mrb[0].mxu0 %v3496
      %v3652 = vpop.f32.mrb[0].mxu0
      %v3653 = vadd.f32 %v3528, %v3652
      %v3654 = vpop.f32.mrb[0].mxu0
      %v3655 = vpop.f32.mrb[0].mxu0
      %v3656 = vadd.f32 %v3528, %v3655
      %v3657 = vpop.f32.mrb[0].mxu0
      %3658 = vmatprep.mubr.bf16.mxu0 0
      %3659 = vmatmul.mubr.bf16.gmra.mrb[0].mxu0 %v3497
      %v3660 = vpop.f32.mrb[0].mxu0
      %v3661 = vadd.f32 %v3528, %v3660
      %v3662 = vpop.f32.mrb[0].mxu0
      %v3663 = vpop.f32.mrb[0].mxu0
      %v3664 = vadd.f32 %v3528, %v3663
      %v3665 = vpop.f32.mrb[0].mxu0
      %3666 = vmatprep.mubr.bf16.mxu0 0
      %3667 = vmatmul.mubr.bf16.gmra.mrb[0].mxu0 %v3498
      %v3668 = vpop.f32.mrb[0].mxu0
      %v3669 = vadd.f32 %v3528, %v3668
      %v3670 = vpop.f32.mrb[0].mxu0
      %v3671 = vpop.f32.mrb[0].mxu0
      %v3672 = vadd.f32 %v3528, %v3671
      %v3673 = vpop.f32.mrb[0].mxu0
      %3674 = vmatprep.mubr.bf16.mxu0 0
      %3675 = vmatmul.mubr.bf16.gmra.mrb[0].mxu0 %v3499
      %v3676 = vpop.f32.mrb[0].mxu0
      %v3677 = vadd.f32 %v3528, %v3676
      %v3678 = vpop.f32.mrb[0].mxu0
      %v3679 = vpop.f32.mrb[0].mxu0
      %v3680 = vadd.f32 %v3528, %v3679
      %v3681 = vpop.f32.mrb[0].mxu0
      %3682 = vmatprep.mubr.bf16.mxu0 0
      %3683 = vmatmul.mubr.bf16.gmra.mrb[0].mxu0 %v3500
      %v3684 = vpop.f32.mrb[0].mxu0
      %v3685 = vadd.f32 %v3528, %v3684
      %v3686 = vpop.f32.mrb[0].mxu0
      %v3687 = vpop.f32.mrb[0].mxu0
      %v3688 = vadd.f32 %v3528, %v3687
      %v3689 = vpop.f32.mrb[0].mxu0
      %3690 = vmatprep.mubr.bf16.mxu0 0
      %3691 = vmatmul.mubr.bf16.gmra.mrb[0].mxu0 %v3501
      %v3692 = vpop.f32.mrb[0].mxu0
      %v3693 = vadd.f32 %v3528, %v3692
      %v3694 = vpop.f32.mrb[0].mxu0
      %v3695 = vpop.f32.mrb[0].mxu0
      %v3696 = vadd.f32 %v3528, %v3695
      %v3697 = vpop.f32.mrb[0].mxu0
      %3698 = vmatprep.mubr.bf16.mxu0 0
      %3699 = vmatmul.mubr.bf16.gmra.mrb[0].mxu0 %v3502
      %v3700 = vpop.f32.mrb[0].mxu0
      %v3701 = vadd.f32 %v3528, %v3700
      %v3702 = vpop.f32.mrb[0].mxu0
      %v3703 = vpop.f32.mrb[0].mxu0
      %v3704 = vadd.f32 %v3528, %v3703
      %v3705 = vpop.f32.mrb[0].mxu0
      %3706 = vmatprep.mubr.bf16.mxu0 0
      %3707 = vmatmul.mubr.bf16.gmra.mrb[0].mxu0 %v3503
      %v3708 = vpop.f32.mrb[0].mxu0
      %v3709 = vadd.f32 %v3528, %v3708
      %v3710 = vpop.f32.mrb[0].mxu0
      %v3711 = vpop.f32.mrb[0].mxu0
      %v3712 = vadd.f32 %v3528, %v3711
      %v3713 = vpop.f32.mrb[0].mxu0
      %3714 = vmatprep.mubr.bf16.mxu0 0
      %3715 = vmatmul.mubr.bf16.gmra.mrb[0].mxu0 %v3504
      %v3716 = vpop.f32.mrb[0].mxu0
      %v3717 = vadd.f32 %v3528, %v3716
      %v3718 = vpop.f32.mrb[0].mxu0
      %v3719 = vpop.f32.mrb[0].mxu0
      %v3720 = vadd.f32 %v3528, %v3719
      %v3721 = vpop.f32.mrb[0].mxu0
      %3722 = vmatprep.mubr.bf16.mxu0 0
      %3723 = vmatmul.mubr.bf16.gmra.mrb[0].mxu0 %v3505
      %v3724 = vpop.f32.mrb[0].mxu0
      %v3725 = vadd.f32 %v3528, %v3724
      %v3726 = vpop.f32.mrb[0].mxu0
      %v3727 = vpop.f32.mrb[0].mxu0
      %v3728 = vadd.f32 %v3528, %v3727
      %v3729 = vpop.f32.mrb[0].mxu0
      %3730 = vmatprep.mubr.bf16.mxu0 0
      %3731 = vmatmul.mubr.bf16.gmra.mrb[0].mxu0 %v3506
      %v3732 = vpop.f32.mrb[0].mxu0
      %v3733 = vadd.f32 %v3528, %v3732
      %v3734 = vpop.f32.mrb[0].mxu0
      %v3735 = vpop.f32.mrb[0].mxu0
      %v3736 = vadd.f32 %v3528, %v3735
      %v3737 = vpop.f32.mrb[0].mxu0
      %3738 = vdwg.mxu0
      %3739 = vst [vmem:[%s283] sm:$0xff] %v3613
      %3740 = vst [vmem:[%s283 + $0x8] sm:$0xff] %v3616
      %3741 = vst [vmem:[%s283 + $0x10] sm:$0xff] %v3621
      %3742 = vst [vmem:[%s283 + $0x18] sm:$0xff] %v3624
      %3743 = vst [vmem:[%s283 + $0x20] sm:$0xff] %v3629
      %3744 = vst [vmem:[%s283 + $0x28] sm:$0xff] %v3632
      %3745 = vst [vmem:[%s283 + $0x30] sm:$0xff] %v3637
      %3746 = vst [vmem:[%s283 + $0x38] sm:$0xff] %v3640
      %3747 = vst [vmem:[%s283 + $0x40] sm:$0xff] %v3645
      %3748 = vst [vmem:[%s283 + $0x48] sm:$0xff] %v3648
      %3749 = vst [vmem:[%s283 + $0x50] sm:$0xff] %v3653
      %3750 = vst [vmem:[%s283 + $0x58] sm:$0xff] %v3656
      %3751 = vst [vmem:[%s283 + $0x60] sm:$0xff] %v3661
      %3752 = vst [vmem:[%s283 + $0x68] sm:$0xff] %v3664
      %3753 = vst [vmem:[%s283 + $0x70] sm:$0xff] %v3669
      %3754 = vst [vmem:[%s283 + $0x78] sm:$0xff] %v3672
      %3755 = vst [vmem:[%s283 + $0x80] sm:$0xff] %v3677
      %3756 = vst [vmem:[%s283 + $0x88] sm:$0xff] %v3680
      %3757 = vst [vmem:[%s283 + $0x90] sm:$0xff] %v3685
      %3758 = vst [vmem:[%s283 + $0x98] sm:$0xff] %v3688
      %3759 = vst [vmem:[%s283 + $0xa0] sm:$0xff] %v3693
      %3760 = vst [vmem:[%s283 + $0xa8] sm:$0xff] %v3696
      %3761 = vst [vmem:[%s283 + $0xb0] sm:$0xff] %v3701
      %3762 = vst [vmem:[%s283 + $0xb8] sm:$0xff] %v3704
      %3763 = vst [vmem:[%s283 + $0xc0] sm:$0xff] %v3709
      %3764 = vst [vmem:[%s283 + $0xc8] sm:$0xff] %v3712
      %3765 = vst [vmem:[%s283 + $0xd0] sm:$0xff] %v3717
      %3766 = vst [vmem:[%s283 + $0xd8] sm:$0xff] %v3720
      %3767 = vst [vmem:[%s283 + $0xe0] sm:$0xff] %v3725
      %3768 = vst [vmem:[%s283 + $0xe8] sm:$0xff] %v3728
      %3769 = vst [vmem:[%s283 + $0xf0] sm:$0xff] %v3733
      %3770 = vst [vmem:[%s283 + $0xf8] sm:$0xff] %v3736
      %s3771 = smul.u32 32, %s18
      %p3772 = scmp.lt.s32.totalorder %s3771, 63
      %s3773 = scalar_select %p3772, %s3771, 63
      %s3774 = smul.addr %s3773, 8
      %s3775 = scalar_lea.vmem %s7, %s3774
      // Predicated region
      $region49: #{two_layer_nn_forward.1} parent=47 // pred_check
        %p3776 = pneg %p188
      $region50: #{two_layer_nn_forward.1} parent=47 // pred_check_branch
        %3778 = sbr.rel (%p3776) target = $region52
      $region51: #{two_layer_nn_forward.1} parent=47 // pred_region
        %s3779 = smul.u32 32, %s18
      $region52: #{two_layer_nn_forward.1} parent=47 // pred_fallthru
        _
    $region48: #{two_layer_nn_forward.1} parent=5 // pred_fallthru
      _
    %p3780 = scmp.le.s32.totalorder 2, %s13
    // Predicated region
    $region53: #{two_layer_nn_forward.1} parent=5 // pred_check
      %p3781 = pneg %p3780
    $region54: #{two_layer_nn_forward.1} parent=5 // pred_check_branch
      %3783 = sbr.rel (%p3781) target = $region56
    $region55: #{two_layer_nn_forward.1} parent=5 // pred_region
      %s3784 = ssub.s32 %s13, 2
      // Predicated region
      $region57: #{two_layer_nn_forward.1} parent=55 // pred_check
        %p3785 = pneg %p194
      $region58: #{two_layer_nn_forward.1} parent=55 // pred_check_branch
        %3787 = sbr.rel (%p3785) target = $region60
      $region59: #{two_layer_nn_forward.1} parent=55 // pred_region
        %s3788 = smul.u32 32, %s19
        %p3789 = scmp.lt.s32.totalorder %s3788, 63
        %s3790 = scalar_select %p3789, %s3788, 63
        %s3791 = smul.addr %s3790, 8
        %s3792 = scalar_lea.vmem %s7, %s3791
      $region60: #{two_layer_nn_forward.1} parent=55 // pred_fallthru
        _
    $region56: #{two_layer_nn_forward.1} parent=5 // pred_fallthru
      _
  $region6: #{two_layer_nn_forward.1} parent=0 // loop_footer
    %s17 = sadd.s32 1, %s13
  $region7: #{two_layer_nn_forward.1} parent=0 // loop_footer_branch
    %12 = sbr.rel target = $region3
  $region8: #{two_layer_nn_forward.1} parent=0 // loop_exit
    _

</llo_original>
